<compile_context>
chip_gen: v6e
topology: v6e:2x2x1
jax: 0.10.0
libtpu: 0.0.40
codegen_flags: <defaults>
</compile_context>

<pallas_src>
import functools
import math

import jax
import jax.numpy as jnp
from jax.experimental import pallas as pl

# ----------------------------- config -------------------------------------
D_MODEL = 32
NHEAD = 4
NLAYERS = 2
DIM_FF = 400          # hard-coded in the PyTorch module
DIM_FF_PAD = 512      # lane-aligned padding of the FF hidden dim
B, S = 2, 8
LN_EPS = 1e-5


def _layernorm(x, gamma, beta, eps=LN_EPS):
    mean = jnp.mean(x, axis=-1, keepdims=True)
    var = jnp.mean(jnp.square(x - mean), axis=-1, keepdims=True)
    return (x - mean) * jax.lax.rsqrt(var + eps) * gamma + beta


# --------------------------- fused Pallas kernel ----------------------------
def _fused_encoder_kernel(x_ref, bias_ref,
                          wqkv_ref, bqkv_ref, wo_ref, bo_ref,
                          g1_ref, be1_ref, g2_ref, be2_ref,
                          w1_ref, bf1_ref, w2_ref, bf2_ref,
                          o_ref, *, b, s, d, nhead, nlayers):
    dh = d // nhead
    t = b * s

    x = x_ref[...]                                             # (T, D), T = B*S

    # Key-padding additive bias, broadcast ONCE and reused across all layers
    # and heads (JAX does not CSE broadcast_in_dim).
    bias = jnp.broadcast_to(bias_ref[...][:, None, :], (b, s, s))   # (B, S, S)

    for layer in range(nlayers):                               # static unroll
        # ---- multi-head self-attention ---------------------------------
        # 1/sqrt(dh) is already folded into the Q part of wqkv / bqkv.
        qkv = jnp.dot(x, wqkv_ref[layer],
                      preferred_element_type=jnp.float32) + bqkv_ref[layer]
        # (T, 3D) -> (B, S, 3D): splits the sublane dim on a tile boundary.
        qkv3 = qkv.reshape(b, s, 3 * d)

        attn = jnp.zeros((t, d), jnp.float32)
        for h in range(nhead):                                 # static unroll
            qh = qkv3[:, :, h * dh:(h + 1) * dh]               # (B, S, dh)
            kh = qkv3[:, :, d + h * dh:d + (h + 1) * dh]
            vh = qkv3[:, :, 2 * d + h * dh:2 * d + (h + 1) * dh]

            # Contract the head dim directly; no materialized transpose.
            sc = jnp.einsum('bqd,bkd->bqk', qh, kh,
                            preferred_element_type=jnp.float32) + bias  # (B,S,S)
            sc = sc - jnp.max(sc, axis=-1, keepdims=True)
            p = jnp.exp(sc)
            p = p * pl.reciprocal(jnp.sum(p, axis=-1, keepdims=True),
                                  approx=False)
            oh = jnp.einsum('bqk,bkd->bqd', p, vh,
                            preferred_element_type=jnp.float32)         # (B,S,dh)

            # Accumulate through the matching W_o row-slab -> no lane concat.
            attn = attn + jnp.dot(oh.reshape(t, dh),
                                  wo_ref[layer, h * dh:(h + 1) * dh, :],
                                  preferred_element_type=jnp.float32)
        attn = attn + bo_ref[layer]

        # ---- residual + LayerNorm 1 -------------------------------------
        x = _layernorm(x + attn, g1_ref[layer], be1_ref[layer])

        # ---- feed-forward (hidden dim zero-padded to 512 lanes) ----------
        h1 = jnp.maximum(
            jnp.dot(x, w1_ref[layer],
                    preferred_element_type=jnp.float32) + bf1_ref[layer], 0.0)
        ff = jnp.dot(h1, w2_ref[layer],
                     preferred_element_type=jnp.float32) + bf2_ref[layer]

        # ---- residual + LayerNorm 2 -------------------------------------
        x = _layernorm(x + ff, g2_ref[layer], be2_ref[layer])

    o_ref[...] = x.astype(o_ref.dtype)


# ------------------------------ wrapper -------------------------------------
def self_attn_enc(x, mask, stacked):
    """Pallas implementation of SelfAttnEnc.forward(input, mask) (inference).

    x: (B, S, D) float32, mask: (B, S) bool key-padding mask (True == padded).
    stacked: layer-stacked, scale-folded, FF-padded parameters (see
    _prepare_params).  Single pallas_call, no grid: the whole problem
    (~300 KiB of weights + activations) lives in VMEM for both layers.
    """
    b, s, d = x.shape
    bias = jnp.where(mask, jnp.float32(-1e30), jnp.float32(0.0))   # (B, S)
    x2d = x.reshape(b * s, d)

    kernel = functools.partial(_fused_encoder_kernel, b=b, s=s, d=d,
                               nhead=NHEAD, nlayers=NLAYERS)
    out2d = pl.pallas_call(
        kernel,
        out_shape=jax.ShapeDtypeStruct((b * s, d), jnp.float32),
    )(x2d, bias,
      stacked["wqkv"], stacked["bqkv"], stacked["wo"], stacked["bo"],
      stacked["g1"], stacked["be1"], stacked["g2"], stacked["be2"],
      stacked["w1"], stacked["bf1"], stacked["w2"], stacked["bf2"])
    return out2d.reshape(b, s, d)


# ------------------------ pure-JAX reference --------------------------------
def _reference(x, mask, params):
    bias = jnp.where(mask, -1e30, 0.0)[:, None, :]            # (B, 1, S)
    dh = D_MODEL // NHEAD
    out = x
    for p in params:
        qkv = out @ p["wqkv"] + p["bqkv"]
        q = qkv[..., :D_MODEL]
        k = qkv[..., D_MODEL:2 * D_MODEL]
        v = qkv[..., 2 * D_MODEL:]
        heads = []
        for h in range(NHEAD):
            sl = slice(h * dh, (h + 1) * dh)
            sc = (q[..., sl] / math.sqrt(dh)) @ jnp.swapaxes(k[..., sl], -1, -2) + bias
            pm = jax.nn.softmax(sc, axis=-1)
            heads.append(pm @ v[..., sl])
        attn = jnp.concatenate(heads, axis=-1) @ p["wo"] + p["bo"]
        x1 = _layernorm(out + attn, p["g1"], p["be1"])
        ff = jnp.maximum(x1 @ p["w1"] + p["bf1"], 0.0) @ p["w2"] + p["bf2"]
        out = _layernorm(x1 + ff, p["g2"], p["be2"])
    return out


# ------------------------------ params --------------------------------------
def _init_params(key):
    """Raw (PyTorch-layout-equivalent) per-layer parameters."""
    params = []
    for _ in range(NLAYERS):
        key, k1, k2, k3, k4, k5, k6, k7 = jax.random.split(key, 8)
        params.append(dict(
            wqkv=jax.random.normal(k1, (D_MODEL, 3 * D_MODEL), jnp.float32)
                 / math.sqrt(D_MODEL),
            bqkv=jax.random.normal(k2, (3 * D_MODEL,), jnp.float32) * 0.02,
            wo=jax.random.normal(k3, (D_MODEL, D_MODEL), jnp.float32)
               / math.sqrt(D_MODEL),
            bo=jnp.zeros((D_MODEL,), jnp.float32),
            g1=jnp.ones((D_MODEL,), jnp.float32),
            be1=jnp.zeros((D_MODEL,), jnp.float32),
            g2=jnp.ones((D_MODEL,), jnp.float32),
            be2=jnp.zeros((D_MODEL,), jnp.float32),
            w1=jax.random.normal(k4, (D_MODEL, DIM_FF), jnp.float32)
               / math.sqrt(D_MODEL),
            bf1=jax.random.normal(k5, (DIM_FF,), jnp.float32) * 0.01,
            w2=jax.random.normal(k6, (DIM_FF, D_MODEL), jnp.float32)
               / math.sqrt(DIM_FF),
            bf2=jax.random.normal(k7, (D_MODEL,), jnp.float32) * 0.01,
        ))
    return params


def _prepare_params(params):
    """One-time transform: fold 1/sqrt(dh) into Q weights, zero-pad the FF
    hidden dim 400 -> 512 (bit-identical output), stack all layers."""
    dh = D_MODEL // NHEAD
    scale = jnp.float32(1.0 / math.sqrt(dh))
    pad = DIM_FF_PAD - DIM_FF

    wqkv, bqkv, wo, bo = [], [], [], []
    g1, be1, g2, be2 = [], [], [], []
    w1, bf1, w2, bf2 = [], [], [], []
    for p in params:
        wqkv.append(p["wqkv"].at[:, :D_MODEL].multiply(scale))
        bqkv.append(p["bqkv"].at[:D_MODEL].multiply(scale)[None, :])
        wo.append(p["wo"])
        bo.append(p["bo"][None, :])
        g1.append(p["g1"][None, :]); be1.append(p["be1"][None, :])
        g2.append(p["g2"][None, :]); be2.append(p["be2"][None, :])
        w1.append(jnp.pad(p["w1"], ((0, 0), (0, pad))))
        bf1.append(jnp.pad(p["bf1"], ((0, pad),))[None, :])
        w2.append(jnp.pad(p["w2"], ((0, pad), (0, 0))))
        bf2.append(p["bf2"][None, :])

    stack = lambda xs: jnp.stack(xs, axis=0)
    return dict(wqkv=stack(wqkv), bqkv=stack(bqkv), wo=stack(wo), bo=stack(bo),
                g1=stack(g1), be1=stack(be1), g2=stack(g2), be2=stack(be2),
                w1=stack(w1), bf1=stack(bf1), w2=stack(w2), bf2=stack(bf2))


# -------------------------------- main ---------------------------------------
if __name__ == "__main__":
    key = jax.random.PRNGKey(0)
    kx, kp = jax.random.split(key)

    x = jax.random.normal(kx, (B, S, D_MODEL), jnp.float32)
    # key padding mask: True == padded.  Last 2 positions of batch element 1 padded.
    mask = jnp.zeros((B, S), dtype=bool).at[1, S - 2:].set(True)

    params = _init_params(kp)          # raw (reference) parameters
    stacked = _prepare_params(params)  # folded / padded / stacked for the kernel

    out = self_attn_enc(x, mask, stacked)
    out = jax.block_until_ready(out)

    ref = _reference(x, mask, params)
    assert out.shape == (B, S, D_MODEL)
    assert jnp.allclose(out, ref, atol=1e-4, rtol=1e-4), "mismatch vs pure-JAX reference"

    # TODO(synk): dropout is identity (inference mode); training-time stochastic
    # dropout would need pltpu.prng_seed/prng_random_bits in-kernel.
    print("KERNEL_OK")
</pallas_src>

<mosaic_0001>
module attributes {stable_mosaic.version = 11 : i64} {
  func.func @_fused_encoder_kernel(%arg0: memref<16x32xf32, #tpu.memory_space<vmem>>, %arg1: memref<2x8xf32, #tpu.memory_space<vmem>>, %arg2: memref<2x32x96xf32, #tpu.memory_space<vmem>>, %arg3: memref<2x1x96xf32, #tpu.memory_space<vmem>>, %arg4: memref<2x32x32xf32, #tpu.memory_space<vmem>>, %arg5: memref<2x1x32xf32, #tpu.memory_space<vmem>>, %arg6: memref<2x1x32xf32, #tpu.memory_space<vmem>>, %arg7: memref<2x1x32xf32, #tpu.memory_space<vmem>>, %arg8: memref<2x1x32xf32, #tpu.memory_space<vmem>>, %arg9: memref<2x1x32xf32, #tpu.memory_space<vmem>>, %arg10: memref<2x32x512xf32, #tpu.memory_space<vmem>>, %arg11: memref<2x1x512xf32, #tpu.memory_space<vmem>>, %arg12: memref<2x512x32xf32, #tpu.memory_space<vmem>>, %arg13: memref<2x1x32xf32, #tpu.memory_space<vmem>>, %arg14: memref<16x32xf32, #tpu.memory_space<vmem>>) attributes {dimension_semantics = [], scalar_prefetch = 0 : i64, scratch_operands = 0 : i64, tpu.core_type = #tpu.core_type<tc>} {
    %c0 = arith.constant 0 : index
    %c0_0 = arith.constant 0 : index
    %0 = vector.load %arg0[%c0, %c0_0] : memref<16x32xf32, #tpu.memory_space<vmem>>, vector<16x32xf32>
    %c0_1 = arith.constant 0 : index
    %c0_2 = arith.constant 0 : index
    %1 = vector.load %arg1[%c0_1, %c0_2] : memref<2x8xf32, #tpu.memory_space<vmem>>, vector<2x8xf32>
    %2 = vector.shape_cast %1 : vector<2x8xf32> to vector<2x1x8xf32>
    %3 = vector.shape_cast %2 : vector<2x1x8xf32> to vector<2x1x8xf32>
    %4 = vector.broadcast %3 : vector<2x1x8xf32> to vector<2x8x8xf32>
    %c0_3 = arith.constant 0 : index
    %c0_4 = arith.constant 0 : index
    %c0_5 = arith.constant 0 : index
    %5 = vector.load %arg2[%c0_3, %c0_4, %c0_5] : memref<2x32x96xf32, #tpu.memory_space<vmem>>, vector<1x32x96xf32>
    %6 = vector.shape_cast %5 : vector<1x32x96xf32> to vector<32x96xf32>
    %cst = arith.constant dense<0.000000e+00> : vector<16x96xf32>
    %7 = tpu.matmul %0, %6, %cst {dimension_numbers = #tpu.dot_dimension_numbers<[1], [0], [0], [1], [0, 0, 1, 1], [], []>} : vector<16x32xf32>, vector<32x96xf32>, vector<16x96xf32> -> vector<16x96xf32>
    %c0_6 = arith.constant 0 : index
    %c0_7 = arith.constant 0 : index
    %c0_8 = arith.constant 0 : index
    %8 = vector.load %arg3[%c0_6, %c0_7, %c0_8] : memref<2x1x96xf32, #tpu.memory_space<vmem>>, vector<1x1x96xf32>
    %9 = vector.shape_cast %8 : vector<1x1x96xf32> to vector<1x96xf32>
    %10 = vector.broadcast %9 : vector<1x96xf32> to vector<16x96xf32>
    %11 = arith.addf %7, %10 : vector<16x96xf32>
    %12 = vector.shape_cast %11 : vector<16x96xf32> to vector<2x8x96xf32>
    %cst_9 = arith.constant 0.000000e+00 : f32
    %13 = vector.broadcast %cst_9 : f32 to vector<16x32xf32>
    %14 = vector.extract_strided_slice %12 {offsets = [0, 0, 0], sizes = [2, 8, 8], strides = [1, 1, 1]} : vector<2x8x96xf32> to vector<2x8x8xf32>
    %15 = vector.extract_strided_slice %12 {offsets = [0, 0, 32], sizes = [2, 8, 8], strides = [1, 1, 1]} : vector<2x8x96xf32> to vector<2x8x8xf32>
    %16 = vector.extract_strided_slice %12 {offsets = [0, 0, 64], sizes = [2, 8, 8], strides = [1, 1, 1]} : vector<2x8x96xf32> to vector<2x8x8xf32>
    "tpu.trace_start"() <{level = 10 : i32, message = "bqd,bkd->bqk"}> : () -> ()
    %cst_10 = arith.constant dense<0.000000e+00> : vector<2x8x8xf32>
    %17 = tpu.matmul %14, %15, %cst_10 {dimension_numbers = #tpu.dot_dimension_numbers<[2], [2], [1], [1], [0, 0, 0, 1, 1, 1], [0], [0]>} : vector<2x8x8xf32>, vector<2x8x8xf32>, vector<2x8x8xf32> -> vector<2x8x8xf32>
    "tpu.trace_stop"() : () -> ()
    %18 = arith.addf %17, %4 : vector<2x8x8xf32>
    %cst_11 = arith.constant dense<0xFF800000> : vector<2x8xf32>
    %19 = vector.multi_reduction <maximumf>, %18, %cst_11 [2] : vector<2x8x8xf32> to vector<2x8xf32>
    %20 = vector.shape_cast %19 : vector<2x8xf32> to vector<2x8x1xf32>
    %21 = vector.broadcast %20 : vector<2x8x1xf32> to vector<2x8x8xf32>
    %22 = arith.subf %18, %21 : vector<2x8x8xf32>
    %23 = math.exp %22 : vector<2x8x8xf32>
    %cst_12 = arith.constant dense<0.000000e+00> : vector<2x8xf32>
    %24 = vector.multi_reduction <add>, %23, %cst_12 [2] : vector<2x8x8xf32> to vector<2x8xf32>
    %25 = vector.shape_cast %24 : vector<2x8xf32> to vector<2x8x1xf32>
    %26 = tpu.reciprocal %25 : vector<2x8x1xf32> -> vector<2x8x1xf32>
    %27 = vector.broadcast %26 : vector<2x8x1xf32> to vector<2x8x8xf32>
    %28 = arith.mulf %23, %27 : vector<2x8x8xf32>
    "tpu.trace_start"() <{level = 10 : i32, message = "bqk,bkd->bqd"}> : () -> ()
    %cst_13 = arith.constant dense<0.000000e+00> : vector<2x8x8xf32>
    %29 = tpu.matmul %28, %16, %cst_13 {dimension_numbers = #tpu.dot_dimension_numbers<[2], [1], [1], [2], [0, 0, 0, 1, 1, 2], [0], [0]>} : vector<2x8x8xf32>, vector<2x8x8xf32>, vector<2x8x8xf32> -> vector<2x8x8xf32>
    "tpu.trace_stop"() : () -> ()
    %30 = vector.shape_cast %29 : vector<2x8x8xf32> to vector<16x8xf32>
    %c0_14 = arith.constant 0 : index
    %c0_15 = arith.constant 0 : index
    %c0_16 = arith.constant 0 : index
    %31 = vector.load %arg4[%c0_14, %c0_15, %c0_16] : memref<2x32x32xf32, #tpu.memory_space<vmem>>, vector<1x8x32xf32>
    %32 = vector.shape_cast %31 : vector<1x8x32xf32> to vector<8x32xf32>
    %cst_17 = arith.constant dense<0.000000e+00> : vector<16x32xf32>
    %33 = tpu.matmul %30, %32, %cst_17 {dimension_numbers = #tpu.dot_dimension_numbers<[1], [0], [0], [1], [0, 0, 1, 1], [], []>} : vector<16x8xf32>, vector<8x32xf32>, vector<16x32xf32> -> vector<16x32xf32>
    %34 = arith.addf %13, %33 : vector<16x32xf32>
    %35 = vector.extract_strided_slice %12 {offsets = [0, 0, 8], sizes = [2, 8, 8], strides = [1, 1, 1]} : vector<2x8x96xf32> to vector<2x8x8xf32>
    %36 = vector.extract_strided_slice %12 {offsets = [0, 0, 40], sizes = [2, 8, 8], strides = [1, 1, 1]} : vector<2x8x96xf32> to vector<2x8x8xf32>
    %37 = vector.extract_strided_slice %12 {offsets = [0, 0, 72], sizes = [2, 8, 8], strides = [1, 1, 1]} : vector<2x8x96xf32> to vector<2x8x8xf32>
    "tpu.trace_start"() <{level = 10 : i32, message = "bqd,bkd->bqk"}> : () -> ()
    %cst_18 = arith.constant dense<0.000000e+00> : vector<2x8x8xf32>
    %38 = tpu.matmul %35, %36, %cst_18 {dimension_numbers = #tpu.dot_dimension_numbers<[2], [2], [1], [1], [0, 0, 0, 1, 1, 1], [0], [0]>} : vector<2x8x8xf32>, vector<2x8x8xf32>, vector<2x8x8xf32> -> vector<2x8x8xf32>
    "tpu.trace_stop"() : () -> ()
    %39 = arith.addf %38, %4 : vector<2x8x8xf32>
    %cst_19 = arith.constant dense<0xFF800000> : vector<2x8xf32>
    %40 = vector.multi_reduction <maximumf>, %39, %cst_19 [2] : vector<2x8x8xf32> to vector<2x8xf32>
    %41 = vector.shape_cast %40 : vector<2x8xf32> to vector<2x8x1xf32>
    %42 = vector.broadcast %41 : vector<2x8x1xf32> to vector<2x8x8xf32>
    %43 = arith.subf %39, %42 : vector<2x8x8xf32>
    %44 = math.exp %43 : vector<2x8x8xf32>
    %cst_20 = arith.constant dense<0.000000e+00> : vector<2x8xf32>
    %45 = vector.multi_reduction <add>, %44, %cst_20 [2] : vector<2x8x8xf32> to vector<2x8xf32>
    %46 = vector.shape_cast %45 : vector<2x8xf32> to vector<2x8x1xf32>
    %47 = tpu.reciprocal %46 : vector<2x8x1xf32> -> vector<2x8x1xf32>
    %48 = vector.broadcast %47 : vector<2x8x1xf32> to vector<2x8x8xf32>
    %49 = arith.mulf %44, %48 : vector<2x8x8xf32>
    "tpu.trace_start"() <{level = 10 : i32, message = "bqk,bkd->bqd"}> : () -> ()
    %cst_21 = arith.constant dense<0.000000e+00> : vector<2x8x8xf32>
    %50 = tpu.matmul %49, %37, %cst_21 {dimension_numbers = #tpu.dot_dimension_numbers<[2], [1], [1], [2], [0, 0, 0, 1, 1, 2], [0], [0]>} : vector<2x8x8xf32>, vector<2x8x8xf32>, vector<2x8x8xf32> -> vector<2x8x8xf32>
    "tpu.trace_stop"() : () -> ()
    %51 = vector.shape_cast %50 : vector<2x8x8xf32> to vector<16x8xf32>
    %c0_22 = arith.constant 0 : index
    %c8 = arith.constant 8 : index
    %c0_23 = arith.constant 0 : index
    %52 = vector.load %arg4[%c0_22, %c8, %c0_23] : memref<2x32x32xf32, #tpu.memory_space<vmem>>, vector<1x8x32xf32>
    %53 = vector.shape_cast %52 : vector<1x8x32xf32> to vector<8x32xf32>
    %cst_24 = arith.constant dense<0.000000e+00> : vector<16x32xf32>
    %54 = tpu.matmul %51, %53, %cst_24 {dimension_numbers = #tpu.dot_dimension_numbers<[1], [0], [0], [1], [0, 0, 1, 1], [], []>} : vector<16x8xf32>, vector<8x32xf32>, vector<16x32xf32> -> vector<16x32xf32>
    %55 = arith.addf %34, %54 : vector<16x32xf32>
    %56 = vector.extract_strided_slice %12 {offsets = [0, 0, 16], sizes = [2, 8, 8], strides = [1, 1, 1]} : vector<2x8x96xf32> to vector<2x8x8xf32>
    %57 = vector.extract_strided_slice %12 {offsets = [0, 0, 48], sizes = [2, 8, 8], strides = [1, 1, 1]} : vector<2x8x96xf32> to vector<2x8x8xf32>
    %58 = vector.extract_strided_slice %12 {offsets = [0, 0, 80], sizes = [2, 8, 8], strides = [1, 1, 1]} : vector<2x8x96xf32> to vector<2x8x8xf32>
    "tpu.trace_start"() <{level = 10 : i32, message = "bqd,bkd->bqk"}> : () -> ()
    %cst_25 = arith.constant dense<0.000000e+00> : vector<2x8x8xf32>
    %59 = tpu.matmul %56, %57, %cst_25 {dimension_numbers = #tpu.dot_dimension_numbers<[2], [2], [1], [1], [0, 0, 0, 1, 1, 1], [0], [0]>} : vector<2x8x8xf32>, vector<2x8x8xf32>, vector<2x8x8xf32> -> vector<2x8x8xf32>
    "tpu.trace_stop"() : () -> ()
    %60 = arith.addf %59, %4 : vector<2x8x8xf32>
    %cst_26 = arith.constant dense<0xFF800000> : vector<2x8xf32>
    %61 = vector.multi_reduction <maximumf>, %60, %cst_26 [2] : vector<2x8x8xf32> to vector<2x8xf32>
    %62 = vector.shape_cast %61 : vector<2x8xf32> to vector<2x8x1xf32>
    %63 = vector.broadcast %62 : vector<2x8x1xf32> to vector<2x8x8xf32>
    %64 = arith.subf %60, %63 : vector<2x8x8xf32>
    %65 = math.exp %64 : vector<2x8x8xf32>
    %cst_27 = arith.constant dense<0.000000e+00> : vector<2x8xf32>
    %66 = vector.multi_reduction <add>, %65, %cst_27 [2] : vector<2x8x8xf32> to vector<2x8xf32>
    %67 = vector.shape_cast %66 : vector<2x8xf32> to vector<2x8x1xf32>
    %68 = tpu.reciprocal %67 : vector<2x8x1xf32> -> vector<2x8x1xf32>
    %69 = vector.broadcast %68 : vector<2x8x1xf32> to vector<2x8x8xf32>
    %70 = arith.mulf %65, %69 : vector<2x8x8xf32>
    "tpu.trace_start"() <{level = 10 : i32, message = "bqk,bkd->bqd"}> : () -> ()
    %cst_28 = arith.constant dense<0.000000e+00> : vector<2x8x8xf32>
    %71 = tpu.matmul %70, %58, %cst_28 {dimension_numbers = #tpu.dot_dimension_numbers<[2], [1], [1], [2], [0, 0, 0, 1, 1, 2], [0], [0]>} : vector<2x8x8xf32>, vector<2x8x8xf32>, vector<2x8x8xf32> -> vector<2x8x8xf32>
    "tpu.trace_stop"() : () -> ()
    %72 = vector.shape_cast %71 : vector<2x8x8xf32> to vector<16x8xf32>
    %c0_29 = arith.constant 0 : index
    %c16 = arith.constant 16 : index
    %c0_30 = arith.constant 0 : index
    %73 = vector.load %arg4[%c0_29, %c16, %c0_30] : memref<2x32x32xf32, #tpu.memory_space<vmem>>, vector<1x8x32xf32>
    %74 = vector.shape_cast %73 : vector<1x8x32xf32> to vector<8x32xf32>
    %cst_31 = arith.constant dense<0.000000e+00> : vector<16x32xf32>
    %75 = tpu.matmul %72, %74, %cst_31 {dimension_numbers = #tpu.dot_dimension_numbers<[1], [0], [0], [1], [0, 0, 1, 1], [], []>} : vector<16x8xf32>, vector<8x32xf32>, vector<16x32xf32> -> vector<16x32xf32>
    %76 = arith.addf %55, %75 : vector<16x32xf32>
    %77 = vector.extract_strided_slice %12 {offsets = [0, 0, 24], sizes = [2, 8, 8], strides = [1, 1, 1]} : vector<2x8x96xf32> to vector<2x8x8xf32>
    %78 = vector.extract_strided_slice %12 {offsets = [0, 0, 56], sizes = [2, 8, 8], strides = [1, 1, 1]} : vector<2x8x96xf32> to vector<2x8x8xf32>
    %79 = vector.extract_strided_slice %12 {offsets = [0, 0, 88], sizes = [2, 8, 8], strides = [1, 1, 1]} : vector<2x8x96xf32> to vector<2x8x8xf32>
    "tpu.trace_start"() <{level = 10 : i32, message = "bqd,bkd->bqk"}> : () -> ()
    %cst_32 = arith.constant dense<0.000000e+00> : vector<2x8x8xf32>
    %80 = tpu.matmul %77, %78, %cst_32 {dimension_numbers = #tpu.dot_dimension_numbers<[2], [2], [1], [1], [0, 0, 0, 1, 1, 1], [0], [0]>} : vector<2x8x8xf32>, vector<2x8x8xf32>, vector<2x8x8xf32> -> vector<2x8x8xf32>
    "tpu.trace_stop"() : () -> ()
    %81 = arith.addf %80, %4 : vector<2x8x8xf32>
    %cst_33 = arith.constant dense<0xFF800000> : vector<2x8xf32>
    %82 = vector.multi_reduction <maximumf>, %81, %cst_33 [2] : vector<2x8x8xf32> to vector<2x8xf32>
    %83 = vector.shape_cast %82 : vector<2x8xf32> to vector<2x8x1xf32>
    %84 = vector.broadcast %83 : vector<2x8x1xf32> to vector<2x8x8xf32>
    %85 = arith.subf %81, %84 : vector<2x8x8xf32>
    %86 = math.exp %85 : vector<2x8x8xf32>
    %cst_34 = arith.constant dense<0.000000e+00> : vector<2x8xf32>
    %87 = vector.multi_reduction <add>, %86, %cst_34 [2] : vector<2x8x8xf32> to vector<2x8xf32>
    %88 = vector.shape_cast %87 : vector<2x8xf32> to vector<2x8x1xf32>
    %89 = tpu.reciprocal %88 : vector<2x8x1xf32> -> vector<2x8x1xf32>
    %90 = vector.broadcast %89 : vector<2x8x1xf32> to vector<2x8x8xf32>
    %91 = arith.mulf %86, %90 : vector<2x8x8xf32>
    "tpu.trace_start"() <{level = 10 : i32, message = "bqk,bkd->bqd"}> : () -> ()
    %cst_35 = arith.constant dense<0.000000e+00> : vector<2x8x8xf32>
    %92 = tpu.matmul %91, %79, %cst_35 {dimension_numbers = #tpu.dot_dimension_numbers<[2], [1], [1], [2], [0, 0, 0, 1, 1, 2], [0], [0]>} : vector<2x8x8xf32>, vector<2x8x8xf32>, vector<2x8x8xf32> -> vector<2x8x8xf32>
    "tpu.trace_stop"() : () -> ()
    %93 = vector.shape_cast %92 : vector<2x8x8xf32> to vector<16x8xf32>
    %c0_36 = arith.constant 0 : index
    %c24 = arith.constant 24 : index
    %c0_37 = arith.constant 0 : index
    %94 = vector.load %arg4[%c0_36, %c24, %c0_37] : memref<2x32x32xf32, #tpu.memory_space<vmem>>, vector<1x8x32xf32>
    %95 = vector.shape_cast %94 : vector<1x8x32xf32> to vector<8x32xf32>
    %cst_38 = arith.constant dense<0.000000e+00> : vector<16x32xf32>
    %96 = tpu.matmul %93, %95, %cst_38 {dimension_numbers = #tpu.dot_dimension_numbers<[1], [0], [0], [1], [0, 0, 1, 1], [], []>} : vector<16x8xf32>, vector<8x32xf32>, vector<16x32xf32> -> vector<16x32xf32>
    %97 = arith.addf %76, %96 : vector<16x32xf32>
    %c0_39 = arith.constant 0 : index
    %c0_40 = arith.constant 0 : index
    %c0_41 = arith.constant 0 : index
    %98 = vector.load %arg5[%c0_39, %c0_40, %c0_41] : memref<2x1x32xf32, #tpu.memory_space<vmem>>, vector<1x1x32xf32>
    %99 = vector.shape_cast %98 : vector<1x1x32xf32> to vector<1x32xf32>
    %100 = vector.broadcast %99 : vector<1x32xf32> to vector<16x32xf32>
    %101 = arith.addf %97, %100 : vector<16x32xf32>
    %102 = arith.addf %0, %101 : vector<16x32xf32>
    %c0_42 = arith.constant 0 : index
    %c0_43 = arith.constant 0 : index
    %c0_44 = arith.constant 0 : index
    %103 = vector.load %arg6[%c0_42, %c0_43, %c0_44] : memref<2x1x32xf32, #tpu.memory_space<vmem>>, vector<1x1x32xf32>
    %104 = vector.shape_cast %103 : vector<1x1x32xf32> to vector<1x32xf32>
    %c0_45 = arith.constant 0 : index
    %c0_46 = arith.constant 0 : index
    %c0_47 = arith.constant 0 : index
    %105 = vector.load %arg7[%c0_45, %c0_46, %c0_47] : memref<2x1x32xf32, #tpu.memory_space<vmem>>, vector<1x1x32xf32>
    %106 = vector.shape_cast %105 : vector<1x1x32xf32> to vector<1x32xf32>
    %cst_48 = arith.constant dense<0.000000e+00> : vector<16xf32>
    %107 = vector.multi_reduction <add>, %102, %cst_48 [1] : vector<16x32xf32> to vector<16xf32>
    %108 = vector.shape_cast %107 : vector<16xf32> to vector<16x1xf32>
    %cst_49 = arith.constant 3.200000e+01 : f32
    %109 = vector.broadcast %cst_49 : f32 to vector<16x1xf32>
    %110 = arith.divf %108, %109 : vector<16x1xf32>
    %111 = vector.broadcast %110 : vector<16x1xf32> to vector<16x32xf32>
    %112 = arith.subf %102, %111 : vector<16x32xf32>
    %113 = arith.mulf %112, %112 : vector<16x32xf32>
    %cst_50 = arith.constant dense<0.000000e+00> : vector<16xf32>
    %114 = vector.multi_reduction <add>, %113, %cst_50 [1] : vector<16x32xf32> to vector<16xf32>
    %115 = vector.shape_cast %114 : vector<16xf32> to vector<16x1xf32>
    %cst_51 = arith.constant 3.200000e+01 : f32
    %116 = vector.broadcast %cst_51 : f32 to vector<16x1xf32>
    %117 = arith.divf %115, %116 : vector<16x1xf32>
    %118 = vector.broadcast %110 : vector<16x1xf32> to vector<16x32xf32>
    %119 = arith.subf %102, %118 : vector<16x32xf32>
    %cst_52 = arith.constant 9.99999974E-6 : f32
    %120 = vector.broadcast %cst_52 : f32 to vector<16x1xf32>
    %121 = arith.addf %117, %120 : vector<16x1xf32>
    %122 = math.rsqrt %121 : vector<16x1xf32>
    %123 = vector.broadcast %122 : vector<16x1xf32> to vector<16x32xf32>
    %124 = arith.mulf %119, %123 : vector<16x32xf32>
    %125 = vector.broadcast %104 : vector<1x32xf32> to vector<16x32xf32>
    %126 = arith.mulf %124, %125 : vector<16x32xf32>
    %127 = vector.broadcast %106 : vector<1x32xf32> to vector<16x32xf32>
    %128 = arith.addf %126, %127 : vector<16x32xf32>
    %c0_53 = arith.constant 0 : index
    %c0_54 = arith.constant 0 : index
    %c0_55 = arith.constant 0 : index
    %129 = vector.load %arg10[%c0_53, %c0_54, %c0_55] : memref<2x32x512xf32, #tpu.memory_space<vmem>>, vector<1x32x512xf32>
    %130 = vector.shape_cast %129 : vector<1x32x512xf32> to vector<32x512xf32>
    %cst_56 = arith.constant dense<0.000000e+00> : vector<16x512xf32>
    %131 = tpu.matmul %128, %130, %cst_56 {dimension_numbers = #tpu.dot_dimension_numbers<[1], [0], [0], [1], [0, 0, 1, 1], [], []>} : vector<16x32xf32>, vector<32x512xf32>, vector<16x512xf32> -> vector<16x512xf32>
    %c0_57 = arith.constant 0 : index
    %c0_58 = arith.constant 0 : index
    %c0_59 = arith.constant 0 : index
    %132 = vector.load %arg11[%c0_57, %c0_58, %c0_59] : memref<2x1x512xf32, #tpu.memory_space<vmem>>, vector<1x1x512xf32>
    %133 = vector.shape_cast %132 : vector<1x1x512xf32> to vector<1x512xf32>
    %134 = vector.broadcast %133 : vector<1x512xf32> to vector<16x512xf32>
    %135 = arith.addf %131, %134 : vector<16x512xf32>
    %cst_60 = arith.constant 0.000000e+00 : f32
    %136 = vector.broadcast %cst_60 : f32 to vector<16x512xf32>
    %137 = arith.maximumf %135, %136 : vector<16x512xf32>
    %c0_61 = arith.constant 0 : index
    %c0_62 = arith.constant 0 : index
    %c0_63 = arith.constant 0 : index
    %138 = vector.load %arg12[%c0_61, %c0_62, %c0_63] : memref<2x512x32xf32, #tpu.memory_space<vmem>>, vector<1x512x32xf32>
    %139 = vector.shape_cast %138 : vector<1x512x32xf32> to vector<512x32xf32>
    %cst_64 = arith.constant dense<0.000000e+00> : vector<16x32xf32>
    %140 = tpu.matmul %137, %139, %cst_64 {dimension_numbers = #tpu.dot_dimension_numbers<[1], [0], [0], [1], [0, 0, 1, 1], [], []>} : vector<16x512xf32>, vector<512x32xf32>, vector<16x32xf32> -> vector<16x32xf32>
    %c0_65 = arith.constant 0 : index
    %c0_66 = arith.constant 0 : index
    %c0_67 = arith.constant 0 : index
    %141 = vector.load %arg13[%c0_65, %c0_66, %c0_67] : memref<2x1x32xf32, #tpu.memory_space<vmem>>, vector<1x1x32xf32>
    %142 = vector.shape_cast %141 : vector<1x1x32xf32> to vector<1x32xf32>
    %143 = vector.broadcast %142 : vector<1x32xf32> to vector<16x32xf32>
    %144 = arith.addf %140, %143 : vector<16x32xf32>
    %145 = arith.addf %128, %144 : vector<16x32xf32>
    %c0_68 = arith.constant 0 : index
    %c0_69 = arith.constant 0 : index
    %c0_70 = arith.constant 0 : index
    %146 = vector.load %arg8[%c0_68, %c0_69, %c0_70] : memref<2x1x32xf32, #tpu.memory_space<vmem>>, vector<1x1x32xf32>
    %147 = vector.shape_cast %146 : vector<1x1x32xf32> to vector<1x32xf32>
    %c0_71 = arith.constant 0 : index
    %c0_72 = arith.constant 0 : index
    %c0_73 = arith.constant 0 : index
    %148 = vector.load %arg9[%c0_71, %c0_72, %c0_73] : memref<2x1x32xf32, #tpu.memory_space<vmem>>, vector<1x1x32xf32>
    %149 = vector.shape_cast %148 : vector<1x1x32xf32> to vector<1x32xf32>
    %cst_74 = arith.constant dense<0.000000e+00> : vector<16xf32>
    %150 = vector.multi_reduction <add>, %145, %cst_74 [1] : vector<16x32xf32> to vector<16xf32>
    %151 = vector.shape_cast %150 : vector<16xf32> to vector<16x1xf32>
    %cst_75 = arith.constant 3.200000e+01 : f32
    %152 = vector.broadcast %cst_75 : f32 to vector<16x1xf32>
    %153 = arith.divf %151, %152 : vector<16x1xf32>
    %154 = vector.broadcast %153 : vector<16x1xf32> to vector<16x32xf32>
    %155 = arith.subf %145, %154 : vector<16x32xf32>
    %156 = arith.mulf %155, %155 : vector<16x32xf32>
    %cst_76 = arith.constant dense<0.000000e+00> : vector<16xf32>
    %157 = vector.multi_reduction <add>, %156, %cst_76 [1] : vector<16x32xf32> to vector<16xf32>
    %158 = vector.shape_cast %157 : vector<16xf32> to vector<16x1xf32>
    %cst_77 = arith.constant 3.200000e+01 : f32
    %159 = vector.broadcast %cst_77 : f32 to vector<16x1xf32>
    %160 = arith.divf %158, %159 : vector<16x1xf32>
    %161 = vector.broadcast %153 : vector<16x1xf32> to vector<16x32xf32>
    %162 = arith.subf %145, %161 : vector<16x32xf32>
    %cst_78 = arith.constant 9.99999974E-6 : f32
    %163 = vector.broadcast %cst_78 : f32 to vector<16x1xf32>
    %164 = arith.addf %160, %163 : vector<16x1xf32>
    %165 = math.rsqrt %164 : vector<16x1xf32>
    %166 = vector.broadcast %165 : vector<16x1xf32> to vector<16x32xf32>
    %167 = arith.mulf %162, %166 : vector<16x32xf32>
    %168 = vector.broadcast %147 : vector<1x32xf32> to vector<16x32xf32>
    %169 = arith.mulf %167, %168 : vector<16x32xf32>
    %170 = vector.broadcast %149 : vector<1x32xf32> to vector<16x32xf32>
    %171 = arith.addf %169, %170 : vector<16x32xf32>
    %c1 = arith.constant 1 : index
    %c0_79 = arith.constant 0 : index
    %c0_80 = arith.constant 0 : index
    %172 = vector.load %arg2[%c1, %c0_79, %c0_80] : memref<2x32x96xf32, #tpu.memory_space<vmem>>, vector<1x32x96xf32>
    %173 = vector.shape_cast %172 : vector<1x32x96xf32> to vector<32x96xf32>
    %cst_81 = arith.constant dense<0.000000e+00> : vector<16x96xf32>
    %174 = tpu.matmul %171, %173, %cst_81 {dimension_numbers = #tpu.dot_dimension_numbers<[1], [0], [0], [1], [0, 0, 1, 1], [], []>} : vector<16x32xf32>, vector<32x96xf32>, vector<16x96xf32> -> vector<16x96xf32>
    %c1_82 = arith.constant 1 : index
    %c0_83 = arith.constant 0 : index
    %c0_84 = arith.constant 0 : index
    %175 = vector.load %arg3[%c1_82, %c0_83, %c0_84] : memref<2x1x96xf32, #tpu.memory_space<vmem>>, vector<1x1x96xf32>
    %176 = vector.shape_cast %175 : vector<1x1x96xf32> to vector<1x96xf32>
    %177 = vector.broadcast %176 : vector<1x96xf32> to vector<16x96xf32>
    %178 = arith.addf %174, %177 : vector<16x96xf32>
    %179 = vector.shape_cast %178 : vector<16x96xf32> to vector<2x8x96xf32>
    %cst_85 = arith.constant 0.000000e+00 : f32
    %180 = vector.broadcast %cst_85 : f32 to vector<16x32xf32>
    %181 = vector.extract_strided_slice %179 {offsets = [0, 0, 0], sizes = [2, 8, 8], strides = [1, 1, 1]} : vector<2x8x96xf32> to vector<2x8x8xf32>
    %182 = vector.extract_strided_slice %179 {offsets = [0, 0, 32], sizes = [2, 8, 8], strides = [1, 1, 1]} : vector<2x8x96xf32> to vector<2x8x8xf32>
    %183 = vector.extract_strided_slice %179 {offsets = [0, 0, 64], sizes = [2, 8, 8], strides = [1, 1, 1]} : vector<2x8x96xf32> to vector<2x8x8xf32>
    "tpu.trace_start"() <{level = 10 : i32, message = "bqd,bkd->bqk"}> : () -> ()
    %cst_86 = arith.constant dense<0.000000e+00> : vector<2x8x8xf32>
    %184 = tpu.matmul %181, %182, %cst_86 {dimension_numbers = #tpu.dot_dimension_numbers<[2], [2], [1], [1], [0, 0, 0, 1, 1, 1], [0], [0]>} : vector<2x8x8xf32>, vector<2x8x8xf32>, vector<2x8x8xf32> -> vector<2x8x8xf32>
    "tpu.trace_stop"() : () -> ()
    %185 = arith.addf %184, %4 : vector<2x8x8xf32>
    %cst_87 = arith.constant dense<0xFF800000> : vector<2x8xf32>
    %186 = vector.multi_reduction <maximumf>, %185, %cst_87 [2] : vector<2x8x8xf32> to vector<2x8xf32>
    %187 = vector.shape_cast %186 : vector<2x8xf32> to vector<2x8x1xf32>
    %188 = vector.broadcast %187 : vector<2x8x1xf32> to vector<2x8x8xf32>
    %189 = arith.subf %185, %188 : vector<2x8x8xf32>
    %190 = math.exp %189 : vector<2x8x8xf32>
    %cst_88 = arith.constant dense<0.000000e+00> : vector<2x8xf32>
    %191 = vector.multi_reduction <add>, %190, %cst_88 [2] : vector<2x8x8xf32> to vector<2x8xf32>
    %192 = vector.shape_cast %191 : vector<2x8xf32> to vector<2x8x1xf32>
    %193 = tpu.reciprocal %192 : vector<2x8x1xf32> -> vector<2x8x1xf32>
    %194 = vector.broadcast %193 : vector<2x8x1xf32> to vector<2x8x8xf32>
    %195 = arith.mulf %190, %194 : vector<2x8x8xf32>
    "tpu.trace_start"() <{level = 10 : i32, message = "bqk,bkd->bqd"}> : () -> ()
    %cst_89 = arith.constant dense<0.000000e+00> : vector<2x8x8xf32>
    %196 = tpu.matmul %195, %183, %cst_89 {dimension_numbers = #tpu.dot_dimension_numbers<[2], [1], [1], [2], [0, 0, 0, 1, 1, 2], [0], [0]>} : vector<2x8x8xf32>, vector<2x8x8xf32>, vector<2x8x8xf32> -> vector<2x8x8xf32>
    "tpu.trace_stop"() : () -> ()
    %197 = vector.shape_cast %196 : vector<2x8x8xf32> to vector<16x8xf32>
    %c1_90 = arith.constant 1 : index
    %c0_91 = arith.constant 0 : index
    %c0_92 = arith.constant 0 : index
    %198 = vector.load %arg4[%c1_90, %c0_91, %c0_92] : memref<2x32x32xf32, #tpu.memory_space<vmem>>, vector<1x8x32xf32>
    %199 = vector.shape_cast %198 : vector<1x8x32xf32> to vector<8x32xf32>
    %cst_93 = arith.constant dense<0.000000e+00> : vector<16x32xf32>
    %200 = tpu.matmul %197, %199, %cst_93 {dimension_numbers = #tpu.dot_dimension_numbers<[1], [0], [0], [1], [0, 0, 1, 1], [], []>} : vector<16x8xf32>, vector<8x32xf32>, vector<16x32xf32> -> vector<16x32xf32>
    %201 = arith.addf %180, %200 : vector<16x32xf32>
    %202 = vector.extract_strided_slice %179 {offsets = [0, 0, 8], sizes = [2, 8, 8], strides = [1, 1, 1]} : vector<2x8x96xf32> to vector<2x8x8xf32>
    %203 = vector.extract_strided_slice %179 {offsets = [0, 0, 40], sizes = [2, 8, 8], strides = [1, 1, 1]} : vector<2x8x96xf32> to vector<2x8x8xf32>
    %204 = vector.extract_strided_slice %179 {offsets = [0, 0, 72], sizes = [2, 8, 8], strides = [1, 1, 1]} : vector<2x8x96xf32> to vector<2x8x8xf32>
    "tpu.trace_start"() <{level = 10 : i32, message = "bqd,bkd->bqk"}> : () -> ()
    %cst_94 = arith.constant dense<0.000000e+00> : vector<2x8x8xf32>
    %205 = tpu.matmul %202, %203, %cst_94 {dimension_numbers = #tpu.dot_dimension_numbers<[2], [2], [1], [1], [0, 0, 0, 1, 1, 1], [0], [0]>} : vector<2x8x8xf32>, vector<2x8x8xf32>, vector<2x8x8xf32> -> vector<2x8x8xf32>
    "tpu.trace_stop"() : () -> ()
    %206 = arith.addf %205, %4 : vector<2x8x8xf32>
    %cst_95 = arith.constant dense<0xFF800000> : vector<2x8xf32>
    %207 = vector.multi_reduction <maximumf>, %206, %cst_95 [2] : vector<2x8x8xf32> to vector<2x8xf32>
    %208 = vector.shape_cast %207 : vector<2x8xf32> to vector<2x8x1xf32>
    %209 = vector.broadcast %208 : vector<2x8x1xf32> to vector<2x8x8xf32>
    %210 = arith.subf %206, %209 : vector<2x8x8xf32>
    %211 = math.exp %210 : vector<2x8x8xf32>
    %cst_96 = arith.constant dense<0.000000e+00> : vector<2x8xf32>
    %212 = vector.multi_reduction <add>, %211, %cst_96 [2] : vector<2x8x8xf32> to vector<2x8xf32>
    %213 = vector.shape_cast %212 : vector<2x8xf32> to vector<2x8x1xf32>
    %214 = tpu.reciprocal %213 : vector<2x8x1xf32> -> vector<2x8x1xf32>
    %215 = vector.broadcast %214 : vector<2x8x1xf32> to vector<2x8x8xf32>
    %216 = arith.mulf %211, %215 : vector<2x8x8xf32>
    "tpu.trace_start"() <{level = 10 : i32, message = "bqk,bkd->bqd"}> : () -> ()
    %cst_97 = arith.constant dense<0.000000e+00> : vector<2x8x8xf32>
    %217 = tpu.matmul %216, %204, %cst_97 {dimension_numbers = #tpu.dot_dimension_numbers<[2], [1], [1], [2], [0, 0, 0, 1, 1, 2], [0], [0]>} : vector<2x8x8xf32>, vector<2x8x8xf32>, vector<2x8x8xf32> -> vector<2x8x8xf32>
    "tpu.trace_stop"() : () -> ()
    %218 = vector.shape_cast %217 : vector<2x8x8xf32> to vector<16x8xf32>
    %c1_98 = arith.constant 1 : index
    %c8_99 = arith.constant 8 : index
    %c0_100 = arith.constant 0 : index
    %219 = vector.load %arg4[%c1_98, %c8_99, %c0_100] : memref<2x32x32xf32, #tpu.memory_space<vmem>>, vector<1x8x32xf32>
    %220 = vector.shape_cast %219 : vector<1x8x32xf32> to vector<8x32xf32>
    %cst_101 = arith.constant dense<0.000000e+00> : vector<16x32xf32>
    %221 = tpu.matmul %218, %220, %cst_101 {dimension_numbers = #tpu.dot_dimension_numbers<[1], [0], [0], [1], [0, 0, 1, 1], [], []>} : vector<16x8xf32>, vector<8x32xf32>, vector<16x32xf32> -> vector<16x32xf32>
    %222 = arith.addf %201, %221 : vector<16x32xf32>
    %223 = vector.extract_strided_slice %179 {offsets = [0, 0, 16], sizes = [2, 8, 8], strides = [1, 1, 1]} : vector<2x8x96xf32> to vector<2x8x8xf32>
    %224 = vector.extract_strided_slice %179 {offsets = [0, 0, 48], sizes = [2, 8, 8], strides = [1, 1, 1]} : vector<2x8x96xf32> to vector<2x8x8xf32>
    %225 = vector.extract_strided_slice %179 {offsets = [0, 0, 80], sizes = [2, 8, 8], strides = [1, 1, 1]} : vector<2x8x96xf32> to vector<2x8x8xf32>
    "tpu.trace_start"() <{level = 10 : i32, message = "bqd,bkd->bqk"}> : () -> ()
    %cst_102 = arith.constant dense<0.000000e+00> : vector<2x8x8xf32>
    %226 = tpu.matmul %223, %224, %cst_102 {dimension_numbers = #tpu.dot_dimension_numbers<[2], [2], [1], [1], [0, 0, 0, 1, 1, 1], [0], [0]>} : vector<2x8x8xf32>, vector<2x8x8xf32>, vector<2x8x8xf32> -> vector<2x8x8xf32>
    "tpu.trace_stop"() : () -> ()
    %227 = arith.addf %226, %4 : vector<2x8x8xf32>
    %cst_103 = arith.constant dense<0xFF800000> : vector<2x8xf32>
    %228 = vector.multi_reduction <maximumf>, %227, %cst_103 [2] : vector<2x8x8xf32> to vector<2x8xf32>
    %229 = vector.shape_cast %228 : vector<2x8xf32> to vector<2x8x1xf32>
    %230 = vector.broadcast %229 : vector<2x8x1xf32> to vector<2x8x8xf32>
    %231 = arith.subf %227, %230 : vector<2x8x8xf32>
    %232 = math.exp %231 : vector<2x8x8xf32>
    %cst_104 = arith.constant dense<0.000000e+00> : vector<2x8xf32>
    %233 = vector.multi_reduction <add>, %232, %cst_104 [2] : vector<2x8x8xf32> to vector<2x8xf32>
    %234 = vector.shape_cast %233 : vector<2x8xf32> to vector<2x8x1xf32>
    %235 = tpu.reciprocal %234 : vector<2x8x1xf32> -> vector<2x8x1xf32>
    %236 = vector.broadcast %235 : vector<2x8x1xf32> to vector<2x8x8xf32>
    %237 = arith.mulf %232, %236 : vector<2x8x8xf32>
    "tpu.trace_start"() <{level = 10 : i32, message = "bqk,bkd->bqd"}> : () -> ()
    %cst_105 = arith.constant dense<0.000000e+00> : vector<2x8x8xf32>
    %238 = tpu.matmul %237, %225, %cst_105 {dimension_numbers = #tpu.dot_dimension_numbers<[2], [1], [1], [2], [0, 0, 0, 1, 1, 2], [0], [0]>} : vector<2x8x8xf32>, vector<2x8x8xf32>, vector<2x8x8xf32> -> vector<2x8x8xf32>
    "tpu.trace_stop"() : () -> ()
    %239 = vector.shape_cast %238 : vector<2x8x8xf32> to vector<16x8xf32>
    %c1_106 = arith.constant 1 : index
    %c16_107 = arith.constant 16 : index
    %c0_108 = arith.constant 0 : index
    %240 = vector.load %arg4[%c1_106, %c16_107, %c0_108] : memref<2x32x32xf32, #tpu.memory_space<vmem>>, vector<1x8x32xf32>
    %241 = vector.shape_cast %240 : vector<1x8x32xf32> to vector<8x32xf32>
    %cst_109 = arith.constant dense<0.000000e+00> : vector<16x32xf32>
    %242 = tpu.matmul %239, %241, %cst_109 {dimension_numbers = #tpu.dot_dimension_numbers<[1], [0], [0], [1], [0, 0, 1, 1], [], []>} : vector<16x8xf32>, vector<8x32xf32>, vector<16x32xf32> -> vector<16x32xf32>
    %243 = arith.addf %222, %242 : vector<16x32xf32>
    %244 = vector.extract_strided_slice %179 {offsets = [0, 0, 24], sizes = [2, 8, 8], strides = [1, 1, 1]} : vector<2x8x96xf32> to vector<2x8x8xf32>
    %245 = vector.extract_strided_slice %179 {offsets = [0, 0, 56], sizes = [2, 8, 8], strides = [1, 1, 1]} : vector<2x8x96xf32> to vector<2x8x8xf32>
    %246 = vector.extract_strided_slice %179 {offsets = [0, 0, 88], sizes = [2, 8, 8], strides = [1, 1, 1]} : vector<2x8x96xf32> to vector<2x8x8xf32>
    "tpu.trace_start"() <{level = 10 : i32, message = "bqd,bkd->bqk"}> : () -> ()
    %cst_110 = arith.constant dense<0.000000e+00> : vector<2x8x8xf32>
    %247 = tpu.matmul %244, %245, %cst_110 {dimension_numbers = #tpu.dot_dimension_numbers<[2], [2], [1], [1], [0, 0, 0, 1, 1, 1], [0], [0]>} : vector<2x8x8xf32>, vector<2x8x8xf32>, vector<2x8x8xf32> -> vector<2x8x8xf32>
    "tpu.trace_stop"() : () -> ()
    %248 = arith.addf %247, %4 : vector<2x8x8xf32>
    %cst_111 = arith.constant dense<0xFF800000> : vector<2x8xf32>
    %249 = vector.multi_reduction <maximumf>, %248, %cst_111 [2] : vector<2x8x8xf32> to vector<2x8xf32>
    %250 = vector.shape_cast %249 : vector<2x8xf32> to vector<2x8x1xf32>
    %251 = vector.broadcast %250 : vector<2x8x1xf32> to vector<2x8x8xf32>
    %252 = arith.subf %248, %251 : vector<2x8x8xf32>
    %253 = math.exp %252 : vector<2x8x8xf32>
    %cst_112 = arith.constant dense<0.000000e+00> : vector<2x8xf32>
    %254 = vector.multi_reduction <add>, %253, %cst_112 [2] : vector<2x8x8xf32> to vector<2x8xf32>
    %255 = vector.shape_cast %254 : vector<2x8xf32> to vector<2x8x1xf32>
    %256 = tpu.reciprocal %255 : vector<2x8x1xf32> -> vector<2x8x1xf32>
    %257 = vector.broadcast %256 : vector<2x8x1xf32> to vector<2x8x8xf32>
    %258 = arith.mulf %253, %257 : vector<2x8x8xf32>
    "tpu.trace_start"() <{level = 10 : i32, message = "bqk,bkd->bqd"}> : () -> ()
    %cst_113 = arith.constant dense<0.000000e+00> : vector<2x8x8xf32>
    %259 = tpu.matmul %258, %246, %cst_113 {dimension_numbers = #tpu.dot_dimension_numbers<[2], [1], [1], [2], [0, 0, 0, 1, 1, 2], [0], [0]>} : vector<2x8x8xf32>, vector<2x8x8xf32>, vector<2x8x8xf32> -> vector<2x8x8xf32>
    "tpu.trace_stop"() : () -> ()
    %260 = vector.shape_cast %259 : vector<2x8x8xf32> to vector<16x8xf32>
    %c1_114 = arith.constant 1 : index
    %c24_115 = arith.constant 24 : index
    %c0_116 = arith.constant 0 : index
    %261 = vector.load %arg4[%c1_114, %c24_115, %c0_116] : memref<2x32x32xf32, #tpu.memory_space<vmem>>, vector<1x8x32xf32>
    %262 = vector.shape_cast %261 : vector<1x8x32xf32> to vector<8x32xf32>
    %cst_117 = arith.constant dense<0.000000e+00> : vector<16x32xf32>
    %263 = tpu.matmul %260, %262, %cst_117 {dimension_numbers = #tpu.dot_dimension_numbers<[1], [0], [0], [1], [0, 0, 1, 1], [], []>} : vector<16x8xf32>, vector<8x32xf32>, vector<16x32xf32> -> vector<16x32xf32>
    %264 = arith.addf %243, %263 : vector<16x32xf32>
    %c1_118 = arith.constant 1 : index
    %c0_119 = arith.constant 0 : index
    %c0_120 = arith.constant 0 : index
    %265 = vector.load %arg5[%c1_118, %c0_119, %c0_120] : memref<2x1x32xf32, #tpu.memory_space<vmem>>, vector<1x1x32xf32>
    %266 = vector.shape_cast %265 : vector<1x1x32xf32> to vector<1x32xf32>
    %267 = vector.broadcast %266 : vector<1x32xf32> to vector<16x32xf32>
    %268 = arith.addf %264, %267 : vector<16x32xf32>
    %269 = arith.addf %171, %268 : vector<16x32xf32>
    %c1_121 = arith.constant 1 : index
    %c0_122 = arith.constant 0 : index
    %c0_123 = arith.constant 0 : index
    %270 = vector.load %arg6[%c1_121, %c0_122, %c0_123] : memref<2x1x32xf32, #tpu.memory_space<vmem>>, vector<1x1x32xf32>
    %271 = vector.shape_cast %270 : vector<1x1x32xf32> to vector<1x32xf32>
    %c1_124 = arith.constant 1 : index
    %c0_125 = arith.constant 0 : index
    %c0_126 = arith.constant 0 : index
    %272 = vector.load %arg7[%c1_124, %c0_125, %c0_126] : memref<2x1x32xf32, #tpu.memory_space<vmem>>, vector<1x1x32xf32>
    %273 = vector.shape_cast %272 : vector<1x1x32xf32> to vector<1x32xf32>
    %cst_127 = arith.constant dense<0.000000e+00> : vector<16xf32>
    %274 = vector.multi_reduction <add>, %269, %cst_127 [1] : vector<16x32xf32> to vector<16xf32>
    %275 = vector.shape_cast %274 : vector<16xf32> to vector<16x1xf32>
    %cst_128 = arith.constant 3.200000e+01 : f32
    %276 = vector.broadcast %cst_128 : f32 to vector<16x1xf32>
    %277 = arith.divf %275, %276 : vector<16x1xf32>
    %278 = vector.broadcast %277 : vector<16x1xf32> to vector<16x32xf32>
    %279 = arith.subf %269, %278 : vector<16x32xf32>
    %280 = arith.mulf %279, %279 : vector<16x32xf32>
    %cst_129 = arith.constant dense<0.000000e+00> : vector<16xf32>
    %281 = vector.multi_reduction <add>, %280, %cst_129 [1] : vector<16x32xf32> to vector<16xf32>
    %282 = vector.shape_cast %281 : vector<16xf32> to vector<16x1xf32>
    %cst_130 = arith.constant 3.200000e+01 : f32
    %283 = vector.broadcast %cst_130 : f32 to vector<16x1xf32>
    %284 = arith.divf %282, %283 : vector<16x1xf32>
    %285 = vector.broadcast %277 : vector<16x1xf32> to vector<16x32xf32>
    %286 = arith.subf %269, %285 : vector<16x32xf32>
    %cst_131 = arith.constant 9.99999974E-6 : f32
    %287 = vector.broadcast %cst_131 : f32 to vector<16x1xf32>
    %288 = arith.addf %284, %287 : vector<16x1xf32>
    %289 = math.rsqrt %288 : vector<16x1xf32>
    %290 = vector.broadcast %289 : vector<16x1xf32> to vector<16x32xf32>
    %291 = arith.mulf %286, %290 : vector<16x32xf32>
    %292 = vector.broadcast %271 : vector<1x32xf32> to vector<16x32xf32>
    %293 = arith.mulf %291, %292 : vector<16x32xf32>
    %294 = vector.broadcast %273 : vector<1x32xf32> to vector<16x32xf32>
    %295 = arith.addf %293, %294 : vector<16x32xf32>
    %c1_132 = arith.constant 1 : index
    %c0_133 = arith.constant 0 : index
    %c0_134 = arith.constant 0 : index
    %296 = vector.load %arg10[%c1_132, %c0_133, %c0_134] : memref<2x32x512xf32, #tpu.memory_space<vmem>>, vector<1x32x512xf32>
    %297 = vector.shape_cast %296 : vector<1x32x512xf32> to vector<32x512xf32>
    %cst_135 = arith.constant dense<0.000000e+00> : vector<16x512xf32>
    %298 = tpu.matmul %295, %297, %cst_135 {dimension_numbers = #tpu.dot_dimension_numbers<[1], [0], [0], [1], [0, 0, 1, 1], [], []>} : vector<16x32xf32>, vector<32x512xf32>, vector<16x512xf32> -> vector<16x512xf32>
    %c1_136 = arith.constant 1 : index
    %c0_137 = arith.constant 0 : index
    %c0_138 = arith.constant 0 : index
    %299 = vector.load %arg11[%c1_136, %c0_137, %c0_138] : memref<2x1x512xf32, #tpu.memory_space<vmem>>, vector<1x1x512xf32>
    %300 = vector.shape_cast %299 : vector<1x1x512xf32> to vector<1x512xf32>
    %301 = vector.broadcast %300 : vector<1x512xf32> to vector<16x512xf32>
    %302 = arith.addf %298, %301 : vector<16x512xf32>
    %cst_139 = arith.constant 0.000000e+00 : f32
    %303 = vector.broadcast %cst_139 : f32 to vector<16x512xf32>
    %304 = arith.maximumf %302, %303 : vector<16x512xf32>
    %c1_140 = arith.constant 1 : index
    %c0_141 = arith.constant 0 : index
    %c0_142 = arith.constant 0 : index
    %305 = vector.load %arg12[%c1_140, %c0_141, %c0_142] : memref<2x512x32xf32, #tpu.memory_space<vmem>>, vector<1x512x32xf32>
    %306 = vector.shape_cast %305 : vector<1x512x32xf32> to vector<512x32xf32>
    %cst_143 = arith.constant dense<0.000000e+00> : vector<16x32xf32>
    %307 = tpu.matmul %304, %306, %cst_143 {dimension_numbers = #tpu.dot_dimension_numbers<[1], [0], [0], [1], [0, 0, 1, 1], [], []>} : vector<16x512xf32>, vector<512x32xf32>, vector<16x32xf32> -> vector<16x32xf32>
    %c1_144 = arith.constant 1 : index
    %c0_145 = arith.constant 0 : index
    %c0_146 = arith.constant 0 : index
    %308 = vector.load %arg13[%c1_144, %c0_145, %c0_146] : memref<2x1x32xf32, #tpu.memory_space<vmem>>, vector<1x1x32xf32>
    %309 = vector.shape_cast %308 : vector<1x1x32xf32> to vector<1x32xf32>
    %310 = vector.broadcast %309 : vector<1x32xf32> to vector<16x32xf32>
    %311 = arith.addf %307, %310 : vector<16x32xf32>
    %312 = arith.addf %295, %311 : vector<16x32xf32>
    %c1_147 = arith.constant 1 : index
    %c0_148 = arith.constant 0 : index
    %c0_149 = arith.constant 0 : index
    %313 = vector.load %arg8[%c1_147, %c0_148, %c0_149] : memref<2x1x32xf32, #tpu.memory_space<vmem>>, vector<1x1x32xf32>
    %314 = vector.shape_cast %313 : vector<1x1x32xf32> to vector<1x32xf32>
    %c1_150 = arith.constant 1 : index
    %c0_151 = arith.constant 0 : index
    %c0_152 = arith.constant 0 : index
    %315 = vector.load %arg9[%c1_150, %c0_151, %c0_152] : memref<2x1x32xf32, #tpu.memory_space<vmem>>, vector<1x1x32xf32>
    %316 = vector.shape_cast %315 : vector<1x1x32xf32> to vector<1x32xf32>
    %cst_153 = arith.constant dense<0.000000e+00> : vector<16xf32>
    %317 = vector.multi_reduction <add>, %312, %cst_153 [1] : vector<16x32xf32> to vector<16xf32>
    %318 = vector.shape_cast %317 : vector<16xf32> to vector<16x1xf32>
    %cst_154 = arith.constant 3.200000e+01 : f32
    %319 = vector.broadcast %cst_154 : f32 to vector<16x1xf32>
    %320 = arith.divf %318, %319 : vector<16x1xf32>
    %321 = vector.broadcast %320 : vector<16x1xf32> to vector<16x32xf32>
    %322 = arith.subf %312, %321 : vector<16x32xf32>
    %323 = arith.mulf %322, %322 : vector<16x32xf32>
    %cst_155 = arith.constant dense<0.000000e+00> : vector<16xf32>
    %324 = vector.multi_reduction <add>, %323, %cst_155 [1] : vector<16x32xf32> to vector<16xf32>
    %325 = vector.shape_cast %324 : vector<16xf32> to vector<16x1xf32>
    %cst_156 = arith.constant 3.200000e+01 : f32
    %326 = vector.broadcast %cst_156 : f32 to vector<16x1xf32>
    %327 = arith.divf %325, %326 : vector<16x1xf32>
    %328 = vector.broadcast %320 : vector<16x1xf32> to vector<16x32xf32>
    %329 = arith.subf %312, %328 : vector<16x32xf32>
    %cst_157 = arith.constant 9.99999974E-6 : f32
    %330 = vector.broadcast %cst_157 : f32 to vector<16x1xf32>
    %331 = arith.addf %327, %330 : vector<16x1xf32>
    %332 = math.rsqrt %331 : vector<16x1xf32>
    %333 = vector.broadcast %332 : vector<16x1xf32> to vector<16x32xf32>
    %334 = arith.mulf %329, %333 : vector<16x32xf32>
    %335 = vector.broadcast %314 : vector<1x32xf32> to vector<16x32xf32>
    %336 = arith.mulf %334, %335 : vector<16x32xf32>
    %337 = vector.broadcast %316 : vector<1x32xf32> to vector<16x32xf32>
    %338 = arith.addf %336, %337 : vector<16x32xf32>
    %c0_158 = arith.constant 0 : index
    %c0_159 = arith.constant 0 : index
    %339 = vector.load %arg14[%c0_158, %c0_159] : memref<16x32xf32, #tpu.memory_space<vmem>>, vector<16x32xf32>
    tpu.vector_store %arg14[%c0_158, %c0_159], %338 {strides = array<i32>} : memref<16x32xf32, #tpu.memory_space<vmem>>, vector<16x32xf32>,
    return
  }
}

</mosaic_0001>

<llo_original>
// kernel: tpu_custom_call.1
$region0: #{tpu_custom_call.1}
  #allocation0 [shape = 'u32[]', space=smem, size = 0x4, offset = 0x4, fixed_abs, tag = 'smem constant byte address 0x4 - core index']
  #allocation1 [shape = 'u32[144,128]{1,0:T(1,128)}', space=vmem, size = 0x12000, scoped, tag = 'internal scratch']
  %s0 = inlined_call_operand.vmem [shape: f32[16,32], index: 0, kind: input, shape index: {}]
  %s1 = inlined_call_operand.vmem [shape: f32[2,8], index: 1, kind: input, shape index: {}]
  %s2 = inlined_call_operand.vmem [shape: f32[2,32,96], index: 2, kind: input, shape index: {}]
  %s3 = inlined_call_operand.vmem [shape: f32[2,1,96], index: 3, kind: input, shape index: {}]
  %s4 = inlined_call_operand.vmem [shape: f32[2,32,32], index: 4, kind: input, shape index: {}]
  %s5 = inlined_call_operand.vmem [shape: f32[2,1,32], index: 5, kind: input, shape index: {}]
  %s6 = inlined_call_operand.vmem [shape: f32[2,1,32], index: 6, kind: input, shape index: {}]
  %s7 = inlined_call_operand.vmem [shape: f32[2,1,32], index: 7, kind: input, shape index: {}]
  %s8 = inlined_call_operand.vmem [shape: f32[2,1,32], index: 8, kind: input, shape index: {}]
  %s9 = inlined_call_operand.vmem [shape: f32[2,1,32], index: 9, kind: input, shape index: {}]
  %s10 = inlined_call_operand.vmem [shape: f32[2,32,512], index: 10, kind: input, shape index: {}]
  %s11 = inlined_call_operand.vmem [shape: f32[2,1,512], index: 11, kind: input, shape index: {}]
  %s12 = inlined_call_operand.vmem [shape: f32[2,512,32], index: 12, kind: input, shape index: {}]
  %s13 = inlined_call_operand.vmem [shape: f32[2,1,32], index: 13, kind: input, shape index: {}]
  %s14 = inlined_call_operand.hbm [shape: f32[16,32], index: 14, kind: output, shape index: {}]
  %s15 = sld [smem:[#allocation0]]
  $region66: #{tpu_custom_call.1} parent=0
    _
  %s17 = ssub.s32 1, %s15
  %s18 = scalar_select 0, %s17, %s15
  $region1: #{tpu_custom_call.1} parent=0
    #allocation2 [shape = 'u8[8192]{0}', space=vmem, size = 0x2000, scoped, tag = 'output window, operand 0, single buffered']
    #allocation3 [shape = 's32[1]{0}', space=sflag, size = 0x4, scoped, tag = 'scoped memory for tpu_custom_call.1']
    %19 = vsyncpa [#allocation3], 0
    // Predicated region
    $region2: #{tpu_custom_call.1} parent=1 // pred_check
      _
    $region3: #{tpu_custom_call.1} parent=1 // pred_check_branch
      %21 = sbr.rel (0) target = $region5
    $region4: #{tpu_custom_call.1} parent=1 // pred_region
      _
    $region5: #{tpu_custom_call.1} parent=1 // pred_fallthru
      _
    // Predicated region
    $region6: #{tpu_custom_call.1} parent=1 // pred_check
      _
    $region7: #{tpu_custom_call.1} parent=1 // pred_check_branch
      %23 = sbr.rel (0) target = $region9
    $region8: #{tpu_custom_call.1} parent=1 // pred_region
      _
    $region9: #{tpu_custom_call.1} parent=1 // pred_fallthru
      _
    // Predicated region
    $region10: #{tpu_custom_call.1} parent=1 // pred_check
      _
    $region11: #{tpu_custom_call.1} parent=1 // pred_check_branch
      %25 = sbr.rel (0) target = $region13
    $region12: #{tpu_custom_call.1} parent=1 // pred_region
      _
    $region13: #{tpu_custom_call.1} parent=1 // pred_fallthru
      _
    // Predicated region
    $region14: #{tpu_custom_call.1} parent=1 // pred_check
      _
    $region15: #{tpu_custom_call.1} parent=1 // pred_check_branch
      %27 = sbr.rel (0) target = $region17
    $region16: #{tpu_custom_call.1} parent=1 // pred_region
      _
    $region17: #{tpu_custom_call.1} parent=1 // pred_fallthru
      _
    // Predicated region
    $region18: #{tpu_custom_call.1} parent=1 // pred_check
      _
    $region19: #{tpu_custom_call.1} parent=1 // pred_check_branch
      %29 = sbr.rel (0) target = $region21
    $region20: #{tpu_custom_call.1} parent=1 // pred_region
      _
    $region21: #{tpu_custom_call.1} parent=1 // pred_fallthru
      _
    // Predicated region
    $region22: #{tpu_custom_call.1} parent=1 // pred_check
      _
    $region23: #{tpu_custom_call.1} parent=1 // pred_check_branch
      %31 = sbr.rel (0) target = $region25
    $region24: #{tpu_custom_call.1} parent=1 // pred_region
      _
    $region25: #{tpu_custom_call.1} parent=1 // pred_fallthru
      _
    // Predicated region
    $region26: #{tpu_custom_call.1} parent=1 // pred_check
      _
    $region27: #{tpu_custom_call.1} parent=1 // pred_check_branch
      %33 = sbr.rel (0) target = $region29
    $region28: #{tpu_custom_call.1} parent=1 // pred_region
      _
    $region29: #{tpu_custom_call.1} parent=1 // pred_fallthru
      _
    // Predicated region
    $region30: #{tpu_custom_call.1} parent=1 // pred_check
      _
    $region31: #{tpu_custom_call.1} parent=1 // pred_check_branch
      %35 = sbr.rel (0) target = $region33
    $region32: #{tpu_custom_call.1} parent=1 // pred_region
      _
    $region33: #{tpu_custom_call.1} parent=1 // pred_fallthru
      _
    // Predicated region
    $region34: #{tpu_custom_call.1} parent=1 // pred_check
      _
    $region35: #{tpu_custom_call.1} parent=1 // pred_check_branch
      %37 = sbr.rel (0) target = $region37
    $region36: #{tpu_custom_call.1} parent=1 // pred_region
      _
    $region37: #{tpu_custom_call.1} parent=1 // pred_fallthru
      _
    // Predicated region
    $region38: #{tpu_custom_call.1} parent=1 // pred_check
      _
    $region39: #{tpu_custom_call.1} parent=1 // pred_check_branch
      %39 = sbr.rel (0) target = $region41
    $region40: #{tpu_custom_call.1} parent=1 // pred_region
      _
    $region41: #{tpu_custom_call.1} parent=1 // pred_fallthru
      _
    // Predicated region
    $region42: #{tpu_custom_call.1} parent=1 // pred_check
      _
    $region43: #{tpu_custom_call.1} parent=1 // pred_check_branch
      %41 = sbr.rel (0) target = $region45
    $region44: #{tpu_custom_call.1} parent=1 // pred_region
      _
    $region45: #{tpu_custom_call.1} parent=1 // pred_fallthru
      _
    // Predicated region
    $region46: #{tpu_custom_call.1} parent=1 // pred_check
      _
    $region47: #{tpu_custom_call.1} parent=1 // pred_check_branch
      %43 = sbr.rel (0) target = $region49
    $region48: #{tpu_custom_call.1} parent=1 // pred_region
      _
    $region49: #{tpu_custom_call.1} parent=1 // pred_fallthru
      _
    // Predicated region
    $region50: #{tpu_custom_call.1} parent=1 // pred_check
      _
    $region51: #{tpu_custom_call.1} parent=1 // pred_check_branch
      %45 = sbr.rel (0) target = $region53
    $region52: #{tpu_custom_call.1} parent=1 // pred_region
      _
    $region53: #{tpu_custom_call.1} parent=1 // pred_fallthru
      _
    // Predicated region
    $region54: #{tpu_custom_call.1} parent=1 // pred_check
      _
    $region55: #{tpu_custom_call.1} parent=1 // pred_check_branch
      %47 = sbr.rel (0) target = $region57
    $region56: #{tpu_custom_call.1} parent=1 // pred_region
      _
    $region57: #{tpu_custom_call.1} parent=1 // pred_fallthru
      _
    %v48 = vld [vmem:[%s0] sm:$0xff]
    %v49 = vld [vmem:[%s0 + $0x8] sm:$0xff]
    %v50 = vld [vmem:[%s1] sm:$0x3]
    %v53 = vunpack.c.l.s4 1966171168
    %v54 = vunpack.c.0.s8 %v53
    %v55 = vlaneseq
    %v56 = vshrl.u32 %v55, 7
    %v57 = vsub.s32 %v54, %v56
    %v58 = vrot.slane %v50, %v57
    %v59 = vcombine.high %v58, %v58
    %v61 = vunpack.c.l.s4 1966171168
    %v62 = vunpack.c.0.s8 %v61
    %v63 = vlaneseq
    %v64 = vshrl.u32 %v63, 7
    %v65 = vsub.s32 %v62, %v64
    %v66 = vrot.slane %v58, %v65
    %v68 = vunpack.c.l.s4 1966171168
    %v69 = vunpack.c.0.s8 %v68
    %v70 = vlaneseq
    %v71 = vshrl.u32 %v70, 7
    %v72 = vsub.s32 %v69, %v71
    %v73 = vrot.slane %v59, %v72
    %v74 = vlaneseq
    %v75 = vshrl.u32 %v74, 7
    %v76 = vsub.s32 0, %v75
    %v77 = vrot.slane %v66, %v76
    %v78 = vlaneseq
    %v79 = vshrl.u32 %v78, 7
    %v80 = vsub.s32 0, %v79
    %v81 = vrot.slane %v73, %v80
    %v84 = vld [vmem:[%s2] sm:$0xff]
    %v85 = vld [vmem:[%s2 + $0x8] sm:$0xff]
    %v86 = vld [vmem:[%s2 + $0x10] sm:$0xff]
    %v87 = vld [vmem:[%s2 + $0x18] sm:$0xff]
    %v88 = vld [vmem:[%s3] sm:$0x1]
    %v90 = vlaneseq
    %v91 = vshrl.u32 %v90, 7
    %v92 = vsub.s32 0, %v91
    %v93 = vrot.slane %v88, %v92
    %vm95 = vcmask 261120
    %v97 = vsel %vm95, %v48, 0
    %v100 = vsel %vm95, %v49, 0
    %102 = vmatprep.subr.mxu0 0.0
    %103 = vmatpush1.msra.mxu0 0.0
    %104 = vmatprep.subr.mxu0 0.0
    %105 = vmatpush1.msra.mxu0 0.0
    %106 = vmatprep.subr.mxu0 0.0
    %107 = vmatpush1.msra.mxu0 0.0
    %108 = vmatprep.subr.mxu0 0.0
    %109 = vmatpush1.msra.mxu0 0.0
    %110 = vmatprep.subr.mxu0 0.0
    %111 = vmatpush1.msra.mxu0 0.0
    %112 = vmatprep.subr.mxu0 0.0
    %113 = vmatpush1.msra.mxu0 0.0
    %114 = vmatprep.subr.mxu0 0.0
    %115 = vmatpush1.msra.mxu0 0.0
    %116 = vmatprep.subr.mxu0 0.0
    %117 = vmatpush1.msra.mxu0 0.0
    %118 = vmatprep.subr.mxu0 0.0
    %119 = vmatpush1.msra.mxu0 0.0
    %120 = vmatprep.subr.mxu0 0.0
    %121 = vmatpush1.msra.mxu0 0.0
    %122 = vmatprep.subr.mxu0 0.0
    %123 = vmatpush1.msra.mxu0 0.0
    %124 = vmatprep.subr.mxu0 0.0
    %125 = vmatpush1.msra.mxu0 0.0
    %126 = vmatprep.subr.mxu0 0.0
    %127 = vmatpush1.msra.mxu0 %v87
    %128 = vmatprep.subr.mxu0 0.0
    %129 = vmatpush1.msra.mxu0 %v86
    %130 = vmatprep.subr.mxu0 0.0
    %131 = vmatpush1.msra.mxu0 %v85
    %132 = vmatprep.subr.mxu0 0.0
    %133 = vmatpush1.msra.mxu0 %v84
    %134 = vmatprep.subr.mxu0 0.0
    %135 = vmatpush2.msra.mxu0 0.0
    %136 = vmatprep.subr.mxu0 0.0
    %137 = vmatpush2.msra.mxu0 0.0
    %138 = vmatprep.subr.mxu0 0.0
    %139 = vmatpush2.msra.mxu0 0.0
    %140 = vmatprep.subr.mxu0 0.0
    %141 = vmatpush2.msra.mxu0 0.0
    %142 = vmatprep.subr.mxu0 0.0
    %143 = vmatpush2.msra.mxu0 0.0
    %144 = vmatprep.subr.mxu0 0.0
    %145 = vmatpush2.msra.mxu0 0.0
    %146 = vmatprep.subr.mxu0 0.0
    %147 = vmatpush2.msra.mxu0 0.0
    %148 = vmatprep.subr.mxu0 0.0
    %149 = vmatpush2.msra.mxu0 0.0
    %150 = vmatprep.subr.mxu0 0.0
    %151 = vmatpush2.msra.mxu0 0.0
    %152 = vmatprep.subr.mxu0 0.0
    %153 = vmatpush2.msra.mxu0 0.0
    %154 = vmatprep.subr.mxu0 0.0
    %155 = vmatpush2.msra.mxu0 0.0
    %156 = vmatprep.subr.mxu0 0.0
    %157 = vmatpush2.msra.mxu0 0.0
    %158 = vmatprep.subr.mxu0 0.0
    %159 = vmatpush2.msra.mxu0 0.0
    %160 = vmatprep.subr.mxu0 0.0
    %161 = vmatpush2.msra.mxu0 0.0
    %162 = vmatprep.subr.mxu0 0.0
    %163 = vmatpush2.msra.mxu0 0.0
    %164 = vmatprep.subr.mxu0 0.0
    %165 = vmatpush2.msra.mxu0 0.0
    %166 = vmatprep.mubr.f32.mxu0 0.0
    %167 = vmatmul.mubr.f32.gmra.mxu0 %v97
    %v168 = vpop.f32.mrf.mxu0
    %v169 = vadd.f32 %v93, %v168
    %v170 = vpop.f32.mrf.mxu0
    %171 = vmatprep.mubr.f32.mxu0 0.0
    %172 = vmatmul.mubr.f32.gmra.mxu0 %v100
    %v173 = vpop.f32.mrf.mxu0
    %v174 = vadd.f32 %v93, %v173
    %v175 = vpop.f32.mrf.mxu0
    %176 = vdwg.mxu0
    %178 = vrot.lane.b32.xlu0 %v169, 96
    %v179 = vpop.permute.xlu0 %178
    %vm180 = vcmask 64512
    %v181 = vsel %vm180, %v169, 0
    %v183 = vsel %vm180, %v179, 0
    %185 = vmatprep.subr.mxu0 0.0
    %186 = vmatpush1.xpose.msra.mxu0 0.0
    %187 = vmatprep.subr.mxu0 0.0
    %188 = vmatpush1.xpose.msra.mxu0 0.0
    %189 = vmatprep.subr.mxu0 0.0
    %190 = vmatpush1.xpose.msra.mxu0 0.0
    %191 = vmatprep.subr.mxu0 0.0
    %192 = vmatpush1.xpose.msra.mxu0 0.0
    %193 = vmatprep.subr.mxu0 0.0
    %194 = vmatpush1.xpose.msra.mxu0 0.0
    %195 = vmatprep.subr.mxu0 0.0
    %196 = vmatpush1.xpose.msra.mxu0 0.0
    %197 = vmatprep.subr.mxu0 0.0
    %198 = vmatpush1.xpose.msra.mxu0 0.0
    %199 = vmatprep.subr.mxu0 0.0
    %200 = vmatpush1.xpose.msra.mxu0 0.0
    %201 = vmatprep.subr.mxu0 0.0
    %202 = vmatpush1.xpose.msra.mxu0 0.0
    %203 = vmatprep.subr.mxu0 0.0
    %204 = vmatpush1.xpose.msra.mxu0 0.0
    %205 = vmatprep.subr.mxu0 0.0
    %206 = vmatpush1.xpose.msra.mxu0 0.0
    %207 = vmatprep.subr.mxu0 0.0
    %208 = vmatpush1.xpose.msra.mxu0 0.0
    %209 = vmatprep.subr.mxu0 0.0
    %210 = vmatpush1.xpose.msra.mxu0 0.0
    %211 = vmatprep.subr.mxu0 0.0
    %212 = vmatpush1.xpose.msra.mxu0 0.0
    %213 = vmatprep.subr.mxu0 0.0
    %214 = vmatpush1.xpose.msra.mxu0 0.0
    %215 = vmatprep.subr.mxu0 0.0
    %216 = vmatpush1.xpose.msra.mxu0 %v183
    %217 = vmatprep.subr.mxu0 0.0
    %218 = vmatpush2.xpose.msra.mxu0 0.0
    %219 = vmatprep.subr.mxu0 0.0
    %220 = vmatpush2.xpose.msra.mxu0 0.0
    %221 = vmatprep.subr.mxu0 0.0
    %222 = vmatpush2.xpose.msra.mxu0 0.0
    %223 = vmatprep.subr.mxu0 0.0
    %224 = vmatpush2.xpose.msra.mxu0 0.0
    %225 = vmatprep.subr.mxu0 0.0
    %226 = vmatpush2.xpose.msra.mxu0 0.0
    %227 = vmatprep.subr.mxu0 0.0
    %228 = vmatpush2.xpose.msra.mxu0 0.0
    %229 = vmatprep.subr.mxu0 0.0
    %230 = vmatpush2.xpose.msra.mxu0 0.0
    %231 = vmatprep.subr.mxu0 0.0
    %232 = vmatpush2.xpose.msra.mxu0 0.0
    %233 = vmatprep.subr.mxu0 0.0
    %234 = vmatpush2.xpose.msra.mxu0 0.0
    %235 = vmatprep.subr.mxu0 0.0
    %236 = vmatpush2.xpose.msra.mxu0 0.0
    %237 = vmatprep.subr.mxu0 0.0
    %238 = vmatpush2.xpose.msra.mxu0 0.0
    %239 = vmatprep.subr.mxu0 0.0
    %240 = vmatpush2.xpose.msra.mxu0 0.0
    %241 = vmatprep.subr.mxu0 0.0
    %242 = vmatpush2.xpose.msra.mxu0 0.0
    %243 = vmatprep.subr.mxu0 0.0
    %244 = vmatpush2.xpose.msra.mxu0 0.0
    %245 = vmatprep.subr.mxu0 0.0
    %246 = vmatpush2.xpose.msra.mxu0 0.0
    %247 = vmatprep.subr.mxu0 0.0
    %248 = vmatpush2.xpose.msra.mxu0 0.0
    %249 = vmatprep.mubr.f32.mxu0 0.0
    %250 = vmatmul.mubr.f32.gmra.mxu0 %v181
    %v251 = vpop.f32.mrf.mxu0
    %v252 = vadd.f32 %v77, %v251
    %v253 = vpop.f32.mrf.mxu0
    %254 = vdwg.mxu0
    %256 = vrot.lane.b32.xlu0 %v174, 96
    %v257 = vpop.permute.xlu0 %256
    %v258 = vsel %vm180, %v174, 0
    %v260 = vsel %vm180, %v257, 0
    %262 = vmatprep.subr.mxu0 0.0
    %263 = vmatpush1.xpose.msra.mxu0 0.0
    %264 = vmatprep.subr.mxu0 0.0
    %265 = vmatpush1.xpose.msra.mxu0 0.0
    %266 = vmatprep.subr.mxu0 0.0
    %267 = vmatpush1.xpose.msra.mxu0 0.0
    %268 = vmatprep.subr.mxu0 0.0
    %269 = vmatpush1.xpose.msra.mxu0 0.0
    %270 = vmatprep.subr.mxu0 0.0
    %271 = vmatpush1.xpose.msra.mxu0 0.0
    %272 = vmatprep.subr.mxu0 0.0
    %273 = vmatpush1.xpose.msra.mxu0 0.0
    %274 = vmatprep.subr.mxu0 0.0
    %275 = vmatpush1.xpose.msra.mxu0 0.0
    %276 = vmatprep.subr.mxu0 0.0
    %277 = vmatpush1.xpose.msra.mxu0 0.0
    %278 = vmatprep.subr.mxu0 0.0
    %279 = vmatpush1.xpose.msra.mxu0 0.0
    %280 = vmatprep.subr.mxu0 0.0
    %281 = vmatpush1.xpose.msra.mxu0 0.0
    %282 = vmatprep.subr.mxu0 0.0
    %283 = vmatpush1.xpose.msra.mxu0 0.0
    %284 = vmatprep.subr.mxu0 0.0
    %285 = vmatpush1.xpose.msra.mxu0 0.0
    %286 = vmatprep.subr.mxu0 0.0
    %287 = vmatpush1.xpose.msra.mxu0 0.0
    %288 = vmatprep.subr.mxu0 0.0
    %289 = vmatpush1.xpose.msra.mxu0 0.0
    %290 = vmatprep.subr.mxu0 0.0
    %291 = vmatpush1.xpose.msra.mxu0 0.0
    %292 = vmatprep.subr.mxu0 0.0
    %293 = vmatpush1.xpose.msra.mxu0 %v260
    %294 = vmatprep.subr.mxu0 0.0
    %295 = vmatpush2.xpose.msra.mxu0 0.0
    %296 = vmatprep.subr.mxu0 0.0
    %297 = vmatpush2.xpose.msra.mxu0 0.0
    %298 = vmatprep.subr.mxu0 0.0
    %299 = vmatpush2.xpose.msra.mxu0 0.0
    %300 = vmatprep.subr.mxu0 0.0
    %301 = vmatpush2.xpose.msra.mxu0 0.0
    %302 = vmatprep.subr.mxu0 0.0
    %303 = vmatpush2.xpose.msra.mxu0 0.0
    %304 = vmatprep.subr.mxu0 0.0
    %305 = vmatpush2.xpose.msra.mxu0 0.0
    %306 = vmatprep.subr.mxu0 0.0
    %307 = vmatpush2.xpose.msra.mxu0 0.0
    %308 = vmatprep.subr.mxu0 0.0
    %309 = vmatpush2.xpose.msra.mxu0 0.0
    %310 = vmatprep.subr.mxu0 0.0
    %311 = vmatpush2.xpose.msra.mxu0 0.0
    %312 = vmatprep.subr.mxu0 0.0
    %313 = vmatpush2.xpose.msra.mxu0 0.0
    %314 = vmatprep.subr.mxu0 0.0
    %315 = vmatpush2.xpose.msra.mxu0 0.0
    %316 = vmatprep.subr.mxu0 0.0
    %317 = vmatpush2.xpose.msra.mxu0 0.0
    %318 = vmatprep.subr.mxu0 0.0
    %319 = vmatpush2.xpose.msra.mxu0 0.0
    %320 = vmatprep.subr.mxu0 0.0
    %321 = vmatpush2.xpose.msra.mxu0 0.0
    %322 = vmatprep.subr.mxu0 0.0
    %323 = vmatpush2.xpose.msra.mxu0 0.0
    %324 = vmatprep.subr.mxu0 0.0
    %325 = vmatpush2.xpose.msra.mxu0 0.0
    %326 = vmatprep.mubr.f32.mxu0 0.0
    %327 = vmatmul.mubr.f32.gmra.mxu0 %v258
    %v328 = vpop.f32.mrf.mxu0
    %v329 = vadd.f32 %v81, %v328
    %v330 = vpop.f32.mrf.mxu0
    %331 = vdwg.mxu0
    %v332 = vsel %vm180, %v252, -inf
    %333 = vmax.xlane.f32.xlu0 %v332
    %v334 = vpop.xlane.xlu0 %333
    %v335 = vsel %vm180, %v329, -inf
    %336 = vmax.xlane.f32.xlu0 %v335
    %v337 = vpop.xlane.xlu0 %336
    %v338 = vsub.f32 %v252, %v334
    %v339 = vsub.f32 %v329, %v337
    %v340 = vmul.f32 %v338, 1.442695
    %v341 = vpow.pop %v340
    %v342 = vmul.f32 %v339, 1.442695
    %v343 = vpow.pop %v342
    %v344 = vsel %vm180, %v341, 0.0
    %345 = vadd.xlane.f32.xlu0 %v344
    %v346 = vpop.xlane.xlu0 %345
    %v347 = vsel %vm180, %v343, 0.0
    %348 = vadd.xlane.f32.xlu0 %v347
    %v349 = vpop.xlane.xlu0 %348
    %v350 = vrcp.pop %v346
    %v351 = vrcp.pop %v349
    %v352 = vmul.f32 %v341, %v350
    %v353 = vmul.f32 %v343, %v351
    %354 = vrot.lane.b32.xlu0 %v169, 64
    %v355 = vpop.permute.xlu0 %354
    %v358 = vsel %vm180, %v352, 0
    %360 = vmatprep.subr.mxu0 0.0
    %361 = vmatpush1.msra.mxu0 0.0
    %362 = vmatprep.subr.mxu0 0.0
    %363 = vmatpush1.msra.mxu0 0.0
    %364 = vmatprep.subr.mxu0 0.0
    %365 = vmatpush1.msra.mxu0 0.0
    %366 = vmatprep.subr.mxu0 0.0
    %367 = vmatpush1.msra.mxu0 0.0
    %368 = vmatprep.subr.mxu0 0.0
    %369 = vmatpush1.msra.mxu0 0.0
    %370 = vmatprep.subr.mxu0 0.0
    %371 = vmatpush1.msra.mxu0 0.0
    %372 = vmatprep.subr.mxu0 0.0
    %373 = vmatpush1.msra.mxu0 0.0
    %374 = vmatprep.subr.mxu0 0.0
    %375 = vmatpush1.msra.mxu0 0.0
    %376 = vmatprep.subr.mxu0 0.0
    %377 = vmatpush1.msra.mxu0 0.0
    %378 = vmatprep.subr.mxu0 0.0
    %379 = vmatpush1.msra.mxu0 0.0
    %380 = vmatprep.subr.mxu0 0.0
    %381 = vmatpush1.msra.mxu0 0.0
    %382 = vmatprep.subr.mxu0 0.0
    %383 = vmatpush1.msra.mxu0 0.0
    %384 = vmatprep.subr.mxu0 0.0
    %385 = vmatpush1.msra.mxu0 0.0
    %386 = vmatprep.subr.mxu0 0.0
    %387 = vmatpush1.msra.mxu0 0.0
    %388 = vmatprep.subr.mxu0 0.0
    %389 = vmatpush1.msra.mxu0 0.0
    %390 = vmatprep.subr.mxu0 0.0
    %391 = vmatpush1.msra.mxu0 %v355
    %392 = vmatprep.subr.mxu0 0.0
    %393 = vmatpush2.msra.mxu0 0.0
    %394 = vmatprep.subr.mxu0 0.0
    %395 = vmatpush2.msra.mxu0 0.0
    %396 = vmatprep.subr.mxu0 0.0
    %397 = vmatpush2.msra.mxu0 0.0
    %398 = vmatprep.subr.mxu0 0.0
    %399 = vmatpush2.msra.mxu0 0.0
    %400 = vmatprep.subr.mxu0 0.0
    %401 = vmatpush2.msra.mxu0 0.0
    %402 = vmatprep.subr.mxu0 0.0
    %403 = vmatpush2.msra.mxu0 0.0
    %404 = vmatprep.subr.mxu0 0.0
    %405 = vmatpush2.msra.mxu0 0.0
    %406 = vmatprep.subr.mxu0 0.0
    %407 = vmatpush2.msra.mxu0 0.0
    %408 = vmatprep.subr.mxu0 0.0
    %409 = vmatpush2.msra.mxu0 0.0
    %410 = vmatprep.subr.mxu0 0.0
    %411 = vmatpush2.msra.mxu0 0.0
    %412 = vmatprep.subr.mxu0 0.0
    %413 = vmatpush2.msra.mxu0 0.0
    %414 = vmatprep.subr.mxu0 0.0
    %415 = vmatpush2.msra.mxu0 0.0
    %416 = vmatprep.subr.mxu0 0.0
    %417 = vmatpush2.msra.mxu0 0.0
    %418 = vmatprep.subr.mxu0 0.0
    %419 = vmatpush2.msra.mxu0 0.0
    %420 = vmatprep.subr.mxu0 0.0
    %421 = vmatpush2.msra.mxu0 0.0
    %422 = vmatprep.subr.mxu0 0.0
    %423 = vmatpush2.msra.mxu0 0.0
    %424 = vmatprep.mubr.f32.mxu0 0.0
    %425 = vmatmul.mubr.f32.gmra.mxu0 %v358
    %v426 = vpop.f32.mrf.mxu0
    %v427 = vadd.f32 0.0, %v426
    %v428 = vpop.f32.mrf.mxu0
    %429 = vdwg.mxu0
    %430 = vrot.lane.b32.xlu0 %v174, 64
    %v431 = vpop.permute.xlu0 %430
    %v434 = vsel %vm180, %v353, 0
    %436 = vmatprep.subr.mxu0 0.0
    %437 = vmatpush1.msra.mxu0 0.0
    %438 = vmatprep.subr.mxu0 0.0
    %439 = vmatpush1.msra.mxu0 0.0
    %440 = vmatprep.subr.mxu0 0.0
    %441 = vmatpush1.msra.mxu0 0.0
    %442 = vmatprep.subr.mxu0 0.0
    %443 = vmatpush1.msra.mxu0 0.0
    %444 = vmatprep.subr.mxu0 0.0
    %445 = vmatpush1.msra.mxu0 0.0
    %446 = vmatprep.subr.mxu0 0.0
    %447 = vmatpush1.msra.mxu0 0.0
    %448 = vmatprep.subr.mxu0 0.0
    %449 = vmatpush1.msra.mxu0 0.0
    %450 = vmatprep.subr.mxu0 0.0
    %451 = vmatpush1.msra.mxu0 0.0
    %452 = vmatprep.subr.mxu0 0.0
    %453 = vmatpush1.msra.mxu0 0.0
    %454 = vmatprep.subr.mxu0 0.0
    %455 = vmatpush1.msra.mxu0 0.0
    %456 = vmatprep.subr.mxu0 0.0
    %457 = vmatpush1.msra.mxu0 0.0
    %458 = vmatprep.subr.mxu0 0.0
    %459 = vmatpush1.msra.mxu0 0.0
    %460 = vmatprep.subr.mxu0 0.0
    %461 = vmatpush1.msra.mxu0 0.0
    %462 = vmatprep.subr.mxu0 0.0
    %463 = vmatpush1.msra.mxu0 0.0
    %464 = vmatprep.subr.mxu0 0.0
    %465 = vmatpush1.msra.mxu0 0.0
    %466 = vmatprep.subr.mxu0 0.0
    %467 = vmatpush1.msra.mxu0 %v431
    %468 = vmatprep.subr.mxu0 0.0
    %469 = vmatpush2.msra.mxu0 0.0
    %470 = vmatprep.subr.mxu0 0.0
    %471 = vmatpush2.msra.mxu0 0.0
    %472 = vmatprep.subr.mxu0 0.0
    %473 = vmatpush2.msra.mxu0 0.0
    %474 = vmatprep.subr.mxu0 0.0
    %475 = vmatpush2.msra.mxu0 0.0
    %476 = vmatprep.subr.mxu0 0.0
    %477 = vmatpush2.msra.mxu0 0.0
    %478 = vmatprep.subr.mxu0 0.0
    %479 = vmatpush2.msra.mxu0 0.0
    %480 = vmatprep.subr.mxu0 0.0
    %481 = vmatpush2.msra.mxu0 0.0
    %482 = vmatprep.subr.mxu0 0.0
    %483 = vmatpush2.msra.mxu0 0.0
    %484 = vmatprep.subr.mxu0 0.0
    %485 = vmatpush2.msra.mxu0 0.0
    %486 = vmatprep.subr.mxu0 0.0
    %487 = vmatpush2.msra.mxu0 0.0
    %488 = vmatprep.subr.mxu0 0.0
    %489 = vmatpush2.msra.mxu0 0.0
    %490 = vmatprep.subr.mxu0 0.0
    %491 = vmatpush2.msra.mxu0 0.0
    %492 = vmatprep.subr.mxu0 0.0
    %493 = vmatpush2.msra.mxu0 0.0
    %494 = vmatprep.subr.mxu0 0.0
    %495 = vmatpush2.msra.mxu0 0.0
    %496 = vmatprep.subr.mxu0 0.0
    %497 = vmatpush2.msra.mxu0 0.0
    %498 = vmatprep.subr.mxu0 0.0
    %499 = vmatpush2.msra.mxu0 0.0
    %500 = vmatprep.mubr.f32.mxu0 0.0
    %501 = vmatmul.mubr.f32.gmra.mxu0 %v434
    %v502 = vpop.f32.mrf.mxu0
    %v503 = vadd.f32 0.0, %v502
    %v504 = vpop.f32.mrf.mxu0
    %505 = vdwg.mxu0
    %v506 = vld [vmem:[%s4] sm:$0xff]
    %507 = vrot.lane.b32.xlu0 %v169, 120
    %v508 = vpop.permute.xlu0 %507
    %509 = vrot.lane.b32.xlu0 %v169, 88
    %v510 = vpop.permute.xlu0 %509
    %v511 = vsel %vm180, %v508, 0
    %v513 = vsel %vm180, %v510, 0
    %515 = vmatprep.subr.mxu0 0.0
    %516 = vmatpush1.xpose.msra.mxu0 0.0
    %517 = vmatprep.subr.mxu0 0.0
    %518 = vmatpush1.xpose.msra.mxu0 0.0
    %519 = vmatprep.subr.mxu0 0.0
    %520 = vmatpush1.xpose.msra.mxu0 0.0
    %521 = vmatprep.subr.mxu0 0.0
    %522 = vmatpush1.xpose.msra.mxu0 0.0
    %523 = vmatprep.subr.mxu0 0.0
    %524 = vmatpush1.xpose.msra.mxu0 0.0
    %525 = vmatprep.subr.mxu0 0.0
    %526 = vmatpush1.xpose.msra.mxu0 0.0
    %527 = vmatprep.subr.mxu0 0.0
    %528 = vmatpush1.xpose.msra.mxu0 0.0
    %529 = vmatprep.subr.mxu0 0.0
    %530 = vmatpush1.xpose.msra.mxu0 0.0
    %531 = vmatprep.subr.mxu0 0.0
    %532 = vmatpush1.xpose.msra.mxu0 0.0
    %533 = vmatprep.subr.mxu0 0.0
    %534 = vmatpush1.xpose.msra.mxu0 0.0
    %535 = vmatprep.subr.mxu0 0.0
    %536 = vmatpush1.xpose.msra.mxu0 0.0
    %537 = vmatprep.subr.mxu0 0.0
    %538 = vmatpush1.xpose.msra.mxu0 0.0
    %539 = vmatprep.subr.mxu0 0.0
    %540 = vmatpush1.xpose.msra.mxu0 0.0
    %541 = vmatprep.subr.mxu0 0.0
    %542 = vmatpush1.xpose.msra.mxu0 0.0
    %543 = vmatprep.subr.mxu0 0.0
    %544 = vmatpush1.xpose.msra.mxu0 0.0
    %545 = vmatprep.subr.mxu0 0.0
    %546 = vmatpush1.xpose.msra.mxu0 %v513
    %547 = vmatprep.subr.mxu0 0.0
    %548 = vmatpush2.xpose.msra.mxu0 0.0
    %549 = vmatprep.subr.mxu0 0.0
    %550 = vmatpush2.xpose.msra.mxu0 0.0
    %551 = vmatprep.subr.mxu0 0.0
    %552 = vmatpush2.xpose.msra.mxu0 0.0
    %553 = vmatprep.subr.mxu0 0.0
    %554 = vmatpush2.xpose.msra.mxu0 0.0
    %555 = vmatprep.subr.mxu0 0.0
    %556 = vmatpush2.xpose.msra.mxu0 0.0
    %557 = vmatprep.subr.mxu0 0.0
    %558 = vmatpush2.xpose.msra.mxu0 0.0
    %559 = vmatprep.subr.mxu0 0.0
    %560 = vmatpush2.xpose.msra.mxu0 0.0
    %561 = vmatprep.subr.mxu0 0.0
    %562 = vmatpush2.xpose.msra.mxu0 0.0
    %563 = vmatprep.subr.mxu0 0.0
    %564 = vmatpush2.xpose.msra.mxu0 0.0
    %565 = vmatprep.subr.mxu0 0.0
    %566 = vmatpush2.xpose.msra.mxu0 0.0
    %567 = vmatprep.subr.mxu0 0.0
    %568 = vmatpush2.xpose.msra.mxu0 0.0
    %569 = vmatprep.subr.mxu0 0.0
    %570 = vmatpush2.xpose.msra.mxu0 0.0
    %571 = vmatprep.subr.mxu0 0.0
    %572 = vmatpush2.xpose.msra.mxu0 0.0
    %573 = vmatprep.subr.mxu0 0.0
    %574 = vmatpush2.xpose.msra.mxu0 0.0
    %575 = vmatprep.subr.mxu0 0.0
    %576 = vmatpush2.xpose.msra.mxu0 0.0
    %577 = vmatprep.subr.mxu0 0.0
    %578 = vmatpush2.xpose.msra.mxu0 0.0
    %579 = vmatprep.mubr.f32.mxu0 0.0
    %580 = vmatmul.mubr.f32.gmra.mxu0 %v511
    %v581 = vpop.f32.mrf.mxu0
    %v582 = vadd.f32 %v77, %v581
    %v583 = vpop.f32.mrf.mxu0
    %584 = vdwg.mxu0
    %585 = vrot.lane.b32.xlu0 %v174, 120
    %v586 = vpop.permute.xlu0 %585
    %587 = vrot.lane.b32.xlu0 %v174, 88
    %v588 = vpop.permute.xlu0 %587
    %v589 = vsel %vm180, %v586, 0
    %v591 = vsel %vm180, %v588, 0
    %593 = vmatprep.subr.mxu0 0.0
    %594 = vmatpush1.xpose.msra.mxu0 0.0
    %595 = vmatprep.subr.mxu0 0.0
    %596 = vmatpush1.xpose.msra.mxu0 0.0
    %597 = vmatprep.subr.mxu0 0.0
    %598 = vmatpush1.xpose.msra.mxu0 0.0
    %599 = vmatprep.subr.mxu0 0.0
    %600 = vmatpush1.xpose.msra.mxu0 0.0
    %601 = vmatprep.subr.mxu0 0.0
    %602 = vmatpush1.xpose.msra.mxu0 0.0
    %603 = vmatprep.subr.mxu0 0.0
    %604 = vmatpush1.xpose.msra.mxu0 0.0
    %605 = vmatprep.subr.mxu0 0.0
    %606 = vmatpush1.xpose.msra.mxu0 0.0
    %607 = vmatprep.subr.mxu0 0.0
    %608 = vmatpush1.xpose.msra.mxu0 0.0
    %609 = vmatprep.subr.mxu0 0.0
    %610 = vmatpush1.xpose.msra.mxu0 0.0
    %611 = vmatprep.subr.mxu0 0.0
    %612 = vmatpush1.xpose.msra.mxu0 0.0
    %613 = vmatprep.subr.mxu0 0.0
    %614 = vmatpush1.xpose.msra.mxu0 0.0
    %615 = vmatprep.subr.mxu0 0.0
    %616 = vmatpush1.xpose.msra.mxu0 0.0
    %617 = vmatprep.subr.mxu0 0.0
    %618 = vmatpush1.xpose.msra.mxu0 0.0
    %619 = vmatprep.subr.mxu0 0.0
    %620 = vmatpush1.xpose.msra.mxu0 0.0
    %621 = vmatprep.subr.mxu0 0.0
    %622 = vmatpush1.xpose.msra.mxu0 0.0
    %623 = vmatprep.subr.mxu0 0.0
    %624 = vmatpush1.xpose.msra.mxu0 %v591
    %625 = vmatprep.subr.mxu0 0.0
    %626 = vmatpush2.xpose.msra.mxu0 0.0
    %627 = vmatprep.subr.mxu0 0.0
    %628 = vmatpush2.xpose.msra.mxu0 0.0
    %629 = vmatprep.subr.mxu0 0.0
    %630 = vmatpush2.xpose.msra.mxu0 0.0
    %631 = vmatprep.subr.mxu0 0.0
    %632 = vmatpush2.xpose.msra.mxu0 0.0
    %633 = vmatprep.subr.mxu0 0.0
    %634 = vmatpush2.xpose.msra.mxu0 0.0
    %635 = vmatprep.subr.mxu0 0.0
    %636 = vmatpush2.xpose.msra.mxu0 0.0
    %637 = vmatprep.subr.mxu0 0.0
    %638 = vmatpush2.xpose.msra.mxu0 0.0
    %639 = vmatprep.subr.mxu0 0.0
    %640 = vmatpush2.xpose.msra.mxu0 0.0
    %641 = vmatprep.subr.mxu0 0.0
    %642 = vmatpush2.xpose.msra.mxu0 0.0
    %643 = vmatprep.subr.mxu0 0.0
    %644 = vmatpush2.xpose.msra.mxu0 0.0
    %645 = vmatprep.subr.mxu0 0.0
    %646 = vmatpush2.xpose.msra.mxu0 0.0
    %647 = vmatprep.subr.mxu0 0.0
    %648 = vmatpush2.xpose.msra.mxu0 0.0
    %649 = vmatprep.subr.mxu0 0.0
    %650 = vmatpush2.xpose.msra.mxu0 0.0
    %651 = vmatprep.subr.mxu0 0.0
    %652 = vmatpush2.xpose.msra.mxu0 0.0
    %653 = vmatprep.subr.mxu0 0.0
    %654 = vmatpush2.xpose.msra.mxu0 0.0
    %655 = vmatprep.subr.mxu0 0.0
    %656 = vmatpush2.xpose.msra.mxu0 0.0
    %657 = vmatprep.mubr.f32.mxu0 0.0
    %658 = vmatmul.mubr.f32.gmra.mxu0 %v589
    %v659 = vpop.f32.mrf.mxu0
    %v660 = vadd.f32 %v81, %v659
    %v661 = vpop.f32.mrf.mxu0
    %662 = vdwg.mxu0
    %v663 = vsel %vm180, %v582, -inf
    %664 = vmax.xlane.f32.xlu0 %v663
    %v665 = vpop.xlane.xlu0 %664
    %v666 = vsel %vm180, %v660, -inf
    %667 = vmax.xlane.f32.xlu0 %v666
    %v668 = vpop.xlane.xlu0 %667
    %v669 = vsub.f32 %v582, %v665
    %v670 = vsub.f32 %v660, %v668
    %v671 = vmul.f32 %v669, 1.442695
    %v672 = vpow.pop %v671
    %v673 = vmul.f32 %v670, 1.442695
    %v674 = vpow.pop %v673
    %v675 = vsel %vm180, %v672, 0.0
    %676 = vadd.xlane.f32.xlu0 %v675
    %v677 = vpop.xlane.xlu0 %676
    %v678 = vsel %vm180, %v674, 0.0
    %679 = vadd.xlane.f32.xlu0 %v678
    %v680 = vpop.xlane.xlu0 %679
    %v681 = vrcp.pop %v677
    %v682 = vrcp.pop %v680
    %v683 = vmul.f32 %v672, %v681
    %v684 = vmul.f32 %v674, %v682
    %685 = vrot.lane.b32.xlu0 %v169, 56
    %v686 = vpop.permute.xlu0 %685
    %v689 = vsel %vm180, %v683, 0
    %691 = vmatprep.subr.mxu0 0.0
    %692 = vmatpush1.msra.mxu0 0.0
    %693 = vmatprep.subr.mxu0 0.0
    %694 = vmatpush1.msra.mxu0 0.0
    %695 = vmatprep.subr.mxu0 0.0
    %696 = vmatpush1.msra.mxu0 0.0
    %697 = vmatprep.subr.mxu0 0.0
    %698 = vmatpush1.msra.mxu0 0.0
    %699 = vmatprep.subr.mxu0 0.0
    %700 = vmatpush1.msra.mxu0 0.0
    %701 = vmatprep.subr.mxu0 0.0
    %702 = vmatpush1.msra.mxu0 0.0
    %703 = vmatprep.subr.mxu0 0.0
    %704 = vmatpush1.msra.mxu0 0.0
    %705 = vmatprep.subr.mxu0 0.0
    %706 = vmatpush1.msra.mxu0 0.0
    %707 = vmatprep.subr.mxu0 0.0
    %708 = vmatpush1.msra.mxu0 0.0
    %709 = vmatprep.subr.mxu0 0.0
    %710 = vmatpush1.msra.mxu0 0.0
    %711 = vmatprep.subr.mxu0 0.0
    %712 = vmatpush1.msra.mxu0 0.0
    %713 = vmatprep.subr.mxu0 0.0
    %714 = vmatpush1.msra.mxu0 0.0
    %715 = vmatprep.subr.mxu0 0.0
    %716 = vmatpush1.msra.mxu0 0.0
    %717 = vmatprep.subr.mxu0 0.0
    %718 = vmatpush1.msra.mxu0 0.0
    %719 = vmatprep.subr.mxu0 0.0
    %720 = vmatpush1.msra.mxu0 0.0
    %721 = vmatprep.subr.mxu0 0.0
    %722 = vmatpush1.msra.mxu0 %v686
    %723 = vmatprep.subr.mxu0 0.0
    %724 = vmatpush2.msra.mxu0 0.0
    %725 = vmatprep.subr.mxu0 0.0
    %726 = vmatpush2.msra.mxu0 0.0
    %727 = vmatprep.subr.mxu0 0.0
    %728 = vmatpush2.msra.mxu0 0.0
    %729 = vmatprep.subr.mxu0 0.0
    %730 = vmatpush2.msra.mxu0 0.0
    %731 = vmatprep.subr.mxu0 0.0
    %732 = vmatpush2.msra.mxu0 0.0
    %733 = vmatprep.subr.mxu0 0.0
    %734 = vmatpush2.msra.mxu0 0.0
    %735 = vmatprep.subr.mxu0 0.0
    %736 = vmatpush2.msra.mxu0 0.0
    %737 = vmatprep.subr.mxu0 0.0
    %738 = vmatpush2.msra.mxu0 0.0
    %739 = vmatprep.subr.mxu0 0.0
    %740 = vmatpush2.msra.mxu0 0.0
    %741 = vmatprep.subr.mxu0 0.0
    %742 = vmatpush2.msra.mxu0 0.0
    %743 = vmatprep.subr.mxu0 0.0
    %744 = vmatpush2.msra.mxu0 0.0
    %745 = vmatprep.subr.mxu0 0.0
    %746 = vmatpush2.msra.mxu0 0.0
    %747 = vmatprep.subr.mxu0 0.0
    %748 = vmatpush2.msra.mxu0 0.0
    %749 = vmatprep.subr.mxu0 0.0
    %750 = vmatpush2.msra.mxu0 0.0
    %751 = vmatprep.subr.mxu0 0.0
    %752 = vmatpush2.msra.mxu0 0.0
    %753 = vmatprep.subr.mxu0 0.0
    %754 = vmatpush2.msra.mxu0 0.0
    %755 = vmatprep.mubr.f32.mxu0 0.0
    %756 = vmatmul.mubr.f32.gmra.mxu0 %v689
    %v757 = vpop.f32.mrf.mxu0
    %v758 = vadd.f32 0.0, %v757
    %v759 = vpop.f32.mrf.mxu0
    %760 = vdwg.mxu0
    %761 = vrot.lane.b32.xlu0 %v174, 56
    %v762 = vpop.permute.xlu0 %761
    %v765 = vsel %vm180, %v684, 0
    %767 = vmatprep.subr.mxu0 0.0
    %768 = vmatpush1.msra.mxu0 0.0
    %769 = vmatprep.subr.mxu0 0.0
    %770 = vmatpush1.msra.mxu0 0.0
    %771 = vmatprep.subr.mxu0 0.0
    %772 = vmatpush1.msra.mxu0 0.0
    %773 = vmatprep.subr.mxu0 0.0
    %774 = vmatpush1.msra.mxu0 0.0
    %775 = vmatprep.subr.mxu0 0.0
    %776 = vmatpush1.msra.mxu0 0.0
    %777 = vmatprep.subr.mxu0 0.0
    %778 = vmatpush1.msra.mxu0 0.0
    %779 = vmatprep.subr.mxu0 0.0
    %780 = vmatpush1.msra.mxu0 0.0
    %781 = vmatprep.subr.mxu0 0.0
    %782 = vmatpush1.msra.mxu0 0.0
    %783 = vmatprep.subr.mxu0 0.0
    %784 = vmatpush1.msra.mxu0 0.0
    %785 = vmatprep.subr.mxu0 0.0
    %786 = vmatpush1.msra.mxu0 0.0
    %787 = vmatprep.subr.mxu0 0.0
    %788 = vmatpush1.msra.mxu0 0.0
    %789 = vmatprep.subr.mxu0 0.0
    %790 = vmatpush1.msra.mxu0 0.0
    %791 = vmatprep.subr.mxu0 0.0
    %792 = vmatpush1.msra.mxu0 0.0
    %793 = vmatprep.subr.mxu0 0.0
    %794 = vmatpush1.msra.mxu0 0.0
    %795 = vmatprep.subr.mxu0 0.0
    %796 = vmatpush1.msra.mxu0 0.0
    %797 = vmatprep.subr.mxu0 0.0
    %798 = vmatpush1.msra.mxu0 %v762
    %799 = vmatprep.subr.mxu0 0.0
    %800 = vmatpush2.msra.mxu0 0.0
    %801 = vmatprep.subr.mxu0 0.0
    %802 = vmatpush2.msra.mxu0 0.0
    %803 = vmatprep.subr.mxu0 0.0
    %804 = vmatpush2.msra.mxu0 0.0
    %805 = vmatprep.subr.mxu0 0.0
    %806 = vmatpush2.msra.mxu0 0.0
    %807 = vmatprep.subr.mxu0 0.0
    %808 = vmatpush2.msra.mxu0 0.0
    %809 = vmatprep.subr.mxu0 0.0
    %810 = vmatpush2.msra.mxu0 0.0
    %811 = vmatprep.subr.mxu0 0.0
    %812 = vmatpush2.msra.mxu0 0.0
    %813 = vmatprep.subr.mxu0 0.0
    %814 = vmatpush2.msra.mxu0 0.0
    %815 = vmatprep.subr.mxu0 0.0
    %816 = vmatpush2.msra.mxu0 0.0
    %817 = vmatprep.subr.mxu0 0.0
    %818 = vmatpush2.msra.mxu0 0.0
    %819 = vmatprep.subr.mxu0 0.0
    %820 = vmatpush2.msra.mxu0 0.0
    %821 = vmatprep.subr.mxu0 0.0
    %822 = vmatpush2.msra.mxu0 0.0
    %823 = vmatprep.subr.mxu0 0.0
    %824 = vmatpush2.msra.mxu0 0.0
    %825 = vmatprep.subr.mxu0 0.0
    %826 = vmatpush2.msra.mxu0 0.0
    %827 = vmatprep.subr.mxu0 0.0
    %828 = vmatpush2.msra.mxu0 0.0
    %829 = vmatprep.subr.mxu0 0.0
    %830 = vmatpush2.msra.mxu0 0.0
    %831 = vmatprep.mubr.f32.mxu0 0.0
    %832 = vmatmul.mubr.f32.gmra.mxu0 %v765
    %v833 = vpop.f32.mrf.mxu0
    %v834 = vadd.f32 0.0, %v833
    %v835 = vpop.f32.mrf.mxu0
    %836 = vdwg.mxu0
    %v837 = vld [vmem:[%s4 + $0x8] sm:$0xff]
    %v839 = vsel %vm180, %v758, 0
    %v842 = vsel %vm180, %v834, 0
    %844 = vmatprep.subr.mxu0 0.0
    %845 = vmatpush1.msra.mxu0 0.0
    %846 = vmatprep.subr.mxu0 0.0
    %847 = vmatpush1.msra.mxu0 0.0
    %848 = vmatprep.subr.mxu0 0.0
    %849 = vmatpush1.msra.mxu0 0.0
    %850 = vmatprep.subr.mxu0 0.0
    %851 = vmatpush1.msra.mxu0 0.0
    %852 = vmatprep.subr.mxu0 0.0
    %853 = vmatpush1.msra.mxu0 0.0
    %854 = vmatprep.subr.mxu0 0.0
    %855 = vmatpush1.msra.mxu0 0.0
    %856 = vmatprep.subr.mxu0 0.0
    %857 = vmatpush1.msra.mxu0 0.0
    %858 = vmatprep.subr.mxu0 0.0
    %859 = vmatpush1.msra.mxu0 0.0
    %860 = vmatprep.subr.mxu0 0.0
    %861 = vmatpush1.msra.mxu0 0.0
    %862 = vmatprep.subr.mxu0 0.0
    %863 = vmatpush1.msra.mxu0 0.0
    %864 = vmatprep.subr.mxu0 0.0
    %865 = vmatpush1.msra.mxu0 0.0
    %866 = vmatprep.subr.mxu0 0.0
    %867 = vmatpush1.msra.mxu0 0.0
    %868 = vmatprep.subr.mxu0 0.0
    %869 = vmatpush1.msra.mxu0 0.0
    %870 = vmatprep.subr.mxu0 0.0
    %871 = vmatpush1.msra.mxu0 0.0
    %872 = vmatprep.subr.mxu0 0.0
    %873 = vmatpush1.msra.mxu0 0.0
    %874 = vmatprep.subr.mxu0 0.0
    %875 = vmatpush1.msra.mxu0 %v837
    %876 = vmatprep.subr.mxu0 0.0
    %877 = vmatpush2.msra.mxu0 0.0
    %878 = vmatprep.subr.mxu0 0.0
    %879 = vmatpush2.msra.mxu0 0.0
    %880 = vmatprep.subr.mxu0 0.0
    %881 = vmatpush2.msra.mxu0 0.0
    %882 = vmatprep.subr.mxu0 0.0
    %883 = vmatpush2.msra.mxu0 0.0
    %884 = vmatprep.subr.mxu0 0.0
    %885 = vmatpush2.msra.mxu0 0.0
    %886 = vmatprep.subr.mxu0 0.0
    %887 = vmatpush2.msra.mxu0 0.0
    %888 = vmatprep.subr.mxu0 0.0
    %889 = vmatpush2.msra.mxu0 0.0
    %890 = vmatprep.subr.mxu0 0.0
    %891 = vmatpush2.msra.mxu0 0.0
    %892 = vmatprep.subr.mxu0 0.0
    %893 = vmatpush2.msra.mxu0 0.0
    %894 = vmatprep.subr.mxu0 0.0
    %895 = vmatpush2.msra.mxu0 0.0
    %896 = vmatprep.subr.mxu0 0.0
    %897 = vmatpush2.msra.mxu0 0.0
    %898 = vmatprep.subr.mxu0 0.0
    %899 = vmatpush2.msra.mxu0 0.0
    %900 = vmatprep.subr.mxu0 0.0
    %901 = vmatpush2.msra.mxu0 0.0
    %902 = vmatprep.subr.mxu0 0.0
    %903 = vmatpush2.msra.mxu0 0.0
    %904 = vmatprep.subr.mxu0 0.0
    %905 = vmatpush2.msra.mxu0 0.0
    %906 = vmatprep.subr.mxu0 0.0
    %907 = vmatpush2.msra.mxu0 0.0
    %908 = vmatprep.mubr.f32.mxu0 0.0
    %909 = vmatmul.mubr.f32.gmra.mxu0 %v839
    %v910 = vpop.f32.mrf.mxu0
    %v911 = vadd.f32 0.0, %v910
    %v912 = vpop.f32.mrf.mxu0
    %913 = vmatprep.mubr.f32.mxu0 0.0
    %914 = vmatmul.mubr.f32.gmra.mxu0 %v842
    %v915 = vpop.f32.mrf.mxu0
    %v916 = vadd.f32 0.0, %v915
    %v917 = vpop.f32.mrf.mxu0
    %918 = vdwg.mxu0
    %v920 = vsel %vm180, %v427, 0
    %v923 = vsel %vm180, %v503, 0
    %925 = vmatprep.subr.mxu0 0.0
    %926 = vmatpush1.msra.mxu0 0.0
    %927 = vmatprep.subr.mxu0 0.0
    %928 = vmatpush1.msra.mxu0 0.0
    %929 = vmatprep.subr.mxu0 0.0
    %930 = vmatpush1.msra.mxu0 0.0
    %931 = vmatprep.subr.mxu0 0.0
    %932 = vmatpush1.msra.mxu0 0.0
    %933 = vmatprep.subr.mxu0 0.0
    %934 = vmatpush1.msra.mxu0 0.0
    %935 = vmatprep.subr.mxu0 0.0
    %936 = vmatpush1.msra.mxu0 0.0
    %937 = vmatprep.subr.mxu0 0.0
    %938 = vmatpush1.msra.mxu0 0.0
    %939 = vmatprep.subr.mxu0 0.0
    %940 = vmatpush1.msra.mxu0 0.0
    %941 = vmatprep.subr.mxu0 0.0
    %942 = vmatpush1.msra.mxu0 0.0
    %943 = vmatprep.subr.mxu0 0.0
    %944 = vmatpush1.msra.mxu0 0.0
    %945 = vmatprep.subr.mxu0 0.0
    %946 = vmatpush1.msra.mxu0 0.0
    %947 = vmatprep.subr.mxu0 0.0
    %948 = vmatpush1.msra.mxu0 0.0
    %949 = vmatprep.subr.mxu0 0.0
    %950 = vmatpush1.msra.mxu0 0.0
    %951 = vmatprep.subr.mxu0 0.0
    %952 = vmatpush1.msra.mxu0 0.0
    %953 = vmatprep.subr.mxu0 0.0
    %954 = vmatpush1.msra.mxu0 0.0
    %955 = vmatprep.subr.mxu0 0.0
    %956 = vmatpush1.msra.mxu0 %v506
    %957 = vmatprep.subr.mxu0 0.0
    %958 = vmatpush2.msra.mxu0 0.0
    %959 = vmatprep.subr.mxu0 0.0
    %960 = vmatpush2.msra.mxu0 0.0
    %961 = vmatprep.subr.mxu0 0.0
    %962 = vmatpush2.msra.mxu0 0.0
    %963 = vmatprep.subr.mxu0 0.0
    %964 = vmatpush2.msra.mxu0 0.0
    %965 = vmatprep.subr.mxu0 0.0
    %966 = vmatpush2.msra.mxu0 0.0
    %967 = vmatprep.subr.mxu0 0.0
    %968 = vmatpush2.msra.mxu0 0.0
    %969 = vmatprep.subr.mxu0 0.0
    %970 = vmatpush2.msra.mxu0 0.0
    %971 = vmatprep.subr.mxu0 0.0
    %972 = vmatpush2.msra.mxu0 0.0
    %973 = vmatprep.subr.mxu0 0.0
    %974 = vmatpush2.msra.mxu0 0.0
    %975 = vmatprep.subr.mxu0 0.0
    %976 = vmatpush2.msra.mxu0 0.0
    %977 = vmatprep.subr.mxu0 0.0
    %978 = vmatpush2.msra.mxu0 0.0
    %979 = vmatprep.subr.mxu0 0.0
    %980 = vmatpush2.msra.mxu0 0.0
    %981 = vmatprep.subr.mxu0 0.0
    %982 = vmatpush2.msra.mxu0 0.0
    %983 = vmatprep.subr.mxu0 0.0
    %984 = vmatpush2.msra.mxu0 0.0
    %985 = vmatprep.subr.mxu0 0.0
    %986 = vmatpush2.msra.mxu0 0.0
    %987 = vmatprep.subr.mxu0 0.0
    %988 = vmatpush2.msra.mxu0 0.0
    %989 = vmatprep.mubr.f32.mxu0 0.0
    %990 = vmatmul.mubr.f32.gmra.mxu0 %v920
    %v991 = vpop.f32.mrf.mxu0
    %v992 = vadd.f32 %v911, %v991
    %v993 = vpop.f32.mrf.mxu0
    %994 = vmatprep.mubr.f32.mxu0 0.0
    %995 = vmatmul.mubr.f32.gmra.mxu0 %v923
    %v996 = vpop.f32.mrf.mxu0
    %v997 = vadd.f32 %v916, %v996
    %v998 = vpop.f32.mrf.mxu0
    %999 = vdwg.mxu0
    %1000 = vrot.lane.b32.xlu0 %v169, 112
    %v1001 = vpop.permute.xlu0 %1000
    %1002 = vrot.lane.b32.xlu0 %v169, 80
    %v1003 = vpop.permute.xlu0 %1002
    %v1004 = vsel %vm180, %v1001, 0
    %v1006 = vsel %vm180, %v1003, 0
    %1008 = vmatprep.subr.mxu0 0.0
    %1009 = vmatpush1.xpose.msra.mxu0 0.0
    %1010 = vmatprep.subr.mxu0 0.0
    %1011 = vmatpush1.xpose.msra.mxu0 0.0
    %1012 = vmatprep.subr.mxu0 0.0
    %1013 = vmatpush1.xpose.msra.mxu0 0.0
    %1014 = vmatprep.subr.mxu0 0.0
    %1015 = vmatpush1.xpose.msra.mxu0 0.0
    %1016 = vmatprep.subr.mxu0 0.0
    %1017 = vmatpush1.xpose.msra.mxu0 0.0
    %1018 = vmatprep.subr.mxu0 0.0
    %1019 = vmatpush1.xpose.msra.mxu0 0.0
    %1020 = vmatprep.subr.mxu0 0.0
    %1021 = vmatpush1.xpose.msra.mxu0 0.0
    %1022 = vmatprep.subr.mxu0 0.0
    %1023 = vmatpush1.xpose.msra.mxu0 0.0
    %1024 = vmatprep.subr.mxu0 0.0
    %1025 = vmatpush1.xpose.msra.mxu0 0.0
    %1026 = vmatprep.subr.mxu0 0.0
    %1027 = vmatpush1.xpose.msra.mxu0 0.0
    %1028 = vmatprep.subr.mxu0 0.0
    %1029 = vmatpush1.xpose.msra.mxu0 0.0
    %1030 = vmatprep.subr.mxu0 0.0
    %1031 = vmatpush1.xpose.msra.mxu0 0.0
    %1032 = vmatprep.subr.mxu0 0.0
    %1033 = vmatpush1.xpose.msra.mxu0 0.0
    %1034 = vmatprep.subr.mxu0 0.0
    %1035 = vmatpush1.xpose.msra.mxu0 0.0
    %1036 = vmatprep.subr.mxu0 0.0
    %1037 = vmatpush1.xpose.msra.mxu0 0.0
    %1038 = vmatprep.subr.mxu0 0.0
    %1039 = vmatpush1.xpose.msra.mxu0 %v1006
    %1040 = vmatprep.subr.mxu0 0.0
    %1041 = vmatpush2.xpose.msra.mxu0 0.0
    %1042 = vmatprep.subr.mxu0 0.0
    %1043 = vmatpush2.xpose.msra.mxu0 0.0
    %1044 = vmatprep.subr.mxu0 0.0
    %1045 = vmatpush2.xpose.msra.mxu0 0.0
    %1046 = vmatprep.subr.mxu0 0.0
    %1047 = vmatpush2.xpose.msra.mxu0 0.0
    %1048 = vmatprep.subr.mxu0 0.0
    %1049 = vmatpush2.xpose.msra.mxu0 0.0
    %1050 = vmatprep.subr.mxu0 0.0
    %1051 = vmatpush2.xpose.msra.mxu0 0.0
    %1052 = vmatprep.subr.mxu0 0.0
    %1053 = vmatpush2.xpose.msra.mxu0 0.0
    %1054 = vmatprep.subr.mxu0 0.0
    %1055 = vmatpush2.xpose.msra.mxu0 0.0
    %1056 = vmatprep.subr.mxu0 0.0
    %1057 = vmatpush2.xpose.msra.mxu0 0.0
    %1058 = vmatprep.subr.mxu0 0.0
    %1059 = vmatpush2.xpose.msra.mxu0 0.0
    %1060 = vmatprep.subr.mxu0 0.0
    %1061 = vmatpush2.xpose.msra.mxu0 0.0
    %1062 = vmatprep.subr.mxu0 0.0
    %1063 = vmatpush2.xpose.msra.mxu0 0.0
    %1064 = vmatprep.subr.mxu0 0.0
    %1065 = vmatpush2.xpose.msra.mxu0 0.0
    %1066 = vmatprep.subr.mxu0 0.0
    %1067 = vmatpush2.xpose.msra.mxu0 0.0
    %1068 = vmatprep.subr.mxu0 0.0
    %1069 = vmatpush2.xpose.msra.mxu0 0.0
    %1070 = vmatprep.subr.mxu0 0.0
    %1071 = vmatpush2.xpose.msra.mxu0 0.0
    %1072 = vmatprep.mubr.f32.mxu0 0.0
    %1073 = vmatmul.mubr.f32.gmra.mxu0 %v1004
    %v1074 = vpop.f32.mrf.mxu0
    %v1075 = vadd.f32 %v77, %v1074
    %v1076 = vpop.f32.mrf.mxu0
    %1077 = vdwg.mxu0
    %1078 = vrot.lane.b32.xlu0 %v174, 112
    %v1079 = vpop.permute.xlu0 %1078
    %1080 = vrot.lane.b32.xlu0 %v174, 80
    %v1081 = vpop.permute.xlu0 %1080
    %v1082 = vsel %vm180, %v1079, 0
    %v1084 = vsel %vm180, %v1081, 0
    %1086 = vmatprep.subr.mxu0 0.0
    %1087 = vmatpush1.xpose.msra.mxu0 0.0
    %1088 = vmatprep.subr.mxu0 0.0
    %1089 = vmatpush1.xpose.msra.mxu0 0.0
    %1090 = vmatprep.subr.mxu0 0.0
    %1091 = vmatpush1.xpose.msra.mxu0 0.0
    %1092 = vmatprep.subr.mxu0 0.0
    %1093 = vmatpush1.xpose.msra.mxu0 0.0
    %1094 = vmatprep.subr.mxu0 0.0
    %1095 = vmatpush1.xpose.msra.mxu0 0.0
    %1096 = vmatprep.subr.mxu0 0.0
    %1097 = vmatpush1.xpose.msra.mxu0 0.0
    %1098 = vmatprep.subr.mxu0 0.0
    %1099 = vmatpush1.xpose.msra.mxu0 0.0
    %1100 = vmatprep.subr.mxu0 0.0
    %1101 = vmatpush1.xpose.msra.mxu0 0.0
    %1102 = vmatprep.subr.mxu0 0.0
    %1103 = vmatpush1.xpose.msra.mxu0 0.0
    %1104 = vmatprep.subr.mxu0 0.0
    %1105 = vmatpush1.xpose.msra.mxu0 0.0
    %1106 = vmatprep.subr.mxu0 0.0
    %1107 = vmatpush1.xpose.msra.mxu0 0.0
    %1108 = vmatprep.subr.mxu0 0.0
    %1109 = vmatpush1.xpose.msra.mxu0 0.0
    %1110 = vmatprep.subr.mxu0 0.0
    %1111 = vmatpush1.xpose.msra.mxu0 0.0
    %1112 = vmatprep.subr.mxu0 0.0
    %1113 = vmatpush1.xpose.msra.mxu0 0.0
    %1114 = vmatprep.subr.mxu0 0.0
    %1115 = vmatpush1.xpose.msra.mxu0 0.0
    %1116 = vmatprep.subr.mxu0 0.0
    %1117 = vmatpush1.xpose.msra.mxu0 %v1084
    %1118 = vmatprep.subr.mxu0 0.0
    %1119 = vmatpush2.xpose.msra.mxu0 0.0
    %1120 = vmatprep.subr.mxu0 0.0
    %1121 = vmatpush2.xpose.msra.mxu0 0.0
    %1122 = vmatprep.subr.mxu0 0.0
    %1123 = vmatpush2.xpose.msra.mxu0 0.0
    %1124 = vmatprep.subr.mxu0 0.0
    %1125 = vmatpush2.xpose.msra.mxu0 0.0
    %1126 = vmatprep.subr.mxu0 0.0
    %1127 = vmatpush2.xpose.msra.mxu0 0.0
    %1128 = vmatprep.subr.mxu0 0.0
    %1129 = vmatpush2.xpose.msra.mxu0 0.0
    %1130 = vmatprep.subr.mxu0 0.0
    %1131 = vmatpush2.xpose.msra.mxu0 0.0
    %1132 = vmatprep.subr.mxu0 0.0
    %1133 = vmatpush2.xpose.msra.mxu0 0.0
    %1134 = vmatprep.subr.mxu0 0.0
    %1135 = vmatpush2.xpose.msra.mxu0 0.0
    %1136 = vmatprep.subr.mxu0 0.0
    %1137 = vmatpush2.xpose.msra.mxu0 0.0
    %1138 = vmatprep.subr.mxu0 0.0
    %1139 = vmatpush2.xpose.msra.mxu0 0.0
    %1140 = vmatprep.subr.mxu0 0.0
    %1141 = vmatpush2.xpose.msra.mxu0 0.0
    %1142 = vmatprep.subr.mxu0 0.0
    %1143 = vmatpush2.xpose.msra.mxu0 0.0
    %1144 = vmatprep.subr.mxu0 0.0
    %1145 = vmatpush2.xpose.msra.mxu0 0.0
    %1146 = vmatprep.subr.mxu0 0.0
    %1147 = vmatpush2.xpose.msra.mxu0 0.0
    %1148 = vmatprep.subr.mxu0 0.0
    %1149 = vmatpush2.xpose.msra.mxu0 0.0
    %1150 = vmatprep.mubr.f32.mxu0 0.0
    %1151 = vmatmul.mubr.f32.gmra.mxu0 %v1082
    %v1152 = vpop.f32.mrf.mxu0
    %v1153 = vadd.f32 %v81, %v1152
    %v1154 = vpop.f32.mrf.mxu0
    %1155 = vdwg.mxu0
    %v1156 = vsel %vm180, %v1075, -inf
    %1157 = vmax.xlane.f32.xlu0 %v1156
    %v1158 = vpop.xlane.xlu0 %1157
    %v1159 = vsel %vm180, %v1153, -inf
    %1160 = vmax.xlane.f32.xlu0 %v1159
    %v1161 = vpop.xlane.xlu0 %1160
    %v1162 = vsub.f32 %v1075, %v1158
    %v1163 = vsub.f32 %v1153, %v1161
    %v1164 = vmul.f32 %v1162, 1.442695
    %v1165 = vpow.pop %v1164
    %v1166 = vmul.f32 %v1163, 1.442695
    %v1167 = vpow.pop %v1166
    %v1168 = vsel %vm180, %v1165, 0.0
    %1169 = vadd.xlane.f32.xlu0 %v1168
    %v1170 = vpop.xlane.xlu0 %1169
    %v1171 = vsel %vm180, %v1167, 0.0
    %1172 = vadd.xlane.f32.xlu0 %v1171
    %v1173 = vpop.xlane.xlu0 %1172
    %v1174 = vrcp.pop %v1170
    %v1175 = vrcp.pop %v1173
    %v1176 = vmul.f32 %v1165, %v1174
    %v1177 = vmul.f32 %v1167, %v1175
    %1178 = vrot.lane.b32.xlu0 %v169, 48
    %v1179 = vpop.permute.xlu0 %1178
    %v1182 = vsel %vm180, %v1176, 0
    %1184 = vmatprep.subr.mxu0 0.0
    %1185 = vmatpush1.msra.mxu0 0.0
    %1186 = vmatprep.subr.mxu0 0.0
    %1187 = vmatpush1.msra.mxu0 0.0
    %1188 = vmatprep.subr.mxu0 0.0
    %1189 = vmatpush1.msra.mxu0 0.0
    %1190 = vmatprep.subr.mxu0 0.0
    %1191 = vmatpush1.msra.mxu0 0.0
    %1192 = vmatprep.subr.mxu0 0.0
    %1193 = vmatpush1.msra.mxu0 0.0
    %1194 = vmatprep.subr.mxu0 0.0
    %1195 = vmatpush1.msra.mxu0 0.0
    %1196 = vmatprep.subr.mxu0 0.0
    %1197 = vmatpush1.msra.mxu0 0.0
    %1198 = vmatprep.subr.mxu0 0.0
    %1199 = vmatpush1.msra.mxu0 0.0
    %1200 = vmatprep.subr.mxu0 0.0
    %1201 = vmatpush1.msra.mxu0 0.0
    %1202 = vmatprep.subr.mxu0 0.0
    %1203 = vmatpush1.msra.mxu0 0.0
    %1204 = vmatprep.subr.mxu0 0.0
    %1205 = vmatpush1.msra.mxu0 0.0
    %1206 = vmatprep.subr.mxu0 0.0
    %1207 = vmatpush1.msra.mxu0 0.0
    %1208 = vmatprep.subr.mxu0 0.0
    %1209 = vmatpush1.msra.mxu0 0.0
    %1210 = vmatprep.subr.mxu0 0.0
    %1211 = vmatpush1.msra.mxu0 0.0
    %1212 = vmatprep.subr.mxu0 0.0
    %1213 = vmatpush1.msra.mxu0 0.0
    %1214 = vmatprep.subr.mxu0 0.0
    %1215 = vmatpush1.msra.mxu0 %v1179
    %1216 = vmatprep.subr.mxu0 0.0
    %1217 = vmatpush2.msra.mxu0 0.0
    %1218 = vmatprep.subr.mxu0 0.0
    %1219 = vmatpush2.msra.mxu0 0.0
    %1220 = vmatprep.subr.mxu0 0.0
    %1221 = vmatpush2.msra.mxu0 0.0
    %1222 = vmatprep.subr.mxu0 0.0
    %1223 = vmatpush2.msra.mxu0 0.0
    %1224 = vmatprep.subr.mxu0 0.0
    %1225 = vmatpush2.msra.mxu0 0.0
    %1226 = vmatprep.subr.mxu0 0.0
    %1227 = vmatpush2.msra.mxu0 0.0
    %1228 = vmatprep.subr.mxu0 0.0
    %1229 = vmatpush2.msra.mxu0 0.0
    %1230 = vmatprep.subr.mxu0 0.0
    %1231 = vmatpush2.msra.mxu0 0.0
    %1232 = vmatprep.subr.mxu0 0.0
    %1233 = vmatpush2.msra.mxu0 0.0
    %1234 = vmatprep.subr.mxu0 0.0
    %1235 = vmatpush2.msra.mxu0 0.0
    %1236 = vmatprep.subr.mxu0 0.0
    %1237 = vmatpush2.msra.mxu0 0.0
    %1238 = vmatprep.subr.mxu0 0.0
    %1239 = vmatpush2.msra.mxu0 0.0
    %1240 = vmatprep.subr.mxu0 0.0
    %1241 = vmatpush2.msra.mxu0 0.0
    %1242 = vmatprep.subr.mxu0 0.0
    %1243 = vmatpush2.msra.mxu0 0.0
    %1244 = vmatprep.subr.mxu0 0.0
    %1245 = vmatpush2.msra.mxu0 0.0
    %1246 = vmatprep.subr.mxu0 0.0
    %1247 = vmatpush2.msra.mxu0 0.0
    %1248 = vmatprep.mubr.f32.mxu0 0.0
    %1249 = vmatmul.mubr.f32.gmra.mxu0 %v1182
    %v1250 = vpop.f32.mrf.mxu0
    %v1251 = vadd.f32 0.0, %v1250
    %v1252 = vpop.f32.mrf.mxu0
    %1253 = vdwg.mxu0
    %1254 = vrot.lane.b32.xlu0 %v174, 48
    %v1255 = vpop.permute.xlu0 %1254
    %v1258 = vsel %vm180, %v1177, 0
    %1260 = vmatprep.subr.mxu0 0.0
    %1261 = vmatpush1.msra.mxu0 0.0
    %1262 = vmatprep.subr.mxu0 0.0
    %1263 = vmatpush1.msra.mxu0 0.0
    %1264 = vmatprep.subr.mxu0 0.0
    %1265 = vmatpush1.msra.mxu0 0.0
    %1266 = vmatprep.subr.mxu0 0.0
    %1267 = vmatpush1.msra.mxu0 0.0
    %1268 = vmatprep.subr.mxu0 0.0
    %1269 = vmatpush1.msra.mxu0 0.0
    %1270 = vmatprep.subr.mxu0 0.0
    %1271 = vmatpush1.msra.mxu0 0.0
    %1272 = vmatprep.subr.mxu0 0.0
    %1273 = vmatpush1.msra.mxu0 0.0
    %1274 = vmatprep.subr.mxu0 0.0
    %1275 = vmatpush1.msra.mxu0 0.0
    %1276 = vmatprep.subr.mxu0 0.0
    %1277 = vmatpush1.msra.mxu0 0.0
    %1278 = vmatprep.subr.mxu0 0.0
    %1279 = vmatpush1.msra.mxu0 0.0
    %1280 = vmatprep.subr.mxu0 0.0
    %1281 = vmatpush1.msra.mxu0 0.0
    %1282 = vmatprep.subr.mxu0 0.0
    %1283 = vmatpush1.msra.mxu0 0.0
    %1284 = vmatprep.subr.mxu0 0.0
    %1285 = vmatpush1.msra.mxu0 0.0
    %1286 = vmatprep.subr.mxu0 0.0
    %1287 = vmatpush1.msra.mxu0 0.0
    %1288 = vmatprep.subr.mxu0 0.0
    %1289 = vmatpush1.msra.mxu0 0.0
    %1290 = vmatprep.subr.mxu0 0.0
    %1291 = vmatpush1.msra.mxu0 %v1255
    %1292 = vmatprep.subr.mxu0 0.0
    %1293 = vmatpush2.msra.mxu0 0.0
    %1294 = vmatprep.subr.mxu0 0.0
    %1295 = vmatpush2.msra.mxu0 0.0
    %1296 = vmatprep.subr.mxu0 0.0
    %1297 = vmatpush2.msra.mxu0 0.0
    %1298 = vmatprep.subr.mxu0 0.0
    %1299 = vmatpush2.msra.mxu0 0.0
    %1300 = vmatprep.subr.mxu0 0.0
    %1301 = vmatpush2.msra.mxu0 0.0
    %1302 = vmatprep.subr.mxu0 0.0
    %1303 = vmatpush2.msra.mxu0 0.0
    %1304 = vmatprep.subr.mxu0 0.0
    %1305 = vmatpush2.msra.mxu0 0.0
    %1306 = vmatprep.subr.mxu0 0.0
    %1307 = vmatpush2.msra.mxu0 0.0
    %1308 = vmatprep.subr.mxu0 0.0
    %1309 = vmatpush2.msra.mxu0 0.0
    %1310 = vmatprep.subr.mxu0 0.0
    %1311 = vmatpush2.msra.mxu0 0.0
    %1312 = vmatprep.subr.mxu0 0.0
    %1313 = vmatpush2.msra.mxu0 0.0
    %1314 = vmatprep.subr.mxu0 0.0
    %1315 = vmatpush2.msra.mxu0 0.0
    %1316 = vmatprep.subr.mxu0 0.0
    %1317 = vmatpush2.msra.mxu0 0.0
    %1318 = vmatprep.subr.mxu0 0.0
    %1319 = vmatpush2.msra.mxu0 0.0
    %1320 = vmatprep.subr.mxu0 0.0
    %1321 = vmatpush2.msra.mxu0 0.0
    %1322 = vmatprep.subr.mxu0 0.0
    %1323 = vmatpush2.msra.mxu0 0.0
    %1324 = vmatprep.mubr.f32.mxu0 0.0
    %1325 = vmatmul.mubr.f32.gmra.mxu0 %v1258
    %v1326 = vpop.f32.mrf.mxu0
    %v1327 = vadd.f32 0.0, %v1326
    %v1328 = vpop.f32.mrf.mxu0
    %1329 = vdwg.mxu0
    %v1330 = vld [vmem:[%s4 + $0x10] sm:$0xff]
    %v1332 = vsel %vm180, %v1251, 0
    %v1335 = vsel %vm180, %v1327, 0
    %1337 = vmatprep.subr.mxu0 0.0
    %1338 = vmatpush1.msra.mxu0 0.0
    %1339 = vmatprep.subr.mxu0 0.0
    %1340 = vmatpush1.msra.mxu0 0.0
    %1341 = vmatprep.subr.mxu0 0.0
    %1342 = vmatpush1.msra.mxu0 0.0
    %1343 = vmatprep.subr.mxu0 0.0
    %1344 = vmatpush1.msra.mxu0 0.0
    %1345 = vmatprep.subr.mxu0 0.0
    %1346 = vmatpush1.msra.mxu0 0.0
    %1347 = vmatprep.subr.mxu0 0.0
    %1348 = vmatpush1.msra.mxu0 0.0
    %1349 = vmatprep.subr.mxu0 0.0
    %1350 = vmatpush1.msra.mxu0 0.0
    %1351 = vmatprep.subr.mxu0 0.0
    %1352 = vmatpush1.msra.mxu0 0.0
    %1353 = vmatprep.subr.mxu0 0.0
    %1354 = vmatpush1.msra.mxu0 0.0
    %1355 = vmatprep.subr.mxu0 0.0
    %1356 = vmatpush1.msra.mxu0 0.0
    %1357 = vmatprep.subr.mxu0 0.0
    %1358 = vmatpush1.msra.mxu0 0.0
    %1359 = vmatprep.subr.mxu0 0.0
    %1360 = vmatpush1.msra.mxu0 0.0
    %1361 = vmatprep.subr.mxu0 0.0
    %1362 = vmatpush1.msra.mxu0 0.0
    %1363 = vmatprep.subr.mxu0 0.0
    %1364 = vmatpush1.msra.mxu0 0.0
    %1365 = vmatprep.subr.mxu0 0.0
    %1366 = vmatpush1.msra.mxu0 0.0
    %1367 = vmatprep.subr.mxu0 0.0
    %1368 = vmatpush1.msra.mxu0 %v1330
    %1369 = vmatprep.subr.mxu0 0.0
    %1370 = vmatpush2.msra.mxu0 0.0
    %1371 = vmatprep.subr.mxu0 0.0
    %1372 = vmatpush2.msra.mxu0 0.0
    %1373 = vmatprep.subr.mxu0 0.0
    %1374 = vmatpush2.msra.mxu0 0.0
    %1375 = vmatprep.subr.mxu0 0.0
    %1376 = vmatpush2.msra.mxu0 0.0
    %1377 = vmatprep.subr.mxu0 0.0
    %1378 = vmatpush2.msra.mxu0 0.0
    %1379 = vmatprep.subr.mxu0 0.0
    %1380 = vmatpush2.msra.mxu0 0.0
    %1381 = vmatprep.subr.mxu0 0.0
    %1382 = vmatpush2.msra.mxu0 0.0
    %1383 = vmatprep.subr.mxu0 0.0
    %1384 = vmatpush2.msra.mxu0 0.0
    %1385 = vmatprep.subr.mxu0 0.0
    %1386 = vmatpush2.msra.mxu0 0.0
    %1387 = vmatprep.subr.mxu0 0.0
    %1388 = vmatpush2.msra.mxu0 0.0
    %1389 = vmatprep.subr.mxu0 0.0
    %1390 = vmatpush2.msra.mxu0 0.0
    %1391 = vmatprep.subr.mxu0 0.0
    %1392 = vmatpush2.msra.mxu0 0.0
    %1393 = vmatprep.subr.mxu0 0.0
    %1394 = vmatpush2.msra.mxu0 0.0
    %1395 = vmatprep.subr.mxu0 0.0
    %1396 = vmatpush2.msra.mxu0 0.0
    %1397 = vmatprep.subr.mxu0 0.0
    %1398 = vmatpush2.msra.mxu0 0.0
    %1399 = vmatprep.subr.mxu0 0.0
    %1400 = vmatpush2.msra.mxu0 0.0
    %1401 = vmatprep.mubr.f32.mxu0 0.0
    %1402 = vmatmul.mubr.f32.gmra.mxu0 %v1332
    %v1403 = vpop.f32.mrf.mxu0
    %v1404 = vadd.f32 0.0, %v1403
    %v1405 = vpop.f32.mrf.mxu0
    %1406 = vmatprep.mubr.f32.mxu0 0.0
    %1407 = vmatmul.mubr.f32.gmra.mxu0 %v1335
    %v1408 = vpop.f32.mrf.mxu0
    %v1409 = vadd.f32 0.0, %v1408
    %v1410 = vpop.f32.mrf.mxu0
    %1411 = vdwg.mxu0
    %v1412 = vadd.f32 %v992, %v1404
    %v1413 = vadd.f32 %v997, %v1409
    %1414 = vrot.lane.b32.xlu0 %v169, 104
    %v1415 = vpop.permute.xlu0 %1414
    %1416 = vrot.lane.b32.xlu0 %v169, 72
    %v1417 = vpop.permute.xlu0 %1416
    %v1418 = vsel %vm180, %v1415, 0
    %v1420 = vsel %vm180, %v1417, 0
    %1422 = vmatprep.subr.mxu0 0.0
    %1423 = vmatpush1.xpose.msra.mxu0 0.0
    %1424 = vmatprep.subr.mxu0 0.0
    %1425 = vmatpush1.xpose.msra.mxu0 0.0
    %1426 = vmatprep.subr.mxu0 0.0
    %1427 = vmatpush1.xpose.msra.mxu0 0.0
    %1428 = vmatprep.subr.mxu0 0.0
    %1429 = vmatpush1.xpose.msra.mxu0 0.0
    %1430 = vmatprep.subr.mxu0 0.0
    %1431 = vmatpush1.xpose.msra.mxu0 0.0
    %1432 = vmatprep.subr.mxu0 0.0
    %1433 = vmatpush1.xpose.msra.mxu0 0.0
    %1434 = vmatprep.subr.mxu0 0.0
    %1435 = vmatpush1.xpose.msra.mxu0 0.0
    %1436 = vmatprep.subr.mxu0 0.0
    %1437 = vmatpush1.xpose.msra.mxu0 0.0
    %1438 = vmatprep.subr.mxu0 0.0
    %1439 = vmatpush1.xpose.msra.mxu0 0.0
    %1440 = vmatprep.subr.mxu0 0.0
    %1441 = vmatpush1.xpose.msra.mxu0 0.0
    %1442 = vmatprep.subr.mxu0 0.0
    %1443 = vmatpush1.xpose.msra.mxu0 0.0
    %1444 = vmatprep.subr.mxu0 0.0
    %1445 = vmatpush1.xpose.msra.mxu0 0.0
    %1446 = vmatprep.subr.mxu0 0.0
    %1447 = vmatpush1.xpose.msra.mxu0 0.0
    %1448 = vmatprep.subr.mxu0 0.0
    %1449 = vmatpush1.xpose.msra.mxu0 0.0
    %1450 = vmatprep.subr.mxu0 0.0
    %1451 = vmatpush1.xpose.msra.mxu0 0.0
    %1452 = vmatprep.subr.mxu0 0.0
    %1453 = vmatpush1.xpose.msra.mxu0 %v1420
    %1454 = vmatprep.subr.mxu0 0.0
    %1455 = vmatpush2.xpose.msra.mxu0 0.0
    %1456 = vmatprep.subr.mxu0 0.0
    %1457 = vmatpush2.xpose.msra.mxu0 0.0
    %1458 = vmatprep.subr.mxu0 0.0
    %1459 = vmatpush2.xpose.msra.mxu0 0.0
    %1460 = vmatprep.subr.mxu0 0.0
    %1461 = vmatpush2.xpose.msra.mxu0 0.0
    %1462 = vmatprep.subr.mxu0 0.0
    %1463 = vmatpush2.xpose.msra.mxu0 0.0
    %1464 = vmatprep.subr.mxu0 0.0
    %1465 = vmatpush2.xpose.msra.mxu0 0.0
    %1466 = vmatprep.subr.mxu0 0.0
    %1467 = vmatpush2.xpose.msra.mxu0 0.0
    %1468 = vmatprep.subr.mxu0 0.0
    %1469 = vmatpush2.xpose.msra.mxu0 0.0
    %1470 = vmatprep.subr.mxu0 0.0
    %1471 = vmatpush2.xpose.msra.mxu0 0.0
    %1472 = vmatprep.subr.mxu0 0.0
    %1473 = vmatpush2.xpose.msra.mxu0 0.0
    %1474 = vmatprep.subr.mxu0 0.0
    %1475 = vmatpush2.xpose.msra.mxu0 0.0
    %1476 = vmatprep.subr.mxu0 0.0
    %1477 = vmatpush2.xpose.msra.mxu0 0.0
    %1478 = vmatprep.subr.mxu0 0.0
    %1479 = vmatpush2.xpose.msra.mxu0 0.0
    %1480 = vmatprep.subr.mxu0 0.0
    %1481 = vmatpush2.xpose.msra.mxu0 0.0
    %1482 = vmatprep.subr.mxu0 0.0
    %1483 = vmatpush2.xpose.msra.mxu0 0.0
    %1484 = vmatprep.subr.mxu0 0.0
    %1485 = vmatpush2.xpose.msra.mxu0 0.0
    %1486 = vmatprep.mubr.f32.mxu0 0.0
    %1487 = vmatmul.mubr.f32.gmra.mxu0 %v1418
    %v1488 = vpop.f32.mrf.mxu0
    %v1489 = vadd.f32 %v77, %v1488
    %v1490 = vpop.f32.mrf.mxu0
    %1491 = vdwg.mxu0
    %1492 = vrot.lane.b32.xlu0 %v174, 104
    %v1493 = vpop.permute.xlu0 %1492
    %1494 = vrot.lane.b32.xlu0 %v174, 72
    %v1495 = vpop.permute.xlu0 %1494
    %v1496 = vsel %vm180, %v1493, 0
    %v1498 = vsel %vm180, %v1495, 0
    %1500 = vmatprep.subr.mxu0 0.0
    %1501 = vmatpush1.xpose.msra.mxu0 0.0
    %1502 = vmatprep.subr.mxu0 0.0
    %1503 = vmatpush1.xpose.msra.mxu0 0.0
    %1504 = vmatprep.subr.mxu0 0.0
    %1505 = vmatpush1.xpose.msra.mxu0 0.0
    %1506 = vmatprep.subr.mxu0 0.0
    %1507 = vmatpush1.xpose.msra.mxu0 0.0
    %1508 = vmatprep.subr.mxu0 0.0
    %1509 = vmatpush1.xpose.msra.mxu0 0.0
    %1510 = vmatprep.subr.mxu0 0.0
    %1511 = vmatpush1.xpose.msra.mxu0 0.0
    %1512 = vmatprep.subr.mxu0 0.0
    %1513 = vmatpush1.xpose.msra.mxu0 0.0
    %1514 = vmatprep.subr.mxu0 0.0
    %1515 = vmatpush1.xpose.msra.mxu0 0.0
    %1516 = vmatprep.subr.mxu0 0.0
    %1517 = vmatpush1.xpose.msra.mxu0 0.0
    %1518 = vmatprep.subr.mxu0 0.0
    %1519 = vmatpush1.xpose.msra.mxu0 0.0
    %1520 = vmatprep.subr.mxu0 0.0
    %1521 = vmatpush1.xpose.msra.mxu0 0.0
    %1522 = vmatprep.subr.mxu0 0.0
    %1523 = vmatpush1.xpose.msra.mxu0 0.0
    %1524 = vmatprep.subr.mxu0 0.0
    %1525 = vmatpush1.xpose.msra.mxu0 0.0
    %1526 = vmatprep.subr.mxu0 0.0
    %1527 = vmatpush1.xpose.msra.mxu0 0.0
    %1528 = vmatprep.subr.mxu0 0.0
    %1529 = vmatpush1.xpose.msra.mxu0 0.0
    %1530 = vmatprep.subr.mxu0 0.0
    %1531 = vmatpush1.xpose.msra.mxu0 %v1498
    %1532 = vmatprep.subr.mxu0 0.0
    %1533 = vmatpush2.xpose.msra.mxu0 0.0
    %1534 = vmatprep.subr.mxu0 0.0
    %1535 = vmatpush2.xpose.msra.mxu0 0.0
    %1536 = vmatprep.subr.mxu0 0.0
    %1537 = vmatpush2.xpose.msra.mxu0 0.0
    %1538 = vmatprep.subr.mxu0 0.0
    %1539 = vmatpush2.xpose.msra.mxu0 0.0
    %1540 = vmatprep.subr.mxu0 0.0
    %1541 = vmatpush2.xpose.msra.mxu0 0.0
    %1542 = vmatprep.subr.mxu0 0.0
    %1543 = vmatpush2.xpose.msra.mxu0 0.0
    %1544 = vmatprep.subr.mxu0 0.0
    %1545 = vmatpush2.xpose.msra.mxu0 0.0
    %1546 = vmatprep.subr.mxu0 0.0
    %1547 = vmatpush2.xpose.msra.mxu0 0.0
    %1548 = vmatprep.subr.mxu0 0.0
    %1549 = vmatpush2.xpose.msra.mxu0 0.0
    %1550 = vmatprep.subr.mxu0 0.0
    %1551 = vmatpush2.xpose.msra.mxu0 0.0
    %1552 = vmatprep.subr.mxu0 0.0
    %1553 = vmatpush2.xpose.msra.mxu0 0.0
    %1554 = vmatprep.subr.mxu0 0.0
    %1555 = vmatpush2.xpose.msra.mxu0 0.0
    %1556 = vmatprep.subr.mxu0 0.0
    %1557 = vmatpush2.xpose.msra.mxu0 0.0
    %1558 = vmatprep.subr.mxu0 0.0
    %1559 = vmatpush2.xpose.msra.mxu0 0.0
    %1560 = vmatprep.subr.mxu0 0.0
    %1561 = vmatpush2.xpose.msra.mxu0 0.0
    %1562 = vmatprep.subr.mxu0 0.0
    %1563 = vmatpush2.xpose.msra.mxu0 0.0
    %1564 = vmatprep.mubr.f32.mxu0 0.0
    %1565 = vmatmul.mubr.f32.gmra.mxu0 %v1496
    %v1566 = vpop.f32.mrf.mxu0
    %v1567 = vadd.f32 %v81, %v1566
    %v1568 = vpop.f32.mrf.mxu0
    %1569 = vdwg.mxu0
    %v1570 = vsel %vm180, %v1489, -inf
    %1571 = vmax.xlane.f32.xlu0 %v1570
    %v1572 = vpop.xlane.xlu0 %1571
    %v1573 = vsel %vm180, %v1567, -inf
    %1574 = vmax.xlane.f32.xlu0 %v1573
    %v1575 = vpop.xlane.xlu0 %1574
    %v1576 = vsub.f32 %v1489, %v1572
    %v1577 = vsub.f32 %v1567, %v1575
    %v1578 = vmul.f32 %v1576, 1.442695
    %v1579 = vpow.pop %v1578
    %v1580 = vmul.f32 %v1577, 1.442695
    %v1581 = vpow.pop %v1580
    %v1582 = vsel %vm180, %v1579, 0.0
    %1583 = vadd.xlane.f32.xlu0 %v1582
    %v1584 = vpop.xlane.xlu0 %1583
    %v1585 = vsel %vm180, %v1581, 0.0
    %1586 = vadd.xlane.f32.xlu0 %v1585
    %v1587 = vpop.xlane.xlu0 %1586
    %v1588 = vrcp.pop %v1584
    %v1589 = vrcp.pop %v1587
    %v1590 = vmul.f32 %v1579, %v1588
    %v1591 = vmul.f32 %v1581, %v1589
    %1592 = vrot.lane.b32.xlu0 %v169, 40
    %v1593 = vpop.permute.xlu0 %1592
    %v1596 = vsel %vm180, %v1590, 0
    %1598 = vmatprep.subr.mxu0 0.0
    %1599 = vmatpush1.msra.mxu0 0.0
    %1600 = vmatprep.subr.mxu0 0.0
    %1601 = vmatpush1.msra.mxu0 0.0
    %1602 = vmatprep.subr.mxu0 0.0
    %1603 = vmatpush1.msra.mxu0 0.0
    %1604 = vmatprep.subr.mxu0 0.0
    %1605 = vmatpush1.msra.mxu0 0.0
    %1606 = vmatprep.subr.mxu0 0.0
    %1607 = vmatpush1.msra.mxu0 0.0
    %1608 = vmatprep.subr.mxu0 0.0
    %1609 = vmatpush1.msra.mxu0 0.0
    %1610 = vmatprep.subr.mxu0 0.0
    %1611 = vmatpush1.msra.mxu0 0.0
    %1612 = vmatprep.subr.mxu0 0.0
    %1613 = vmatpush1.msra.mxu0 0.0
    %1614 = vmatprep.subr.mxu0 0.0
    %1615 = vmatpush1.msra.mxu0 0.0
    %1616 = vmatprep.subr.mxu0 0.0
    %1617 = vmatpush1.msra.mxu0 0.0
    %1618 = vmatprep.subr.mxu0 0.0
    %1619 = vmatpush1.msra.mxu0 0.0
    %1620 = vmatprep.subr.mxu0 0.0
    %1621 = vmatpush1.msra.mxu0 0.0
    %1622 = vmatprep.subr.mxu0 0.0
    %1623 = vmatpush1.msra.mxu0 0.0
    %1624 = vmatprep.subr.mxu0 0.0
    %1625 = vmatpush1.msra.mxu0 0.0
    %1626 = vmatprep.subr.mxu0 0.0
    %1627 = vmatpush1.msra.mxu0 0.0
    %1628 = vmatprep.subr.mxu0 0.0
    %1629 = vmatpush1.msra.mxu0 %v1593
    %1630 = vmatprep.subr.mxu0 0.0
    %1631 = vmatpush2.msra.mxu0 0.0
    %1632 = vmatprep.subr.mxu0 0.0
    %1633 = vmatpush2.msra.mxu0 0.0
    %1634 = vmatprep.subr.mxu0 0.0
    %1635 = vmatpush2.msra.mxu0 0.0
    %1636 = vmatprep.subr.mxu0 0.0
    %1637 = vmatpush2.msra.mxu0 0.0
    %1638 = vmatprep.subr.mxu0 0.0
    %1639 = vmatpush2.msra.mxu0 0.0
    %1640 = vmatprep.subr.mxu0 0.0
    %1641 = vmatpush2.msra.mxu0 0.0
    %1642 = vmatprep.subr.mxu0 0.0
    %1643 = vmatpush2.msra.mxu0 0.0
    %1644 = vmatprep.subr.mxu0 0.0
    %1645 = vmatpush2.msra.mxu0 0.0
    %1646 = vmatprep.subr.mxu0 0.0
    %1647 = vmatpush2.msra.mxu0 0.0
    %1648 = vmatprep.subr.mxu0 0.0
    %1649 = vmatpush2.msra.mxu0 0.0
    %1650 = vmatprep.subr.mxu0 0.0
    %1651 = vmatpush2.msra.mxu0 0.0
    %1652 = vmatprep.subr.mxu0 0.0
    %1653 = vmatpush2.msra.mxu0 0.0
    %1654 = vmatprep.subr.mxu0 0.0
    %1655 = vmatpush2.msra.mxu0 0.0
    %1656 = vmatprep.subr.mxu0 0.0
    %1657 = vmatpush2.msra.mxu0 0.0
    %1658 = vmatprep.subr.mxu0 0.0
    %1659 = vmatpush2.msra.mxu0 0.0
    %1660 = vmatprep.subr.mxu0 0.0
    %1661 = vmatpush2.msra.mxu0 0.0
    %1662 = vmatprep.mubr.f32.mxu0 0.0
    %1663 = vmatmul.mubr.f32.gmra.mxu0 %v1596
    %v1664 = vpop.f32.mrf.mxu0
    %v1665 = vadd.f32 0.0, %v1664
    %v1666 = vpop.f32.mrf.mxu0
    %1667 = vdwg.mxu0
    %1668 = vrot.lane.b32.xlu0 %v174, 40
    %v1669 = vpop.permute.xlu0 %1668
    %v1672 = vsel %vm180, %v1591, 0
    %1674 = vmatprep.subr.mxu0 0.0
    %1675 = vmatpush1.msra.mxu0 0.0
    %1676 = vmatprep.subr.mxu0 0.0
    %1677 = vmatpush1.msra.mxu0 0.0
    %1678 = vmatprep.subr.mxu0 0.0
    %1679 = vmatpush1.msra.mxu0 0.0
    %1680 = vmatprep.subr.mxu0 0.0
    %1681 = vmatpush1.msra.mxu0 0.0
    %1682 = vmatprep.subr.mxu0 0.0
    %1683 = vmatpush1.msra.mxu0 0.0
    %1684 = vmatprep.subr.mxu0 0.0
    %1685 = vmatpush1.msra.mxu0 0.0
    %1686 = vmatprep.subr.mxu0 0.0
    %1687 = vmatpush1.msra.mxu0 0.0
    %1688 = vmatprep.subr.mxu0 0.0
    %1689 = vmatpush1.msra.mxu0 0.0
    %1690 = vmatprep.subr.mxu0 0.0
    %1691 = vmatpush1.msra.mxu0 0.0
    %1692 = vmatprep.subr.mxu0 0.0
    %1693 = vmatpush1.msra.mxu0 0.0
    %1694 = vmatprep.subr.mxu0 0.0
    %1695 = vmatpush1.msra.mxu0 0.0
    %1696 = vmatprep.subr.mxu0 0.0
    %1697 = vmatpush1.msra.mxu0 0.0
    %1698 = vmatprep.subr.mxu0 0.0
    %1699 = vmatpush1.msra.mxu0 0.0
    %1700 = vmatprep.subr.mxu0 0.0
    %1701 = vmatpush1.msra.mxu0 0.0
    %1702 = vmatprep.subr.mxu0 0.0
    %1703 = vmatpush1.msra.mxu0 0.0
    %1704 = vmatprep.subr.mxu0 0.0
    %1705 = vmatpush1.msra.mxu0 %v1669
    %1706 = vmatprep.subr.mxu0 0.0
    %1707 = vmatpush2.msra.mxu0 0.0
    %1708 = vmatprep.subr.mxu0 0.0
    %1709 = vmatpush2.msra.mxu0 0.0
    %1710 = vmatprep.subr.mxu0 0.0
    %1711 = vmatpush2.msra.mxu0 0.0
    %1712 = vmatprep.subr.mxu0 0.0
    %1713 = vmatpush2.msra.mxu0 0.0
    %1714 = vmatprep.subr.mxu0 0.0
    %1715 = vmatpush2.msra.mxu0 0.0
    %1716 = vmatprep.subr.mxu0 0.0
    %1717 = vmatpush2.msra.mxu0 0.0
    %1718 = vmatprep.subr.mxu0 0.0
    %1719 = vmatpush2.msra.mxu0 0.0
    %1720 = vmatprep.subr.mxu0 0.0
    %1721 = vmatpush2.msra.mxu0 0.0
    %1722 = vmatprep.subr.mxu0 0.0
    %1723 = vmatpush2.msra.mxu0 0.0
    %1724 = vmatprep.subr.mxu0 0.0
    %1725 = vmatpush2.msra.mxu0 0.0
    %1726 = vmatprep.subr.mxu0 0.0
    %1727 = vmatpush2.msra.mxu0 0.0
    %1728 = vmatprep.subr.mxu0 0.0
    %1729 = vmatpush2.msra.mxu0 0.0
    %1730 = vmatprep.subr.mxu0 0.0
    %1731 = vmatpush2.msra.mxu0 0.0
    %1732 = vmatprep.subr.mxu0 0.0
    %1733 = vmatpush2.msra.mxu0 0.0
    %1734 = vmatprep.subr.mxu0 0.0
    %1735 = vmatpush2.msra.mxu0 0.0
    %1736 = vmatprep.subr.mxu0 0.0
    %1737 = vmatpush2.msra.mxu0 0.0
    %1738 = vmatprep.mubr.f32.mxu0 0.0
    %1739 = vmatmul.mubr.f32.gmra.mxu0 %v1672
    %v1740 = vpop.f32.mrf.mxu0
    %v1741 = vadd.f32 0.0, %v1740
    %v1742 = vpop.f32.mrf.mxu0
    %1743 = vdwg.mxu0
    %v1744 = vld [vmem:[%s4 + $0x18] sm:$0xff]
    %v1746 = vsel %vm180, %v1665, 0
    %v1749 = vsel %vm180, %v1741, 0
    %1751 = vmatprep.subr.mxu0 0.0
    %1752 = vmatpush1.msra.mxu0 0.0
    %1753 = vmatprep.subr.mxu0 0.0
    %1754 = vmatpush1.msra.mxu0 0.0
    %1755 = vmatprep.subr.mxu0 0.0
    %1756 = vmatpush1.msra.mxu0 0.0
    %1757 = vmatprep.subr.mxu0 0.0
    %1758 = vmatpush1.msra.mxu0 0.0
    %1759 = vmatprep.subr.mxu0 0.0
    %1760 = vmatpush1.msra.mxu0 0.0
    %1761 = vmatprep.subr.mxu0 0.0
    %1762 = vmatpush1.msra.mxu0 0.0
    %1763 = vmatprep.subr.mxu0 0.0
    %1764 = vmatpush1.msra.mxu0 0.0
    %1765 = vmatprep.subr.mxu0 0.0
    %1766 = vmatpush1.msra.mxu0 0.0
    %1767 = vmatprep.subr.mxu0 0.0
    %1768 = vmatpush1.msra.mxu0 0.0
    %1769 = vmatprep.subr.mxu0 0.0
    %1770 = vmatpush1.msra.mxu0 0.0
    %1771 = vmatprep.subr.mxu0 0.0
    %1772 = vmatpush1.msra.mxu0 0.0
    %1773 = vmatprep.subr.mxu0 0.0
    %1774 = vmatpush1.msra.mxu0 0.0
    %1775 = vmatprep.subr.mxu0 0.0
    %1776 = vmatpush1.msra.mxu0 0.0
    %1777 = vmatprep.subr.mxu0 0.0
    %1778 = vmatpush1.msra.mxu0 0.0
    %1779 = vmatprep.subr.mxu0 0.0
    %1780 = vmatpush1.msra.mxu0 0.0
    %1781 = vmatprep.subr.mxu0 0.0
    %1782 = vmatpush1.msra.mxu0 %v1744
    %1783 = vmatprep.subr.mxu0 0.0
    %1784 = vmatpush2.msra.mxu0 0.0
    %1785 = vmatprep.subr.mxu0 0.0
    %1786 = vmatpush2.msra.mxu0 0.0
    %1787 = vmatprep.subr.mxu0 0.0
    %1788 = vmatpush2.msra.mxu0 0.0
    %1789 = vmatprep.subr.mxu0 0.0
    %1790 = vmatpush2.msra.mxu0 0.0
    %1791 = vmatprep.subr.mxu0 0.0
    %1792 = vmatpush2.msra.mxu0 0.0
    %1793 = vmatprep.subr.mxu0 0.0
    %1794 = vmatpush2.msra.mxu0 0.0
    %1795 = vmatprep.subr.mxu0 0.0
    %1796 = vmatpush2.msra.mxu0 0.0
    %1797 = vmatprep.subr.mxu0 0.0
    %1798 = vmatpush2.msra.mxu0 0.0
    %1799 = vmatprep.subr.mxu0 0.0
    %1800 = vmatpush2.msra.mxu0 0.0
    %1801 = vmatprep.subr.mxu0 0.0
    %1802 = vmatpush2.msra.mxu0 0.0
    %1803 = vmatprep.subr.mxu0 0.0
    %1804 = vmatpush2.msra.mxu0 0.0
    %1805 = vmatprep.subr.mxu0 0.0
    %1806 = vmatpush2.msra.mxu0 0.0
    %1807 = vmatprep.subr.mxu0 0.0
    %1808 = vmatpush2.msra.mxu0 0.0
    %1809 = vmatprep.subr.mxu0 0.0
    %1810 = vmatpush2.msra.mxu0 0.0
    %1811 = vmatprep.subr.mxu0 0.0
    %1812 = vmatpush2.msra.mxu0 0.0
    %1813 = vmatprep.subr.mxu0 0.0
    %1814 = vmatpush2.msra.mxu0 0.0
    %1815 = vmatprep.mubr.f32.mxu0 0.0
    %1816 = vmatmul.mubr.f32.gmra.mxu0 %v1746
    %v1817 = vpop.f32.mrf.mxu0
    %v1818 = vadd.f32 0.0, %v1817
    %v1819 = vpop.f32.mrf.mxu0
    %1820 = vmatprep.mubr.f32.mxu0 0.0
    %1821 = vmatmul.mubr.f32.gmra.mxu0 %v1749
    %v1822 = vpop.f32.mrf.mxu0
    %v1823 = vadd.f32 0.0, %v1822
    %v1824 = vpop.f32.mrf.mxu0
    %1825 = vdwg.mxu0
    %v1826 = vadd.f32 %v1412, %v1818
    %v1827 = vadd.f32 %v1413, %v1823
    %v1828 = vld [vmem:[%s5] sm:$0x1]
    %v1830 = vlaneseq
    %v1831 = vshrl.u32 %v1830, 7
    %v1832 = vsub.s32 0, %v1831
    %v1833 = vrot.slane %v1828, %v1832
    %v1835 = vadd.f32 %v1826, %v1833
    %v1836 = vadd.f32 %v1827, %v1833
    %v1837 = vadd.f32 %v48, %v1835
    %v1838 = vadd.f32 %v49, %v1836
    %v1839 = vld [vmem:[%s6] sm:$0x1]
    %v1840 = vld [vmem:[%s7] sm:$0x1]
    %v1841 = vsel %vm95, %v1837, 0.0
    %1842 = vadd.xlane.f32.xlu0 %v1841
    %v1843 = vpop.xlane.xlu0 %1842
    %v1844 = vsel %vm95, %v1838, 0.0
    %1845 = vadd.xlane.f32.xlu0 %v1844
    %v1846 = vpop.xlane.xlu0 %1845
    %v1847 = vrcp.pop 32.0
    %v1848 = vmul.f32 %v1843, %v1847
    %v1849 = vmul.f32 %v1846, %v1847
    %v1850 = vsub.f32 %v1837, %v1848
    %v1851 = vsub.f32 %v1838, %v1849
    %v1852 = vmul.f32 %v1850, %v1850
    %v1853 = vmul.f32 %v1851, %v1851
    %v1854 = vsel %vm95, %v1852, 0.0
    %1855 = vadd.xlane.f32.xlu0 %v1854
    %v1856 = vpop.xlane.xlu0 %1855
    %v1857 = vsel %vm95, %v1853, 0.0
    %1858 = vadd.xlane.f32.xlu0 %v1857
    %v1859 = vpop.xlane.xlu0 %1858
    %v1860 = vmul.f32 %v1856, %v1847
    %v1861 = vmul.f32 %v1859, %v1847
    %v1862 = vadd.f32 %v1860, 1e-05
    %v1863 = vadd.f32 %v1861, 1e-05
    %v1864 = vrsqrt.pop %v1862
    %v1865 = vrsqrt.pop %v1863
    %v1866 = vmul.f32 %v1850, %v1864
    %v1867 = vmul.f32 %v1851, %v1865
    %v1869 = vlaneseq
    %v1870 = vshrl.u32 %v1869, 7
    %v1871 = vsub.s32 0, %v1870
    %v1872 = vrot.slane %v1839, %v1871
    %v1874 = vmul.f32 %v1866, %v1872
    %v1875 = vmul.f32 %v1867, %v1872
    %v1877 = vlaneseq
    %v1878 = vshrl.u32 %v1877, 7
    %v1879 = vsub.s32 0, %v1878
    %v1880 = vrot.slane %v1840, %v1879
    %v1882 = vadd.f32 %v1874, %v1880
    %v1883 = vadd.f32 %v1875, %v1880
    %v1884 = vld [vmem:[%s10] sm:$0xff]
    %v1885 = vld [vmem:[%s10 + $0x8] sm:$0xff]
    %v1886 = vld [vmem:[%s10 + $0x10] sm:$0xff]
    %v1887 = vld [vmem:[%s10 + $0x18] sm:$0xff]
    %v1888 = vld [vmem:[%s10 + $0x20] sm:$0xff]
    %v1889 = vld [vmem:[%s10 + $0x28] sm:$0xff]
    %v1890 = vld [vmem:[%s10 + $0x30] sm:$0xff]
    %v1891 = vld [vmem:[%s10 + $0x38] sm:$0xff]
    %v1892 = vld [vmem:[%s10 + $0x40] sm:$0xff]
    %v1893 = vld [vmem:[%s10 + $0x48] sm:$0xff]
    %v1894 = vld [vmem:[%s10 + $0x50] sm:$0xff]
    %v1895 = vld [vmem:[%s10 + $0x58] sm:$0xff]
    %v1896 = vld [vmem:[%s10 + $0x60] sm:$0xff]
    %v1897 = vld [vmem:[%s10 + $0x68] sm:$0xff]
    %v1898 = vld [vmem:[%s10 + $0x70] sm:$0xff]
    %v1899 = vld [vmem:[%s10 + $0x78] sm:$0xff]
    %v1900 = vld [vmem:[%s11] sm:$0xf]
    %v1902 = vlaneseq
    %v1903 = vshrl.u32 %v1902, 7
    %v1904 = vsub.s32 0, %v1903
    %v1905 = vrot.slane %v1900, %v1904
    %v1906 = vlaneseq
    %v1907 = vshrl.u32 %v1906, 7
    %v1908 = vsub.s32 1, %v1907
    %v1909 = vrot.slane %v1900, %v1908
    %v1910 = vlaneseq
    %v1911 = vshrl.u32 %v1910, 7
    %v1912 = vsub.s32 2, %v1911
    %v1913 = vrot.slane %v1900, %v1912
    %v1914 = vlaneseq
    %v1915 = vshrl.u32 %v1914, 7
    %v1916 = vsub.s32 3, %v1915
    %v1917 = vrot.slane %v1900, %v1916
    %v1923 = vsel %vm95, %v1882, 0
    %v1926 = vsel %vm95, %v1883, 0
    %1928 = vmatprep.subr.mxu0 0.0
    %1929 = vmatpush1.msra.mxu0 0.0
    %1930 = vmatprep.subr.mxu0 0.0
    %1931 = vmatpush1.msra.mxu0 0.0
    %1932 = vmatprep.subr.mxu0 0.0
    %1933 = vmatpush1.msra.mxu0 0.0
    %1934 = vmatprep.subr.mxu0 0.0
    %1935 = vmatpush1.msra.mxu0 0.0
    %1936 = vmatprep.subr.mxu0 0.0
    %1937 = vmatpush1.msra.mxu0 0.0
    %1938 = vmatprep.subr.mxu0 0.0
    %1939 = vmatpush1.msra.mxu0 0.0
    %1940 = vmatprep.subr.mxu0 0.0
    %1941 = vmatpush1.msra.mxu0 0.0
    %1942 = vmatprep.subr.mxu0 0.0
    %1943 = vmatpush1.msra.mxu0 0.0
    %1944 = vmatprep.subr.mxu0 0.0
    %1945 = vmatpush1.msra.mxu0 0.0
    %1946 = vmatprep.subr.mxu0 0.0
    %1947 = vmatpush1.msra.mxu0 0.0
    %1948 = vmatprep.subr.mxu0 0.0
    %1949 = vmatpush1.msra.mxu0 0.0
    %1950 = vmatprep.subr.mxu0 0.0
    %1951 = vmatpush1.msra.mxu0 0.0
    %1952 = vmatprep.subr.mxu0 %v1897
    %1953 = vmatpush1.msra.mxu0 %v1896
    %1954 = vmatprep.subr.mxu0 %v1893
    %1955 = vmatpush1.msra.mxu0 %v1892
    %1956 = vmatprep.subr.mxu0 %v1889
    %1957 = vmatpush1.msra.mxu0 %v1888
    %1958 = vmatprep.subr.mxu0 %v1885
    %1959 = vmatpush1.msra.mxu0 %v1884
    %1960 = vmatprep.subr.mxu0 0.0
    %1961 = vmatpush2.msra.mxu0 0.0
    %1962 = vmatprep.subr.mxu0 0.0
    %1963 = vmatpush2.msra.mxu0 0.0
    %1964 = vmatprep.subr.mxu0 0.0
    %1965 = vmatpush2.msra.mxu0 0.0
    %1966 = vmatprep.subr.mxu0 0.0
    %1967 = vmatpush2.msra.mxu0 0.0
    %1968 = vmatprep.subr.mxu0 0.0
    %1969 = vmatpush2.msra.mxu0 0.0
    %1970 = vmatprep.subr.mxu0 0.0
    %1971 = vmatpush2.msra.mxu0 0.0
    %1972 = vmatprep.subr.mxu0 0.0
    %1973 = vmatpush2.msra.mxu0 0.0
    %1974 = vmatprep.subr.mxu0 0.0
    %1975 = vmatpush2.msra.mxu0 0.0
    %1976 = vmatprep.subr.mxu0 0.0
    %1977 = vmatpush2.msra.mxu0 0.0
    %1978 = vmatprep.subr.mxu0 0.0
    %1979 = vmatpush2.msra.mxu0 0.0
    %1980 = vmatprep.subr.mxu0 0.0
    %1981 = vmatpush2.msra.mxu0 0.0
    %1982 = vmatprep.subr.mxu0 0.0
    %1983 = vmatpush2.msra.mxu0 0.0
    %1984 = vmatprep.subr.mxu0 0.0
    %1985 = vmatpush2.msra.mxu0 0.0
    %1986 = vmatprep.subr.mxu0 0.0
    %1987 = vmatpush2.msra.mxu0 0.0
    %1988 = vmatprep.subr.mxu0 0.0
    %1989 = vmatpush2.msra.mxu0 0.0
    %1990 = vmatprep.subr.mxu0 0.0
    %1991 = vmatpush2.msra.mxu0 0.0
    %1992 = vmatprep.mubr.f32.mxu0 0.0
    %1993 = vmatmul.mubr.f32.gmra.mxu0 %v1923
    %v1994 = vpop.f32.mrf.mxu0
    %v1995 = vadd.f32 %v1905, %v1994
    %v1996 = vpop.f32.mrf.mxu0
    %v1997 = vadd.f32 %v1909, %v1996
    %1998 = vmatprep.mubr.f32.mxu0 0.0
    %1999 = vmatmul.mubr.f32.gmra.mxu0 %v1926
    %v2000 = vpop.f32.mrf.mxu0
    %v2001 = vadd.f32 %v1905, %v2000
    %v2002 = vpop.f32.mrf.mxu0
    %v2003 = vadd.f32 %v1909, %v2002
    %2004 = vdwg.mxu0
    %2005 = vmatprep.subr.mxu0 0.0
    %2006 = vmatpush1.msra.mxu0 0.0
    %2007 = vmatprep.subr.mxu0 0.0
    %2008 = vmatpush1.msra.mxu0 0.0
    %2009 = vmatprep.subr.mxu0 0.0
    %2010 = vmatpush1.msra.mxu0 0.0
    %2011 = vmatprep.subr.mxu0 0.0
    %2012 = vmatpush1.msra.mxu0 0.0
    %2013 = vmatprep.subr.mxu0 0.0
    %2014 = vmatpush1.msra.mxu0 0.0
    %2015 = vmatprep.subr.mxu0 0.0
    %2016 = vmatpush1.msra.mxu0 0.0
    %2017 = vmatprep.subr.mxu0 0.0
    %2018 = vmatpush1.msra.mxu0 0.0
    %2019 = vmatprep.subr.mxu0 0.0
    %2020 = vmatpush1.msra.mxu0 0.0
    %2021 = vmatprep.subr.mxu0 0.0
    %2022 = vmatpush1.msra.mxu0 0.0
    %2023 = vmatprep.subr.mxu0 0.0
    %2024 = vmatpush1.msra.mxu0 0.0
    %2025 = vmatprep.subr.mxu0 0.0
    %2026 = vmatpush1.msra.mxu0 0.0
    %2027 = vmatprep.subr.mxu0 0.0
    %2028 = vmatpush1.msra.mxu0 0.0
    %2029 = vmatprep.subr.mxu0 %v1899
    %2030 = vmatpush1.msra.mxu0 %v1898
    %2031 = vmatprep.subr.mxu0 %v1895
    %2032 = vmatpush1.msra.mxu0 %v1894
    %2033 = vmatprep.subr.mxu0 %v1891
    %2034 = vmatpush1.msra.mxu0 %v1890
    %2035 = vmatprep.subr.mxu0 %v1887
    %2036 = vmatpush1.msra.mxu0 %v1886
    %2037 = vmatprep.subr.mxu0 0.0
    %2038 = vmatpush2.msra.mxu0 0.0
    %2039 = vmatprep.subr.mxu0 0.0
    %2040 = vmatpush2.msra.mxu0 0.0
    %2041 = vmatprep.subr.mxu0 0.0
    %2042 = vmatpush2.msra.mxu0 0.0
    %2043 = vmatprep.subr.mxu0 0.0
    %2044 = vmatpush2.msra.mxu0 0.0
    %2045 = vmatprep.subr.mxu0 0.0
    %2046 = vmatpush2.msra.mxu0 0.0
    %2047 = vmatprep.subr.mxu0 0.0
    %2048 = vmatpush2.msra.mxu0 0.0
    %2049 = vmatprep.subr.mxu0 0.0
    %2050 = vmatpush2.msra.mxu0 0.0
    %2051 = vmatprep.subr.mxu0 0.0
    %2052 = vmatpush2.msra.mxu0 0.0
    %2053 = vmatprep.subr.mxu0 0.0
    %2054 = vmatpush2.msra.mxu0 0.0
    %2055 = vmatprep.subr.mxu0 0.0
    %2056 = vmatpush2.msra.mxu0 0.0
    %2057 = vmatprep.subr.mxu0 0.0
    %2058 = vmatpush2.msra.mxu0 0.0
    %2059 = vmatprep.subr.mxu0 0.0
    %2060 = vmatpush2.msra.mxu0 0.0
    %2061 = vmatprep.subr.mxu0 0.0
    %2062 = vmatpush2.msra.mxu0 0.0
    %2063 = vmatprep.subr.mxu0 0.0
    %2064 = vmatpush2.msra.mxu0 0.0
    %2065 = vmatprep.subr.mxu0 0.0
    %2066 = vmatpush2.msra.mxu0 0.0
    %2067 = vmatprep.subr.mxu0 0.0
    %2068 = vmatpush2.msra.mxu0 0.0
    %2069 = vmatprep.mubr.f32.mxu0 0.0
    %2070 = vmatmul.mubr.f32.gmra.mxu0 %v1923
    %v2071 = vpop.f32.mrf.mxu0
    %v2072 = vadd.f32 %v1913, %v2071
    %v2073 = vpop.f32.mrf.mxu0
    %v2074 = vadd.f32 %v1917, %v2073
    %2075 = vmatprep.mubr.f32.mxu0 0.0
    %2076 = vmatmul.mubr.f32.gmra.mxu0 %v1926
    %v2077 = vpop.f32.mrf.mxu0
    %v2078 = vadd.f32 %v1913, %v2077
    %v2079 = vpop.f32.mrf.mxu0
    %v2080 = vadd.f32 %v1917, %v2079
    %2081 = vdwg.mxu0
    %v2082 = vmax.f32 %v1995, 0.0
    %v2083 = vmax.f32 %v1997, 0.0
    %v2084 = vmax.f32 %v2072, 0.0
    %v2085 = vmax.f32 %v2074, 0.0
    %v2086 = vmax.f32 %v2001, 0.0
    %v2087 = vmax.f32 %v2003, 0.0
    %v2088 = vmax.f32 %v2078, 0.0
    %v2089 = vmax.f32 %v2080, 0.0
    %v2090 = vld [vmem:[%s12] sm:$0xff]
    %v2091 = vld [vmem:[%s12 + $0x8] sm:$0xff]
    %v2092 = vld [vmem:[%s12 + $0x10] sm:$0xff]
    %v2093 = vld [vmem:[%s12 + $0x18] sm:$0xff]
    %v2094 = vld [vmem:[%s12 + $0x20] sm:$0xff]
    %v2095 = vld [vmem:[%s12 + $0x28] sm:$0xff]
    %v2096 = vld [vmem:[%s12 + $0x30] sm:$0xff]
    %v2097 = vld [vmem:[%s12 + $0x38] sm:$0xff]
    %v2098 = vld [vmem:[%s12 + $0x40] sm:$0xff]
    %v2099 = vld [vmem:[%s12 + $0x48] sm:$0xff]
    %v2100 = vld [vmem:[%s12 + $0x50] sm:$0xff]
    %v2101 = vld [vmem:[%s12 + $0x58] sm:$0xff]
    %v2102 = vld [vmem:[%s12 + $0x60] sm:$0xff]
    %v2103 = vld [vmem:[%s12 + $0x68] sm:$0xff]
    %v2104 = vld [vmem:[%s12 + $0x70] sm:$0xff]
    %v2105 = vld [vmem:[%s12 + $0x78] sm:$0xff]
    %v2106 = vld [vmem:[%s12 + $0x80] sm:$0xff]
    %v2107 = vld [vmem:[%s12 + $0x88] sm:$0xff]
    %v2108 = vld [vmem:[%s12 + $0x90] sm:$0xff]
    %v2109 = vld [vmem:[%s12 + $0x98] sm:$0xff]
    %v2110 = vld [vmem:[%s12 + $0xa0] sm:$0xff]
    %v2111 = vld [vmem:[%s12 + $0xa8] sm:$0xff]
    %v2112 = vld [vmem:[%s12 + $0xb0] sm:$0xff]
    %v2113 = vld [vmem:[%s12 + $0xb8] sm:$0xff]
    %v2114 = vld [vmem:[%s12 + $0xc0] sm:$0xff]
    %v2115 = vld [vmem:[%s12 + $0xc8] sm:$0xff]
    %v2116 = vld [vmem:[%s12 + $0xd0] sm:$0xff]
    %v2117 = vld [vmem:[%s12 + $0xd8] sm:$0xff]
    %v2118 = vld [vmem:[%s12 + $0xe0] sm:$0xff]
    %v2119 = vld [vmem:[%s12 + $0xe8] sm:$0xff]
    %v2120 = vld [vmem:[%s12 + $0xf0] sm:$0xff]
    %v2121 = vld [vmem:[%s12 + $0xf8] sm:$0xff]
    %v2122 = vld [vmem:[%s12 + $0x100] sm:$0xff]
    %v2123 = vld [vmem:[%s12 + $0x108] sm:$0xff]
    %v2124 = vld [vmem:[%s12 + $0x110] sm:$0xff]
    %v2125 = vld [vmem:[%s12 + $0x118] sm:$0xff]
    %v2126 = vld [vmem:[%s12 + $0x120] sm:$0xff]
    %v2127 = vld [vmem:[%s12 + $0x128] sm:$0xff]
    %v2128 = vld [vmem:[%s12 + $0x130] sm:$0xff]
    %v2129 = vld [vmem:[%s12 + $0x138] sm:$0xff]
    %v2130 = vld [vmem:[%s12 + $0x140] sm:$0xff]
    %v2131 = vld [vmem:[%s12 + $0x148] sm:$0xff]
    %v2132 = vld [vmem:[%s12 + $0x150] sm:$0xff]
    %v2133 = vld [vmem:[%s12 + $0x158] sm:$0xff]
    %v2134 = vld [vmem:[%s12 + $0x160] sm:$0xff]
    %v2135 = vld [vmem:[%s12 + $0x168] sm:$0xff]
    %v2136 = vld [vmem:[%s12 + $0x170] sm:$0xff]
    %v2137 = vld [vmem:[%s12 + $0x178] sm:$0xff]
    %v2138 = vld [vmem:[%s12 + $0x180] sm:$0xff]
    %v2139 = vld [vmem:[%s12 + $0x188] sm:$0xff]
    %v2140 = vld [vmem:[%s12 + $0x190] sm:$0xff]
    %v2141 = vld [vmem:[%s12 + $0x198] sm:$0xff]
    %v2142 = vld [vmem:[%s12 + $0x1a0] sm:$0xff]
    %v2143 = vld [vmem:[%s12 + $0x1a8] sm:$0xff]
    %v2144 = vld [vmem:[%s12 + $0x1b0] sm:$0xff]
    %v2145 = vld [vmem:[%s12 + $0x1b8] sm:$0xff]
    %v2146 = vld [vmem:[%s12 + $0x1c0] sm:$0xff]
    %v2147 = vld [vmem:[%s12 + $0x1c8] sm:$0xff]
    %v2148 = vld [vmem:[%s12 + $0x1d0] sm:$0xff]
    %v2149 = vld [vmem:[%s12 + $0x1d8] sm:$0xff]
    %v2150 = vld [vmem:[%s12 + $0x1e0] sm:$0xff]
    %v2151 = vld [vmem:[%s12 + $0x1e8] sm:$0xff]
    %v2152 = vld [vmem:[%s12 + $0x1f0] sm:$0xff]
    %v2153 = vld [vmem:[%s12 + $0x1f8] sm:$0xff]
    %v2154 = vld [vmem:[%s13] sm:$0x1]
    %v2156 = vlaneseq
    %v2157 = vshrl.u32 %v2156, 7
    %v2158 = vsub.s32 0, %v2157
    %v2159 = vrot.slane %v2154, %v2158
    %2161 = vmatprep.subr.mxu0 0.0
    %2162 = vmatpush1.msra.mxu0 %v2105
    %2163 = vmatprep.subr.mxu0 0.0
    %2164 = vmatpush1.msra.mxu0 %v2104
    %2165 = vmatprep.subr.mxu0 0.0
    %2166 = vmatpush1.msra.mxu0 %v2103
    %2167 = vmatprep.subr.mxu0 0.0
    %2168 = vmatpush1.msra.mxu0 %v2102
    %2169 = vmatprep.subr.mxu0 0.0
    %2170 = vmatpush1.msra.mxu0 %v2101
    %2171 = vmatprep.subr.mxu0 0.0
    %2172 = vmatpush1.msra.mxu0 %v2100
    %2173 = vmatprep.subr.mxu0 0.0
    %2174 = vmatpush1.msra.mxu0 %v2099
    %2175 = vmatprep.subr.mxu0 0.0
    %2176 = vmatpush1.msra.mxu0 %v2098
    %2177 = vmatprep.subr.mxu0 0.0
    %2178 = vmatpush1.msra.mxu0 %v2097
    %2179 = vmatprep.subr.mxu0 0.0
    %2180 = vmatpush1.msra.mxu0 %v2096
    %2181 = vmatprep.subr.mxu0 0.0
    %2182 = vmatpush1.msra.mxu0 %v2095
    %2183 = vmatprep.subr.mxu0 0.0
    %2184 = vmatpush1.msra.mxu0 %v2094
    %2185 = vmatprep.subr.mxu0 0.0
    %2186 = vmatpush1.msra.mxu0 %v2093
    %2187 = vmatprep.subr.mxu0 0.0
    %2188 = vmatpush1.msra.mxu0 %v2092
    %2189 = vmatprep.subr.mxu0 0.0
    %2190 = vmatpush1.msra.mxu0 %v2091
    %2191 = vmatprep.subr.mxu0 0.0
    %2192 = vmatpush1.msra.mxu0 %v2090
    %2193 = vmatprep.subr.mxu0 0.0
    %2194 = vmatpush2.msra.mxu0 %v2121
    %2195 = vmatprep.subr.mxu0 0.0
    %2196 = vmatpush2.msra.mxu0 %v2120
    %2197 = vmatprep.subr.mxu0 0.0
    %2198 = vmatpush2.msra.mxu0 %v2119
    %2199 = vmatprep.subr.mxu0 0.0
    %2200 = vmatpush2.msra.mxu0 %v2118
    %2201 = vmatprep.subr.mxu0 0.0
    %2202 = vmatpush2.msra.mxu0 %v2117
    %2203 = vmatprep.subr.mxu0 0.0
    %2204 = vmatpush2.msra.mxu0 %v2116
    %2205 = vmatprep.subr.mxu0 0.0
    %2206 = vmatpush2.msra.mxu0 %v2115
    %2207 = vmatprep.subr.mxu0 0.0
    %2208 = vmatpush2.msra.mxu0 %v2114
    %2209 = vmatprep.subr.mxu0 0.0
    %2210 = vmatpush2.msra.mxu0 %v2113
    %2211 = vmatprep.subr.mxu0 0.0
    %2212 = vmatpush2.msra.mxu0 %v2112
    %2213 = vmatprep.subr.mxu0 0.0
    %2214 = vmatpush2.msra.mxu0 %v2111
    %2215 = vmatprep.subr.mxu0 0.0
    %2216 = vmatpush2.msra.mxu0 %v2110
    %2217 = vmatprep.subr.mxu0 0.0
    %2218 = vmatpush2.msra.mxu0 %v2109
    %2219 = vmatprep.subr.mxu0 0.0
    %2220 = vmatpush2.msra.mxu0 %v2108
    %2221 = vmatprep.subr.mxu0 0.0
    %2222 = vmatpush2.msra.mxu0 %v2107
    %2223 = vmatprep.subr.mxu0 0.0
    %2224 = vmatpush2.msra.mxu0 %v2106
    %2225 = vmatprep.mubr.f32.mxu0 %v2083
    %2226 = vmatmul.mubr.f32.gmra.mxu0 %v2082
    %v2227 = vpop.f32.mrf.mxu0
    %v2228 = vadd.f32 %v2159, %v2227
    %v2229 = vpop.f32.mrf.mxu0
    %2230 = vmatprep.mubr.f32.mxu0 %v2087
    %2231 = vmatmul.mubr.f32.gmra.mxu0 %v2086
    %v2232 = vpop.f32.mrf.mxu0
    %v2233 = vadd.f32 %v2159, %v2232
    %v2234 = vpop.f32.mrf.mxu0
    %2235 = vdwg.mxu0
    %2236 = vmatprep.subr.mxu0 0.0
    %2237 = vmatpush1.msra.mxu0 %v2137
    %2238 = vmatprep.subr.mxu0 0.0
    %2239 = vmatpush1.msra.mxu0 %v2136
    %2240 = vmatprep.subr.mxu0 0.0
    %2241 = vmatpush1.msra.mxu0 %v2135
    %2242 = vmatprep.subr.mxu0 0.0
    %2243 = vmatpush1.msra.mxu0 %v2134
    %2244 = vmatprep.subr.mxu0 0.0
    %2245 = vmatpush1.msra.mxu0 %v2133
    %2246 = vmatprep.subr.mxu0 0.0
    %2247 = vmatpush1.msra.mxu0 %v2132
    %2248 = vmatprep.subr.mxu0 0.0
    %2249 = vmatpush1.msra.mxu0 %v2131
    %2250 = vmatprep.subr.mxu0 0.0
    %2251 = vmatpush1.msra.mxu0 %v2130
    %2252 = vmatprep.subr.mxu0 0.0
    %2253 = vmatpush1.msra.mxu0 %v2129
    %2254 = vmatprep.subr.mxu0 0.0
    %2255 = vmatpush1.msra.mxu0 %v2128
    %2256 = vmatprep.subr.mxu0 0.0
    %2257 = vmatpush1.msra.mxu0 %v2127
    %2258 = vmatprep.subr.mxu0 0.0
    %2259 = vmatpush1.msra.mxu0 %v2126
    %2260 = vmatprep.subr.mxu0 0.0
    %2261 = vmatpush1.msra.mxu0 %v2125
    %2262 = vmatprep.subr.mxu0 0.0
    %2263 = vmatpush1.msra.mxu0 %v2124
    %2264 = vmatprep.subr.mxu0 0.0
    %2265 = vmatpush1.msra.mxu0 %v2123
    %2266 = vmatprep.subr.mxu0 0.0
    %2267 = vmatpush1.msra.mxu0 %v2122
    %2268 = vmatprep.subr.mxu0 0.0
    %2269 = vmatpush2.msra.mxu0 %v2153
    %2270 = vmatprep.subr.mxu0 0.0
    %2271 = vmatpush2.msra.mxu0 %v2152
    %2272 = vmatprep.subr.mxu0 0.0
    %2273 = vmatpush2.msra.mxu0 %v2151
    %2274 = vmatprep.subr.mxu0 0.0
    %2275 = vmatpush2.msra.mxu0 %v2150
    %2276 = vmatprep.subr.mxu0 0.0
    %2277 = vmatpush2.msra.mxu0 %v2149
    %2278 = vmatprep.subr.mxu0 0.0
    %2279 = vmatpush2.msra.mxu0 %v2148
    %2280 = vmatprep.subr.mxu0 0.0
    %2281 = vmatpush2.msra.mxu0 %v2147
    %2282 = vmatprep.subr.mxu0 0.0
    %2283 = vmatpush2.msra.mxu0 %v2146
    %2284 = vmatprep.subr.mxu0 0.0
    %2285 = vmatpush2.msra.mxu0 %v2145
    %2286 = vmatprep.subr.mxu0 0.0
    %2287 = vmatpush2.msra.mxu0 %v2144
    %2288 = vmatprep.subr.mxu0 0.0
    %2289 = vmatpush2.msra.mxu0 %v2143
    %2290 = vmatprep.subr.mxu0 0.0
    %2291 = vmatpush2.msra.mxu0 %v2142
    %2292 = vmatprep.subr.mxu0 0.0
    %2293 = vmatpush2.msra.mxu0 %v2141
    %2294 = vmatprep.subr.mxu0 0.0
    %2295 = vmatpush2.msra.mxu0 %v2140
    %2296 = vmatprep.subr.mxu0 0.0
    %2297 = vmatpush2.msra.mxu0 %v2139
    %2298 = vmatprep.subr.mxu0 0.0
    %2299 = vmatpush2.msra.mxu0 %v2138
    %2300 = vmatprep.mubr.f32.mxu0 %v2085
    %2301 = vmatmul.mubr.f32.gmra.mxu0 %v2084
    %v2302 = vpop.f32.mrf.mxu0
    %v2303 = vadd.f32 %v2228, %v2302
    %v2304 = vpop.f32.mrf.mxu0
    %2305 = vmatprep.mubr.f32.mxu0 %v2089
    %2306 = vmatmul.mubr.f32.gmra.mxu0 %v2088
    %v2307 = vpop.f32.mrf.mxu0
    %v2308 = vadd.f32 %v2233, %v2307
    %v2309 = vpop.f32.mrf.mxu0
    %2310 = vdwg.mxu0
    %v2311 = vadd.f32 %v1882, %v2303
    %v2312 = vadd.f32 %v1883, %v2308
    %v2313 = vld [vmem:[%s8] sm:$0x1]
    %v2314 = vld [vmem:[%s9] sm:$0x1]
    %v2315 = vsel %vm95, %v2311, 0.0
    %2316 = vadd.xlane.f32.xlu0 %v2315
    %v2317 = vpop.xlane.xlu0 %2316
    %v2318 = vsel %vm95, %v2312, 0.0
    %2319 = vadd.xlane.f32.xlu0 %v2318
    %v2320 = vpop.xlane.xlu0 %2319
    %v2321 = vmul.f32 %v2317, %v1847
    %v2322 = vmul.f32 %v2320, %v1847
    %v2323 = vsub.f32 %v2311, %v2321
    %v2324 = vsub.f32 %v2312, %v2322
    %v2325 = vmul.f32 %v2323, %v2323
    %v2326 = vmul.f32 %v2324, %v2324
    %v2327 = vsel %vm95, %v2325, 0.0
    %2328 = vadd.xlane.f32.xlu0 %v2327
    %v2329 = vpop.xlane.xlu0 %2328
    %v2330 = vsel %vm95, %v2326, 0.0
    %2331 = vadd.xlane.f32.xlu0 %v2330
    %v2332 = vpop.xlane.xlu0 %2331
    %v2333 = vmul.f32 %v2329, %v1847
    %v2334 = vmul.f32 %v2332, %v1847
    %v2335 = vadd.f32 %v2333, 1e-05
    %v2336 = vadd.f32 %v2334, 1e-05
    %v2337 = vrsqrt.pop %v2335
    %v2338 = vrsqrt.pop %v2336
    %v2339 = vmul.f32 %v2323, %v2337
    %v2340 = vmul.f32 %v2324, %v2338
    %v2342 = vlaneseq
    %v2343 = vshrl.u32 %v2342, 7
    %v2344 = vsub.s32 0, %v2343
    %v2345 = vrot.slane %v2313, %v2344
    %v2347 = vmul.f32 %v2339, %v2345
    %v2348 = vmul.f32 %v2340, %v2345
    %v2350 = vlaneseq
    %v2351 = vshrl.u32 %v2350, 7
    %v2352 = vsub.s32 0, %v2351
    %v2353 = vrot.slane %v2314, %v2352
    %v2355 = vadd.f32 %v2347, %v2353
    %v2356 = vadd.f32 %v2348, %v2353
    %s2357 = scalar_lea.vmem %s2, 32
    %v2358 = vld [vmem:[%s2357] sm:$0xff]
    %v2359 = vld [vmem:[%s2357 + $0x8] sm:$0xff]
    %v2360 = vld [vmem:[%s2357 + $0x10] sm:$0xff]
    %v2361 = vld [vmem:[%s2357 + $0x18] sm:$0xff]
    %s2362 = scalar_lea.vmem %s3, 1
    %v2363 = vld [vmem:[%s2362] sm:$0x1]
    %v2365 = vlaneseq
    %v2366 = vshrl.u32 %v2365, 7
    %v2367 = vsub.s32 0, %v2366
    %v2368 = vrot.slane %v2363, %v2367
    %v2371 = vsel %vm95, %v2355, 0
    %v2374 = vsel %vm95, %v2356, 0
    %2376 = vmatprep.subr.mxu0 0.0
    %2377 = vmatpush1.msra.mxu0 0.0
    %2378 = vmatprep.subr.mxu0 0.0
    %2379 = vmatpush1.msra.mxu0 0.0
    %2380 = vmatprep.subr.mxu0 0.0
    %2381 = vmatpush1.msra.mxu0 0.0
    %2382 = vmatprep.subr.mxu0 0.0
    %2383 = vmatpush1.msra.mxu0 0.0
    %2384 = vmatprep.subr.mxu0 0.0
    %2385 = vmatpush1.msra.mxu0 0.0
    %2386 = vmatprep.subr.mxu0 0.0
    %2387 = vmatpush1.msra.mxu0 0.0
    %2388 = vmatprep.subr.mxu0 0.0
    %2389 = vmatpush1.msra.mxu0 0.0
    %2390 = vmatprep.subr.mxu0 0.0
    %2391 = vmatpush1.msra.mxu0 0.0
    %2392 = vmatprep.subr.mxu0 0.0
    %2393 = vmatpush1.msra.mxu0 0.0
    %2394 = vmatprep.subr.mxu0 0.0
    %2395 = vmatpush1.msra.mxu0 0.0
    %2396 = vmatprep.subr.mxu0 0.0
    %2397 = vmatpush1.msra.mxu0 0.0
    %2398 = vmatprep.subr.mxu0 0.0
    %2399 = vmatpush1.msra.mxu0 0.0
    %2400 = vmatprep.subr.mxu0 0.0
    %2401 = vmatpush1.msra.mxu0 %v2361
    %2402 = vmatprep.subr.mxu0 0.0
    %2403 = vmatpush1.msra.mxu0 %v2360
    %2404 = vmatprep.subr.mxu0 0.0
    %2405 = vmatpush1.msra.mxu0 %v2359
    %2406 = vmatprep.subr.mxu0 0.0
    %2407 = vmatpush1.msra.mxu0 %v2358
    %2408 = vmatprep.subr.mxu0 0.0
    %2409 = vmatpush2.msra.mxu0 0.0
    %2410 = vmatprep.subr.mxu0 0.0
    %2411 = vmatpush2.msra.mxu0 0.0
    %2412 = vmatprep.subr.mxu0 0.0
    %2413 = vmatpush2.msra.mxu0 0.0
    %2414 = vmatprep.subr.mxu0 0.0
    %2415 = vmatpush2.msra.mxu0 0.0
    %2416 = vmatprep.subr.mxu0 0.0
    %2417 = vmatpush2.msra.mxu0 0.0
    %2418 = vmatprep.subr.mxu0 0.0
    %2419 = vmatpush2.msra.mxu0 0.0
    %2420 = vmatprep.subr.mxu0 0.0
    %2421 = vmatpush2.msra.mxu0 0.0
    %2422 = vmatprep.subr.mxu0 0.0
    %2423 = vmatpush2.msra.mxu0 0.0
    %2424 = vmatprep.subr.mxu0 0.0
    %2425 = vmatpush2.msra.mxu0 0.0
    %2426 = vmatprep.subr.mxu0 0.0
    %2427 = vmatpush2.msra.mxu0 0.0
    %2428 = vmatprep.subr.mxu0 0.0
    %2429 = vmatpush2.msra.mxu0 0.0
    %2430 = vmatprep.subr.mxu0 0.0
    %2431 = vmatpush2.msra.mxu0 0.0
    %2432 = vmatprep.subr.mxu0 0.0
    %2433 = vmatpush2.msra.mxu0 0.0
    %2434 = vmatprep.subr.mxu0 0.0
    %2435 = vmatpush2.msra.mxu0 0.0
    %2436 = vmatprep.subr.mxu0 0.0
    %2437 = vmatpush2.msra.mxu0 0.0
    %2438 = vmatprep.subr.mxu0 0.0
    %2439 = vmatpush2.msra.mxu0 0.0
    %2440 = vmatprep.mubr.f32.mxu0 0.0
    %2441 = vmatmul.mubr.f32.gmra.mxu0 %v2371
    %v2442 = vpop.f32.mrf.mxu0
    %v2443 = vadd.f32 %v2368, %v2442
    %v2444 = vpop.f32.mrf.mxu0
    %2445 = vmatprep.mubr.f32.mxu0 0.0
    %2446 = vmatmul.mubr.f32.gmra.mxu0 %v2374
    %v2447 = vpop.f32.mrf.mxu0
    %v2448 = vadd.f32 %v2368, %v2447
    %v2449 = vpop.f32.mrf.mxu0
    %2450 = vdwg.mxu0
    %2452 = vrot.lane.b32.xlu0 %v2443, 96
    %v2453 = vpop.permute.xlu0 %2452
    %v2454 = vsel %vm180, %v2443, 0
    %v2456 = vsel %vm180, %v2453, 0
    %2458 = vmatprep.subr.mxu0 0.0
    %2459 = vmatpush1.xpose.msra.mxu0 0.0
    %2460 = vmatprep.subr.mxu0 0.0
    %2461 = vmatpush1.xpose.msra.mxu0 0.0
    %2462 = vmatprep.subr.mxu0 0.0
    %2463 = vmatpush1.xpose.msra.mxu0 0.0
    %2464 = vmatprep.subr.mxu0 0.0
    %2465 = vmatpush1.xpose.msra.mxu0 0.0
    %2466 = vmatprep.subr.mxu0 0.0
    %2467 = vmatpush1.xpose.msra.mxu0 0.0
    %2468 = vmatprep.subr.mxu0 0.0
    %2469 = vmatpush1.xpose.msra.mxu0 0.0
    %2470 = vmatprep.subr.mxu0 0.0
    %2471 = vmatpush1.xpose.msra.mxu0 0.0
    %2472 = vmatprep.subr.mxu0 0.0
    %2473 = vmatpush1.xpose.msra.mxu0 0.0
    %2474 = vmatprep.subr.mxu0 0.0
    %2475 = vmatpush1.xpose.msra.mxu0 0.0
    %2476 = vmatprep.subr.mxu0 0.0
    %2477 = vmatpush1.xpose.msra.mxu0 0.0
    %2478 = vmatprep.subr.mxu0 0.0
    %2479 = vmatpush1.xpose.msra.mxu0 0.0
    %2480 = vmatprep.subr.mxu0 0.0
    %2481 = vmatpush1.xpose.msra.mxu0 0.0
    %2482 = vmatprep.subr.mxu0 0.0
    %2483 = vmatpush1.xpose.msra.mxu0 0.0
    %2484 = vmatprep.subr.mxu0 0.0
    %2485 = vmatpush1.xpose.msra.mxu0 0.0
    %2486 = vmatprep.subr.mxu0 0.0
    %2487 = vmatpush1.xpose.msra.mxu0 0.0
    %2488 = vmatprep.subr.mxu0 0.0
    %2489 = vmatpush1.xpose.msra.mxu0 %v2456
    %2490 = vmatprep.subr.mxu0 0.0
    %2491 = vmatpush2.xpose.msra.mxu0 0.0
    %2492 = vmatprep.subr.mxu0 0.0
    %2493 = vmatpush2.xpose.msra.mxu0 0.0
    %2494 = vmatprep.subr.mxu0 0.0
    %2495 = vmatpush2.xpose.msra.mxu0 0.0
    %2496 = vmatprep.subr.mxu0 0.0
    %2497 = vmatpush2.xpose.msra.mxu0 0.0
    %2498 = vmatprep.subr.mxu0 0.0
    %2499 = vmatpush2.xpose.msra.mxu0 0.0
    %2500 = vmatprep.subr.mxu0 0.0
    %2501 = vmatpush2.xpose.msra.mxu0 0.0
    %2502 = vmatprep.subr.mxu0 0.0
    %2503 = vmatpush2.xpose.msra.mxu0 0.0
    %2504 = vmatprep.subr.mxu0 0.0
    %2505 = vmatpush2.xpose.msra.mxu0 0.0
    %2506 = vmatprep.subr.mxu0 0.0
    %2507 = vmatpush2.xpose.msra.mxu0 0.0
    %2508 = vmatprep.subr.mxu0 0.0
    %2509 = vmatpush2.xpose.msra.mxu0 0.0
    %2510 = vmatprep.subr.mxu0 0.0
    %2511 = vmatpush2.xpose.msra.mxu0 0.0
    %2512 = vmatprep.subr.mxu0 0.0
    %2513 = vmatpush2.xpose.msra.mxu0 0.0
    %2514 = vmatprep.subr.mxu0 0.0
    %2515 = vmatpush2.xpose.msra.mxu0 0.0
    %2516 = vmatprep.subr.mxu0 0.0
    %2517 = vmatpush2.xpose.msra.mxu0 0.0
    %2518 = vmatprep.subr.mxu0 0.0
    %2519 = vmatpush2.xpose.msra.mxu0 0.0
    %2520 = vmatprep.subr.mxu0 0.0
    %2521 = vmatpush2.xpose.msra.mxu0 0.0
    %2522 = vmatprep.mubr.f32.mxu0 0.0
    %2523 = vmatmul.mubr.f32.gmra.mxu0 %v2454
    %v2524 = vpop.f32.mrf.mxu0
    %v2525 = vadd.f32 %v77, %v2524
    %v2526 = vpop.f32.mrf.mxu0
    %2527 = vdwg.mxu0
    %2529 = vrot.lane.b32.xlu0 %v2448, 96
    %v2530 = vpop.permute.xlu0 %2529
    %v2531 = vsel %vm180, %v2448, 0
    %v2533 = vsel %vm180, %v2530, 0
    %2535 = vmatprep.subr.mxu0 0.0
    %2536 = vmatpush1.xpose.msra.mxu0 0.0
    %2537 = vmatprep.subr.mxu0 0.0
    %2538 = vmatpush1.xpose.msra.mxu0 0.0
    %2539 = vmatprep.subr.mxu0 0.0
    %2540 = vmatpush1.xpose.msra.mxu0 0.0
    %2541 = vmatprep.subr.mxu0 0.0
    %2542 = vmatpush1.xpose.msra.mxu0 0.0
    %2543 = vmatprep.subr.mxu0 0.0
    %2544 = vmatpush1.xpose.msra.mxu0 0.0
    %2545 = vmatprep.subr.mxu0 0.0
    %2546 = vmatpush1.xpose.msra.mxu0 0.0
    %2547 = vmatprep.subr.mxu0 0.0
    %2548 = vmatpush1.xpose.msra.mxu0 0.0
    %2549 = vmatprep.subr.mxu0 0.0
    %2550 = vmatpush1.xpose.msra.mxu0 0.0
    %2551 = vmatprep.subr.mxu0 0.0
    %2552 = vmatpush1.xpose.msra.mxu0 0.0
    %2553 = vmatprep.subr.mxu0 0.0
    %2554 = vmatpush1.xpose.msra.mxu0 0.0
    %2555 = vmatprep.subr.mxu0 0.0
    %2556 = vmatpush1.xpose.msra.mxu0 0.0
    %2557 = vmatprep.subr.mxu0 0.0
    %2558 = vmatpush1.xpose.msra.mxu0 0.0
    %2559 = vmatprep.subr.mxu0 0.0
    %2560 = vmatpush1.xpose.msra.mxu0 0.0
    %2561 = vmatprep.subr.mxu0 0.0
    %2562 = vmatpush1.xpose.msra.mxu0 0.0
    %2563 = vmatprep.subr.mxu0 0.0
    %2564 = vmatpush1.xpose.msra.mxu0 0.0
    %2565 = vmatprep.subr.mxu0 0.0
    %2566 = vmatpush1.xpose.msra.mxu0 %v2533
    %2567 = vmatprep.subr.mxu0 0.0
    %2568 = vmatpush2.xpose.msra.mxu0 0.0
    %2569 = vmatprep.subr.mxu0 0.0
    %2570 = vmatpush2.xpose.msra.mxu0 0.0
    %2571 = vmatprep.subr.mxu0 0.0
    %2572 = vmatpush2.xpose.msra.mxu0 0.0
    %2573 = vmatprep.subr.mxu0 0.0
    %2574 = vmatpush2.xpose.msra.mxu0 0.0
    %2575 = vmatprep.subr.mxu0 0.0
    %2576 = vmatpush2.xpose.msra.mxu0 0.0
    %2577 = vmatprep.subr.mxu0 0.0
    %2578 = vmatpush2.xpose.msra.mxu0 0.0
    %2579 = vmatprep.subr.mxu0 0.0
    %2580 = vmatpush2.xpose.msra.mxu0 0.0
    %2581 = vmatprep.subr.mxu0 0.0
    %2582 = vmatpush2.xpose.msra.mxu0 0.0
    %2583 = vmatprep.subr.mxu0 0.0
    %2584 = vmatpush2.xpose.msra.mxu0 0.0
    %2585 = vmatprep.subr.mxu0 0.0
    %2586 = vmatpush2.xpose.msra.mxu0 0.0
    %2587 = vmatprep.subr.mxu0 0.0
    %2588 = vmatpush2.xpose.msra.mxu0 0.0
    %2589 = vmatprep.subr.mxu0 0.0
    %2590 = vmatpush2.xpose.msra.mxu0 0.0
    %2591 = vmatprep.subr.mxu0 0.0
    %2592 = vmatpush2.xpose.msra.mxu0 0.0
    %2593 = vmatprep.subr.mxu0 0.0
    %2594 = vmatpush2.xpose.msra.mxu0 0.0
    %2595 = vmatprep.subr.mxu0 0.0
    %2596 = vmatpush2.xpose.msra.mxu0 0.0
    %2597 = vmatprep.subr.mxu0 0.0
    %2598 = vmatpush2.xpose.msra.mxu0 0.0
    %2599 = vmatprep.mubr.f32.mxu0 0.0
    %2600 = vmatmul.mubr.f32.gmra.mxu0 %v2531
    %v2601 = vpop.f32.mrf.mxu0
    %v2602 = vadd.f32 %v81, %v2601
    %v2603 = vpop.f32.mrf.mxu0
    %2604 = vdwg.mxu0
    %v2605 = vsel %vm180, %v2525, -inf
    %2606 = vmax.xlane.f32.xlu0 %v2605
    %v2607 = vpop.xlane.xlu0 %2606
    %v2608 = vsel %vm180, %v2602, -inf
    %2609 = vmax.xlane.f32.xlu0 %v2608
    %v2610 = vpop.xlane.xlu0 %2609
    %v2611 = vsub.f32 %v2525, %v2607
    %v2612 = vsub.f32 %v2602, %v2610
    %v2613 = vmul.f32 %v2611, 1.442695
    %v2614 = vpow.pop %v2613
    %v2615 = vmul.f32 %v2612, 1.442695
    %v2616 = vpow.pop %v2615
    %v2617 = vsel %vm180, %v2614, 0.0
    %2618 = vadd.xlane.f32.xlu0 %v2617
    %v2619 = vpop.xlane.xlu0 %2618
    %v2620 = vsel %vm180, %v2616, 0.0
    %2621 = vadd.xlane.f32.xlu0 %v2620
    %v2622 = vpop.xlane.xlu0 %2621
    %v2623 = vrcp.pop %v2619
    %v2624 = vrcp.pop %v2622
    %v2625 = vmul.f32 %v2614, %v2623
    %v2626 = vmul.f32 %v2616, %v2624
    %2627 = vrot.lane.b32.xlu0 %v2443, 64
    %v2628 = vpop.permute.xlu0 %2627
    %v2631 = vsel %vm180, %v2625, 0
    %2633 = vmatprep.subr.mxu0 0.0
    %2634 = vmatpush1.msra.mxu0 0.0
    %2635 = vmatprep.subr.mxu0 0.0
    %2636 = vmatpush1.msra.mxu0 0.0
    %2637 = vmatprep.subr.mxu0 0.0
    %2638 = vmatpush1.msra.mxu0 0.0
    %2639 = vmatprep.subr.mxu0 0.0
    %2640 = vmatpush1.msra.mxu0 0.0
    %2641 = vmatprep.subr.mxu0 0.0
    %2642 = vmatpush1.msra.mxu0 0.0
    %2643 = vmatprep.subr.mxu0 0.0
    %2644 = vmatpush1.msra.mxu0 0.0
    %2645 = vmatprep.subr.mxu0 0.0
    %2646 = vmatpush1.msra.mxu0 0.0
    %2647 = vmatprep.subr.mxu0 0.0
    %2648 = vmatpush1.msra.mxu0 0.0
    %2649 = vmatprep.subr.mxu0 0.0
    %2650 = vmatpush1.msra.mxu0 0.0
    %2651 = vmatprep.subr.mxu0 0.0
    %2652 = vmatpush1.msra.mxu0 0.0
    %2653 = vmatprep.subr.mxu0 0.0
    %2654 = vmatpush1.msra.mxu0 0.0
    %2655 = vmatprep.subr.mxu0 0.0
    %2656 = vmatpush1.msra.mxu0 0.0
    %2657 = vmatprep.subr.mxu0 0.0
    %2658 = vmatpush1.msra.mxu0 0.0
    %2659 = vmatprep.subr.mxu0 0.0
    %2660 = vmatpush1.msra.mxu0 0.0
    %2661 = vmatprep.subr.mxu0 0.0
    %2662 = vmatpush1.msra.mxu0 0.0
    %2663 = vmatprep.subr.mxu0 0.0
    %2664 = vmatpush1.msra.mxu0 %v2628
    %2665 = vmatprep.subr.mxu0 0.0
    %2666 = vmatpush2.msra.mxu0 0.0
    %2667 = vmatprep.subr.mxu0 0.0
    %2668 = vmatpush2.msra.mxu0 0.0
    %2669 = vmatprep.subr.mxu0 0.0
    %2670 = vmatpush2.msra.mxu0 0.0
    %2671 = vmatprep.subr.mxu0 0.0
    %2672 = vmatpush2.msra.mxu0 0.0
    %2673 = vmatprep.subr.mxu0 0.0
    %2674 = vmatpush2.msra.mxu0 0.0
    %2675 = vmatprep.subr.mxu0 0.0
    %2676 = vmatpush2.msra.mxu0 0.0
    %2677 = vmatprep.subr.mxu0 0.0
    %2678 = vmatpush2.msra.mxu0 0.0
    %2679 = vmatprep.subr.mxu0 0.0
    %2680 = vmatpush2.msra.mxu0 0.0
    %2681 = vmatprep.subr.mxu0 0.0
    %2682 = vmatpush2.msra.mxu0 0.0
    %2683 = vmatprep.subr.mxu0 0.0
    %2684 = vmatpush2.msra.mxu0 0.0
    %2685 = vmatprep.subr.mxu0 0.0
    %2686 = vmatpush2.msra.mxu0 0.0
    %2687 = vmatprep.subr.mxu0 0.0
    %2688 = vmatpush2.msra.mxu0 0.0
    %2689 = vmatprep.subr.mxu0 0.0
    %2690 = vmatpush2.msra.mxu0 0.0
    %2691 = vmatprep.subr.mxu0 0.0
    %2692 = vmatpush2.msra.mxu0 0.0
    %2693 = vmatprep.subr.mxu0 0.0
    %2694 = vmatpush2.msra.mxu0 0.0
    %2695 = vmatprep.subr.mxu0 0.0
    %2696 = vmatpush2.msra.mxu0 0.0
    %2697 = vmatprep.mubr.f32.mxu0 0.0
    %2698 = vmatmul.mubr.f32.gmra.mxu0 %v2631
    %v2699 = vpop.f32.mrf.mxu0
    %v2700 = vadd.f32 0.0, %v2699
    %v2701 = vpop.f32.mrf.mxu0
    %2702 = vdwg.mxu0
    %2703 = vrot.lane.b32.xlu0 %v2448, 64
    %v2704 = vpop.permute.xlu0 %2703
    %v2707 = vsel %vm180, %v2626, 0
    %2709 = vmatprep.subr.mxu0 0.0
    %2710 = vmatpush1.msra.mxu0 0.0
    %2711 = vmatprep.subr.mxu0 0.0
    %2712 = vmatpush1.msra.mxu0 0.0
    %2713 = vmatprep.subr.mxu0 0.0
    %2714 = vmatpush1.msra.mxu0 0.0
    %2715 = vmatprep.subr.mxu0 0.0
    %2716 = vmatpush1.msra.mxu0 0.0
    %2717 = vmatprep.subr.mxu0 0.0
    %2718 = vmatpush1.msra.mxu0 0.0
    %2719 = vmatprep.subr.mxu0 0.0
    %2720 = vmatpush1.msra.mxu0 0.0
    %2721 = vmatprep.subr.mxu0 0.0
    %2722 = vmatpush1.msra.mxu0 0.0
    %2723 = vmatprep.subr.mxu0 0.0
    %2724 = vmatpush1.msra.mxu0 0.0
    %2725 = vmatprep.subr.mxu0 0.0
    %2726 = vmatpush1.msra.mxu0 0.0
    %2727 = vmatprep.subr.mxu0 0.0
    %2728 = vmatpush1.msra.mxu0 0.0
    %2729 = vmatprep.subr.mxu0 0.0
    %2730 = vmatpush1.msra.mxu0 0.0
    %2731 = vmatprep.subr.mxu0 0.0
    %2732 = vmatpush1.msra.mxu0 0.0
    %2733 = vmatprep.subr.mxu0 0.0
    %2734 = vmatpush1.msra.mxu0 0.0
    %2735 = vmatprep.subr.mxu0 0.0
    %2736 = vmatpush1.msra.mxu0 0.0
    %2737 = vmatprep.subr.mxu0 0.0
    %2738 = vmatpush1.msra.mxu0 0.0
    %2739 = vmatprep.subr.mxu0 0.0
    %2740 = vmatpush1.msra.mxu0 %v2704
    %2741 = vmatprep.subr.mxu0 0.0
    %2742 = vmatpush2.msra.mxu0 0.0
    %2743 = vmatprep.subr.mxu0 0.0
    %2744 = vmatpush2.msra.mxu0 0.0
    %2745 = vmatprep.subr.mxu0 0.0
    %2746 = vmatpush2.msra.mxu0 0.0
    %2747 = vmatprep.subr.mxu0 0.0
    %2748 = vmatpush2.msra.mxu0 0.0
    %2749 = vmatprep.subr.mxu0 0.0
    %2750 = vmatpush2.msra.mxu0 0.0
    %2751 = vmatprep.subr.mxu0 0.0
    %2752 = vmatpush2.msra.mxu0 0.0
    %2753 = vmatprep.subr.mxu0 0.0
    %2754 = vmatpush2.msra.mxu0 0.0
    %2755 = vmatprep.subr.mxu0 0.0
    %2756 = vmatpush2.msra.mxu0 0.0
    %2757 = vmatprep.subr.mxu0 0.0
    %2758 = vmatpush2.msra.mxu0 0.0
    %2759 = vmatprep.subr.mxu0 0.0
    %2760 = vmatpush2.msra.mxu0 0.0
    %2761 = vmatprep.subr.mxu0 0.0
    %2762 = vmatpush2.msra.mxu0 0.0
    %2763 = vmatprep.subr.mxu0 0.0
    %2764 = vmatpush2.msra.mxu0 0.0
    %2765 = vmatprep.subr.mxu0 0.0
    %2766 = vmatpush2.msra.mxu0 0.0
    %2767 = vmatprep.subr.mxu0 0.0
    %2768 = vmatpush2.msra.mxu0 0.0
    %2769 = vmatprep.subr.mxu0 0.0
    %2770 = vmatpush2.msra.mxu0 0.0
    %2771 = vmatprep.subr.mxu0 0.0
    %2772 = vmatpush2.msra.mxu0 0.0
    %2773 = vmatprep.mubr.f32.mxu0 0.0
    %2774 = vmatmul.mubr.f32.gmra.mxu0 %v2707
    %v2775 = vpop.f32.mrf.mxu0
    %v2776 = vadd.f32 0.0, %v2775
    %v2777 = vpop.f32.mrf.mxu0
    %2778 = vdwg.mxu0
    %s2779 = scalar_lea.vmem %s4, 32
    %v2780 = vld [vmem:[%s2779] sm:$0xff]
    %2781 = vrot.lane.b32.xlu0 %v2443, 120
    %v2782 = vpop.permute.xlu0 %2781
    %2783 = vrot.lane.b32.xlu0 %v2443, 88
    %v2784 = vpop.permute.xlu0 %2783
    %v2785 = vsel %vm180, %v2782, 0
    %v2787 = vsel %vm180, %v2784, 0
    %2789 = vmatprep.subr.mxu0 0.0
    %2790 = vmatpush1.xpose.msra.mxu0 0.0
    %2791 = vmatprep.subr.mxu0 0.0
    %2792 = vmatpush1.xpose.msra.mxu0 0.0
    %2793 = vmatprep.subr.mxu0 0.0
    %2794 = vmatpush1.xpose.msra.mxu0 0.0
    %2795 = vmatprep.subr.mxu0 0.0
    %2796 = vmatpush1.xpose.msra.mxu0 0.0
    %2797 = vmatprep.subr.mxu0 0.0
    %2798 = vmatpush1.xpose.msra.mxu0 0.0
    %2799 = vmatprep.subr.mxu0 0.0
    %2800 = vmatpush1.xpose.msra.mxu0 0.0
    %2801 = vmatprep.subr.mxu0 0.0
    %2802 = vmatpush1.xpose.msra.mxu0 0.0
    %2803 = vmatprep.subr.mxu0 0.0
    %2804 = vmatpush1.xpose.msra.mxu0 0.0
    %2805 = vmatprep.subr.mxu0 0.0
    %2806 = vmatpush1.xpose.msra.mxu0 0.0
    %2807 = vmatprep.subr.mxu0 0.0
    %2808 = vmatpush1.xpose.msra.mxu0 0.0
    %2809 = vmatprep.subr.mxu0 0.0
    %2810 = vmatpush1.xpose.msra.mxu0 0.0
    %2811 = vmatprep.subr.mxu0 0.0
    %2812 = vmatpush1.xpose.msra.mxu0 0.0
    %2813 = vmatprep.subr.mxu0 0.0
    %2814 = vmatpush1.xpose.msra.mxu0 0.0
    %2815 = vmatprep.subr.mxu0 0.0
    %2816 = vmatpush1.xpose.msra.mxu0 0.0
    %2817 = vmatprep.subr.mxu0 0.0
    %2818 = vmatpush1.xpose.msra.mxu0 0.0
    %2819 = vmatprep.subr.mxu0 0.0
    %2820 = vmatpush1.xpose.msra.mxu0 %v2787
    %2821 = vmatprep.subr.mxu0 0.0
    %2822 = vmatpush2.xpose.msra.mxu0 0.0
    %2823 = vmatprep.subr.mxu0 0.0
    %2824 = vmatpush2.xpose.msra.mxu0 0.0
    %2825 = vmatprep.subr.mxu0 0.0
    %2826 = vmatpush2.xpose.msra.mxu0 0.0
    %2827 = vmatprep.subr.mxu0 0.0
    %2828 = vmatpush2.xpose.msra.mxu0 0.0
    %2829 = vmatprep.subr.mxu0 0.0
    %2830 = vmatpush2.xpose.msra.mxu0 0.0
    %2831 = vmatprep.subr.mxu0 0.0
    %2832 = vmatpush2.xpose.msra.mxu0 0.0
    %2833 = vmatprep.subr.mxu0 0.0
    %2834 = vmatpush2.xpose.msra.mxu0 0.0
    %2835 = vmatprep.subr.mxu0 0.0
    %2836 = vmatpush2.xpose.msra.mxu0 0.0
    %2837 = vmatprep.subr.mxu0 0.0
    %2838 = vmatpush2.xpose.msra.mxu0 0.0
    %2839 = vmatprep.subr.mxu0 0.0
    %2840 = vmatpush2.xpose.msra.mxu0 0.0
    %2841 = vmatprep.subr.mxu0 0.0
    %2842 = vmatpush2.xpose.msra.mxu0 0.0
    %2843 = vmatprep.subr.mxu0 0.0
    %2844 = vmatpush2.xpose.msra.mxu0 0.0
    %2845 = vmatprep.subr.mxu0 0.0
    %2846 = vmatpush2.xpose.msra.mxu0 0.0
    %2847 = vmatprep.subr.mxu0 0.0
    %2848 = vmatpush2.xpose.msra.mxu0 0.0
    %2849 = vmatprep.subr.mxu0 0.0
    %2850 = vmatpush2.xpose.msra.mxu0 0.0
    %2851 = vmatprep.subr.mxu0 0.0
    %2852 = vmatpush2.xpose.msra.mxu0 0.0
    %2853 = vmatprep.mubr.f32.mxu0 0.0
    %2854 = vmatmul.mubr.f32.gmra.mxu0 %v2785
    %v2855 = vpop.f32.mrf.mxu0
    %v2856 = vadd.f32 %v77, %v2855
    %v2857 = vpop.f32.mrf.mxu0
    %2858 = vdwg.mxu0
    %2859 = vrot.lane.b32.xlu0 %v2448, 120
    %v2860 = vpop.permute.xlu0 %2859
    %2861 = vrot.lane.b32.xlu0 %v2448, 88
    %v2862 = vpop.permute.xlu0 %2861
    %v2863 = vsel %vm180, %v2860, 0
    %v2865 = vsel %vm180, %v2862, 0
    %2867 = vmatprep.subr.mxu0 0.0
    %2868 = vmatpush1.xpose.msra.mxu0 0.0
    %2869 = vmatprep.subr.mxu0 0.0
    %2870 = vmatpush1.xpose.msra.mxu0 0.0
    %2871 = vmatprep.subr.mxu0 0.0
    %2872 = vmatpush1.xpose.msra.mxu0 0.0
    %2873 = vmatprep.subr.mxu0 0.0
    %2874 = vmatpush1.xpose.msra.mxu0 0.0
    %2875 = vmatprep.subr.mxu0 0.0
    %2876 = vmatpush1.xpose.msra.mxu0 0.0
    %2877 = vmatprep.subr.mxu0 0.0
    %2878 = vmatpush1.xpose.msra.mxu0 0.0
    %2879 = vmatprep.subr.mxu0 0.0
    %2880 = vmatpush1.xpose.msra.mxu0 0.0
    %2881 = vmatprep.subr.mxu0 0.0
    %2882 = vmatpush1.xpose.msra.mxu0 0.0
    %2883 = vmatprep.subr.mxu0 0.0
    %2884 = vmatpush1.xpose.msra.mxu0 0.0
    %2885 = vmatprep.subr.mxu0 0.0
    %2886 = vmatpush1.xpose.msra.mxu0 0.0
    %2887 = vmatprep.subr.mxu0 0.0
    %2888 = vmatpush1.xpose.msra.mxu0 0.0
    %2889 = vmatprep.subr.mxu0 0.0
    %2890 = vmatpush1.xpose.msra.mxu0 0.0
    %2891 = vmatprep.subr.mxu0 0.0
    %2892 = vmatpush1.xpose.msra.mxu0 0.0
    %2893 = vmatprep.subr.mxu0 0.0
    %2894 = vmatpush1.xpose.msra.mxu0 0.0
    %2895 = vmatprep.subr.mxu0 0.0
    %2896 = vmatpush1.xpose.msra.mxu0 0.0
    %2897 = vmatprep.subr.mxu0 0.0
    %2898 = vmatpush1.xpose.msra.mxu0 %v2865
    %2899 = vmatprep.subr.mxu0 0.0
    %2900 = vmatpush2.xpose.msra.mxu0 0.0
    %2901 = vmatprep.subr.mxu0 0.0
    %2902 = vmatpush2.xpose.msra.mxu0 0.0
    %2903 = vmatprep.subr.mxu0 0.0
    %2904 = vmatpush2.xpose.msra.mxu0 0.0
    %2905 = vmatprep.subr.mxu0 0.0
    %2906 = vmatpush2.xpose.msra.mxu0 0.0
    %2907 = vmatprep.subr.mxu0 0.0
    %2908 = vmatpush2.xpose.msra.mxu0 0.0
    %2909 = vmatprep.subr.mxu0 0.0
    %2910 = vmatpush2.xpose.msra.mxu0 0.0
    %2911 = vmatprep.subr.mxu0 0.0
    %2912 = vmatpush2.xpose.msra.mxu0 0.0
    %2913 = vmatprep.subr.mxu0 0.0
    %2914 = vmatpush2.xpose.msra.mxu0 0.0
    %2915 = vmatprep.subr.mxu0 0.0
    %2916 = vmatpush2.xpose.msra.mxu0 0.0
    %2917 = vmatprep.subr.mxu0 0.0
    %2918 = vmatpush2.xpose.msra.mxu0 0.0
    %2919 = vmatprep.subr.mxu0 0.0
    %2920 = vmatpush2.xpose.msra.mxu0 0.0
    %2921 = vmatprep.subr.mxu0 0.0
    %2922 = vmatpush2.xpose.msra.mxu0 0.0
    %2923 = vmatprep.subr.mxu0 0.0
    %2924 = vmatpush2.xpose.msra.mxu0 0.0
    %2925 = vmatprep.subr.mxu0 0.0
    %2926 = vmatpush2.xpose.msra.mxu0 0.0
    %2927 = vmatprep.subr.mxu0 0.0
    %2928 = vmatpush2.xpose.msra.mxu0 0.0
    %2929 = vmatprep.subr.mxu0 0.0
    %2930 = vmatpush2.xpose.msra.mxu0 0.0
    %2931 = vmatprep.mubr.f32.mxu0 0.0
    %2932 = vmatmul.mubr.f32.gmra.mxu0 %v2863
    %v2933 = vpop.f32.mrf.mxu0
    %v2934 = vadd.f32 %v81, %v2933
    %v2935 = vpop.f32.mrf.mxu0
    %2936 = vdwg.mxu0
    %v2937 = vsel %vm180, %v2856, -inf
    %2938 = vmax.xlane.f32.xlu0 %v2937
    %v2939 = vpop.xlane.xlu0 %2938
    %v2940 = vsel %vm180, %v2934, -inf
    %2941 = vmax.xlane.f32.xlu0 %v2940
    %v2942 = vpop.xlane.xlu0 %2941
    %v2943 = vsub.f32 %v2856, %v2939
    %v2944 = vsub.f32 %v2934, %v2942
    %v2945 = vmul.f32 %v2943, 1.442695
    %v2946 = vpow.pop %v2945
    %v2947 = vmul.f32 %v2944, 1.442695
    %v2948 = vpow.pop %v2947
    %v2949 = vsel %vm180, %v2946, 0.0
    %2950 = vadd.xlane.f32.xlu0 %v2949
    %v2951 = vpop.xlane.xlu0 %2950
    %v2952 = vsel %vm180, %v2948, 0.0
    %2953 = vadd.xlane.f32.xlu0 %v2952
    %v2954 = vpop.xlane.xlu0 %2953
    %v2955 = vrcp.pop %v2951
    %v2956 = vrcp.pop %v2954
    %v2957 = vmul.f32 %v2946, %v2955
    %v2958 = vmul.f32 %v2948, %v2956
    %2959 = vrot.lane.b32.xlu0 %v2443, 56
    %v2960 = vpop.permute.xlu0 %2959
    %v2963 = vsel %vm180, %v2957, 0
    %2965 = vmatprep.subr.mxu0 0.0
    %2966 = vmatpush1.msra.mxu0 0.0
    %2967 = vmatprep.subr.mxu0 0.0
    %2968 = vmatpush1.msra.mxu0 0.0
    %2969 = vmatprep.subr.mxu0 0.0
    %2970 = vmatpush1.msra.mxu0 0.0
    %2971 = vmatprep.subr.mxu0 0.0
    %2972 = vmatpush1.msra.mxu0 0.0
    %2973 = vmatprep.subr.mxu0 0.0
    %2974 = vmatpush1.msra.mxu0 0.0
    %2975 = vmatprep.subr.mxu0 0.0
    %2976 = vmatpush1.msra.mxu0 0.0
    %2977 = vmatprep.subr.mxu0 0.0
    %2978 = vmatpush1.msra.mxu0 0.0
    %2979 = vmatprep.subr.mxu0 0.0
    %2980 = vmatpush1.msra.mxu0 0.0
    %2981 = vmatprep.subr.mxu0 0.0
    %2982 = vmatpush1.msra.mxu0 0.0
    %2983 = vmatprep.subr.mxu0 0.0
    %2984 = vmatpush1.msra.mxu0 0.0
    %2985 = vmatprep.subr.mxu0 0.0
    %2986 = vmatpush1.msra.mxu0 0.0
    %2987 = vmatprep.subr.mxu0 0.0
    %2988 = vmatpush1.msra.mxu0 0.0
    %2989 = vmatprep.subr.mxu0 0.0
    %2990 = vmatpush1.msra.mxu0 0.0
    %2991 = vmatprep.subr.mxu0 0.0
    %2992 = vmatpush1.msra.mxu0 0.0
    %2993 = vmatprep.subr.mxu0 0.0
    %2994 = vmatpush1.msra.mxu0 0.0
    %2995 = vmatprep.subr.mxu0 0.0
    %2996 = vmatpush1.msra.mxu0 %v2960
    %2997 = vmatprep.subr.mxu0 0.0
    %2998 = vmatpush2.msra.mxu0 0.0
    %2999 = vmatprep.subr.mxu0 0.0
    %3000 = vmatpush2.msra.mxu0 0.0
    %3001 = vmatprep.subr.mxu0 0.0
    %3002 = vmatpush2.msra.mxu0 0.0
    %3003 = vmatprep.subr.mxu0 0.0
    %3004 = vmatpush2.msra.mxu0 0.0
    %3005 = vmatprep.subr.mxu0 0.0
    %3006 = vmatpush2.msra.mxu0 0.0
    %3007 = vmatprep.subr.mxu0 0.0
    %3008 = vmatpush2.msra.mxu0 0.0
    %3009 = vmatprep.subr.mxu0 0.0
    %3010 = vmatpush2.msra.mxu0 0.0
    %3011 = vmatprep.subr.mxu0 0.0
    %3012 = vmatpush2.msra.mxu0 0.0
    %3013 = vmatprep.subr.mxu0 0.0
    %3014 = vmatpush2.msra.mxu0 0.0
    %3015 = vmatprep.subr.mxu0 0.0
    %3016 = vmatpush2.msra.mxu0 0.0
    %3017 = vmatprep.subr.mxu0 0.0
    %3018 = vmatpush2.msra.mxu0 0.0
    %3019 = vmatprep.subr.mxu0 0.0
    %3020 = vmatpush2.msra.mxu0 0.0
    %3021 = vmatprep.subr.mxu0 0.0
    %3022 = vmatpush2.msra.mxu0 0.0
    %3023 = vmatprep.subr.mxu0 0.0
    %3024 = vmatpush2.msra.mxu0 0.0
    %3025 = vmatprep.subr.mxu0 0.0
    %3026 = vmatpush2.msra.mxu0 0.0
    %3027 = vmatprep.subr.mxu0 0.0
    %3028 = vmatpush2.msra.mxu0 0.0
    %3029 = vmatprep.mubr.f32.mxu0 0.0
    %3030 = vmatmul.mubr.f32.gmra.mxu0 %v2963
    %v3031 = vpop.f32.mrf.mxu0
    %v3032 = vadd.f32 0.0, %v3031
    %v3033 = vpop.f32.mrf.mxu0
    %3034 = vdwg.mxu0
    %3035 = vrot.lane.b32.xlu0 %v2448, 56
    %v3036 = vpop.permute.xlu0 %3035
    %v3039 = vsel %vm180, %v2958, 0
    %3041 = vmatprep.subr.mxu0 0.0
    %3042 = vmatpush1.msra.mxu0 0.0
    %3043 = vmatprep.subr.mxu0 0.0
    %3044 = vmatpush1.msra.mxu0 0.0
    %3045 = vmatprep.subr.mxu0 0.0
    %3046 = vmatpush1.msra.mxu0 0.0
    %3047 = vmatprep.subr.mxu0 0.0
    %3048 = vmatpush1.msra.mxu0 0.0
    %3049 = vmatprep.subr.mxu0 0.0
    %3050 = vmatpush1.msra.mxu0 0.0
    %3051 = vmatprep.subr.mxu0 0.0
    %3052 = vmatpush1.msra.mxu0 0.0
    %3053 = vmatprep.subr.mxu0 0.0
    %3054 = vmatpush1.msra.mxu0 0.0
    %3055 = vmatprep.subr.mxu0 0.0
    %3056 = vmatpush1.msra.mxu0 0.0
    %3057 = vmatprep.subr.mxu0 0.0
    %3058 = vmatpush1.msra.mxu0 0.0
    %3059 = vmatprep.subr.mxu0 0.0
    %3060 = vmatpush1.msra.mxu0 0.0
    %3061 = vmatprep.subr.mxu0 0.0
    %3062 = vmatpush1.msra.mxu0 0.0
    %3063 = vmatprep.subr.mxu0 0.0
    %3064 = vmatpush1.msra.mxu0 0.0
    %3065 = vmatprep.subr.mxu0 0.0
    %3066 = vmatpush1.msra.mxu0 0.0
    %3067 = vmatprep.subr.mxu0 0.0
    %3068 = vmatpush1.msra.mxu0 0.0
    %3069 = vmatprep.subr.mxu0 0.0
    %3070 = vmatpush1.msra.mxu0 0.0
    %3071 = vmatprep.subr.mxu0 0.0
    %3072 = vmatpush1.msra.mxu0 %v3036
    %3073 = vmatprep.subr.mxu0 0.0
    %3074 = vmatpush2.msra.mxu0 0.0
    %3075 = vmatprep.subr.mxu0 0.0
    %3076 = vmatpush2.msra.mxu0 0.0
    %3077 = vmatprep.subr.mxu0 0.0
    %3078 = vmatpush2.msra.mxu0 0.0
    %3079 = vmatprep.subr.mxu0 0.0
    %3080 = vmatpush2.msra.mxu0 0.0
    %3081 = vmatprep.subr.mxu0 0.0
    %3082 = vmatpush2.msra.mxu0 0.0
    %3083 = vmatprep.subr.mxu0 0.0
    %3084 = vmatpush2.msra.mxu0 0.0
    %3085 = vmatprep.subr.mxu0 0.0
    %3086 = vmatpush2.msra.mxu0 0.0
    %3087 = vmatprep.subr.mxu0 0.0
    %3088 = vmatpush2.msra.mxu0 0.0
    %3089 = vmatprep.subr.mxu0 0.0
    %3090 = vmatpush2.msra.mxu0 0.0
    %3091 = vmatprep.subr.mxu0 0.0
    %3092 = vmatpush2.msra.mxu0 0.0
    %3093 = vmatprep.subr.mxu0 0.0
    %3094 = vmatpush2.msra.mxu0 0.0
    %3095 = vmatprep.subr.mxu0 0.0
    %3096 = vmatpush2.msra.mxu0 0.0
    %3097 = vmatprep.subr.mxu0 0.0
    %3098 = vmatpush2.msra.mxu0 0.0
    %3099 = vmatprep.subr.mxu0 0.0
    %3100 = vmatpush2.msra.mxu0 0.0
    %3101 = vmatprep.subr.mxu0 0.0
    %3102 = vmatpush2.msra.mxu0 0.0
    %3103 = vmatprep.subr.mxu0 0.0
    %3104 = vmatpush2.msra.mxu0 0.0
    %3105 = vmatprep.mubr.f32.mxu0 0.0
    %3106 = vmatmul.mubr.f32.gmra.mxu0 %v3039
    %v3107 = vpop.f32.mrf.mxu0
    %v3108 = vadd.f32 0.0, %v3107
    %v3109 = vpop.f32.mrf.mxu0
    %3110 = vdwg.mxu0
    %v3111 = vld [vmem:[%s2779 + $0x8] sm:$0xff]
    %v3113 = vsel %vm180, %v3032, 0
    %v3116 = vsel %vm180, %v3108, 0
    %3118 = vmatprep.subr.mxu0 0.0
    %3119 = vmatpush1.msra.mxu0 0.0
    %3120 = vmatprep.subr.mxu0 0.0
    %3121 = vmatpush1.msra.mxu0 0.0
    %3122 = vmatprep.subr.mxu0 0.0
    %3123 = vmatpush1.msra.mxu0 0.0
    %3124 = vmatprep.subr.mxu0 0.0
    %3125 = vmatpush1.msra.mxu0 0.0
    %3126 = vmatprep.subr.mxu0 0.0
    %3127 = vmatpush1.msra.mxu0 0.0
    %3128 = vmatprep.subr.mxu0 0.0
    %3129 = vmatpush1.msra.mxu0 0.0
    %3130 = vmatprep.subr.mxu0 0.0
    %3131 = vmatpush1.msra.mxu0 0.0
    %3132 = vmatprep.subr.mxu0 0.0
    %3133 = vmatpush1.msra.mxu0 0.0
    %3134 = vmatprep.subr.mxu0 0.0
    %3135 = vmatpush1.msra.mxu0 0.0
    %3136 = vmatprep.subr.mxu0 0.0
    %3137 = vmatpush1.msra.mxu0 0.0
    %3138 = vmatprep.subr.mxu0 0.0
    %3139 = vmatpush1.msra.mxu0 0.0
    %3140 = vmatprep.subr.mxu0 0.0
    %3141 = vmatpush1.msra.mxu0 0.0
    %3142 = vmatprep.subr.mxu0 0.0
    %3143 = vmatpush1.msra.mxu0 0.0
    %3144 = vmatprep.subr.mxu0 0.0
    %3145 = vmatpush1.msra.mxu0 0.0
    %3146 = vmatprep.subr.mxu0 0.0
    %3147 = vmatpush1.msra.mxu0 0.0
    %3148 = vmatprep.subr.mxu0 0.0
    %3149 = vmatpush1.msra.mxu0 %v3111
    %3150 = vmatprep.subr.mxu0 0.0
    %3151 = vmatpush2.msra.mxu0 0.0
    %3152 = vmatprep.subr.mxu0 0.0
    %3153 = vmatpush2.msra.mxu0 0.0
    %3154 = vmatprep.subr.mxu0 0.0
    %3155 = vmatpush2.msra.mxu0 0.0
    %3156 = vmatprep.subr.mxu0 0.0
    %3157 = vmatpush2.msra.mxu0 0.0
    %3158 = vmatprep.subr.mxu0 0.0
    %3159 = vmatpush2.msra.mxu0 0.0
    %3160 = vmatprep.subr.mxu0 0.0
    %3161 = vmatpush2.msra.mxu0 0.0
    %3162 = vmatprep.subr.mxu0 0.0
    %3163 = vmatpush2.msra.mxu0 0.0
    %3164 = vmatprep.subr.mxu0 0.0
    %3165 = vmatpush2.msra.mxu0 0.0
    %3166 = vmatprep.subr.mxu0 0.0
    %3167 = vmatpush2.msra.mxu0 0.0
    %3168 = vmatprep.subr.mxu0 0.0
    %3169 = vmatpush2.msra.mxu0 0.0
    %3170 = vmatprep.subr.mxu0 0.0
    %3171 = vmatpush2.msra.mxu0 0.0
    %3172 = vmatprep.subr.mxu0 0.0
    %3173 = vmatpush2.msra.mxu0 0.0
    %3174 = vmatprep.subr.mxu0 0.0
    %3175 = vmatpush2.msra.mxu0 0.0
    %3176 = vmatprep.subr.mxu0 0.0
    %3177 = vmatpush2.msra.mxu0 0.0
    %3178 = vmatprep.subr.mxu0 0.0
    %3179 = vmatpush2.msra.mxu0 0.0
    %3180 = vmatprep.subr.mxu0 0.0
    %3181 = vmatpush2.msra.mxu0 0.0
    %3182 = vmatprep.mubr.f32.mxu0 0.0
    %3183 = vmatmul.mubr.f32.gmra.mxu0 %v3113
    %v3184 = vpop.f32.mrf.mxu0
    %v3185 = vadd.f32 0.0, %v3184
    %v3186 = vpop.f32.mrf.mxu0
    %3187 = vmatprep.mubr.f32.mxu0 0.0
    %3188 = vmatmul.mubr.f32.gmra.mxu0 %v3116
    %v3189 = vpop.f32.mrf.mxu0
    %v3190 = vadd.f32 0.0, %v3189
    %v3191 = vpop.f32.mrf.mxu0
    %3192 = vdwg.mxu0
    %v3194 = vsel %vm180, %v2700, 0
    %v3197 = vsel %vm180, %v2776, 0
    %3199 = vmatprep.subr.mxu0 0.0
    %3200 = vmatpush1.msra.mxu0 0.0
    %3201 = vmatprep.subr.mxu0 0.0
    %3202 = vmatpush1.msra.mxu0 0.0
    %3203 = vmatprep.subr.mxu0 0.0
    %3204 = vmatpush1.msra.mxu0 0.0
    %3205 = vmatprep.subr.mxu0 0.0
    %3206 = vmatpush1.msra.mxu0 0.0
    %3207 = vmatprep.subr.mxu0 0.0
    %3208 = vmatpush1.msra.mxu0 0.0
    %3209 = vmatprep.subr.mxu0 0.0
    %3210 = vmatpush1.msra.mxu0 0.0
    %3211 = vmatprep.subr.mxu0 0.0
    %3212 = vmatpush1.msra.mxu0 0.0
    %3213 = vmatprep.subr.mxu0 0.0
    %3214 = vmatpush1.msra.mxu0 0.0
    %3215 = vmatprep.subr.mxu0 0.0
    %3216 = vmatpush1.msra.mxu0 0.0
    %3217 = vmatprep.subr.mxu0 0.0
    %3218 = vmatpush1.msra.mxu0 0.0
    %3219 = vmatprep.subr.mxu0 0.0
    %3220 = vmatpush1.msra.mxu0 0.0
    %3221 = vmatprep.subr.mxu0 0.0
    %3222 = vmatpush1.msra.mxu0 0.0
    %3223 = vmatprep.subr.mxu0 0.0
    %3224 = vmatpush1.msra.mxu0 0.0
    %3225 = vmatprep.subr.mxu0 0.0
    %3226 = vmatpush1.msra.mxu0 0.0
    %3227 = vmatprep.subr.mxu0 0.0
    %3228 = vmatpush1.msra.mxu0 0.0
    %3229 = vmatprep.subr.mxu0 0.0
    %3230 = vmatpush1.msra.mxu0 %v2780
    %3231 = vmatprep.subr.mxu0 0.0
    %3232 = vmatpush2.msra.mxu0 0.0
    %3233 = vmatprep.subr.mxu0 0.0
    %3234 = vmatpush2.msra.mxu0 0.0
    %3235 = vmatprep.subr.mxu0 0.0
    %3236 = vmatpush2.msra.mxu0 0.0
    %3237 = vmatprep.subr.mxu0 0.0
    %3238 = vmatpush2.msra.mxu0 0.0
    %3239 = vmatprep.subr.mxu0 0.0
    %3240 = vmatpush2.msra.mxu0 0.0
    %3241 = vmatprep.subr.mxu0 0.0
    %3242 = vmatpush2.msra.mxu0 0.0
    %3243 = vmatprep.subr.mxu0 0.0
    %3244 = vmatpush2.msra.mxu0 0.0
    %3245 = vmatprep.subr.mxu0 0.0
    %3246 = vmatpush2.msra.mxu0 0.0
    %3247 = vmatprep.subr.mxu0 0.0
    %3248 = vmatpush2.msra.mxu0 0.0
    %3249 = vmatprep.subr.mxu0 0.0
    %3250 = vmatpush2.msra.mxu0 0.0
    %3251 = vmatprep.subr.mxu0 0.0
    %3252 = vmatpush2.msra.mxu0 0.0
    %3253 = vmatprep.subr.mxu0 0.0
    %3254 = vmatpush2.msra.mxu0 0.0
    %3255 = vmatprep.subr.mxu0 0.0
    %3256 = vmatpush2.msra.mxu0 0.0
    %3257 = vmatprep.subr.mxu0 0.0
    %3258 = vmatpush2.msra.mxu0 0.0
    %3259 = vmatprep.subr.mxu0 0.0
    %3260 = vmatpush2.msra.mxu0 0.0
    %3261 = vmatprep.subr.mxu0 0.0
    %3262 = vmatpush2.msra.mxu0 0.0
    %3263 = vmatprep.mubr.f32.mxu0 0.0
    %3264 = vmatmul.mubr.f32.gmra.mxu0 %v3194
    %v3265 = vpop.f32.mrf.mxu0
    %v3266 = vadd.f32 %v3185, %v3265
    %v3267 = vpop.f32.mrf.mxu0
    %3268 = vmatprep.mubr.f32.mxu0 0.0
    %3269 = vmatmul.mubr.f32.gmra.mxu0 %v3197
    %v3270 = vpop.f32.mrf.mxu0
    %v3271 = vadd.f32 %v3190, %v3270
    %v3272 = vpop.f32.mrf.mxu0
    %3273 = vdwg.mxu0
    %3274 = vrot.lane.b32.xlu0 %v2443, 112
    %v3275 = vpop.permute.xlu0 %3274
    %3276 = vrot.lane.b32.xlu0 %v2443, 80
    %v3277 = vpop.permute.xlu0 %3276
    %v3278 = vsel %vm180, %v3275, 0
    %v3280 = vsel %vm180, %v3277, 0
    %3282 = vmatprep.subr.mxu0 0.0
    %3283 = vmatpush1.xpose.msra.mxu0 0.0
    %3284 = vmatprep.subr.mxu0 0.0
    %3285 = vmatpush1.xpose.msra.mxu0 0.0
    %3286 = vmatprep.subr.mxu0 0.0
    %3287 = vmatpush1.xpose.msra.mxu0 0.0
    %3288 = vmatprep.subr.mxu0 0.0
    %3289 = vmatpush1.xpose.msra.mxu0 0.0
    %3290 = vmatprep.subr.mxu0 0.0
    %3291 = vmatpush1.xpose.msra.mxu0 0.0
    %3292 = vmatprep.subr.mxu0 0.0
    %3293 = vmatpush1.xpose.msra.mxu0 0.0
    %3294 = vmatprep.subr.mxu0 0.0
    %3295 = vmatpush1.xpose.msra.mxu0 0.0
    %3296 = vmatprep.subr.mxu0 0.0
    %3297 = vmatpush1.xpose.msra.mxu0 0.0
    %3298 = vmatprep.subr.mxu0 0.0
    %3299 = vmatpush1.xpose.msra.mxu0 0.0
    %3300 = vmatprep.subr.mxu0 0.0
    %3301 = vmatpush1.xpose.msra.mxu0 0.0
    %3302 = vmatprep.subr.mxu0 0.0
    %3303 = vmatpush1.xpose.msra.mxu0 0.0
    %3304 = vmatprep.subr.mxu0 0.0
    %3305 = vmatpush1.xpose.msra.mxu0 0.0
    %3306 = vmatprep.subr.mxu0 0.0
    %3307 = vmatpush1.xpose.msra.mxu0 0.0
    %3308 = vmatprep.subr.mxu0 0.0
    %3309 = vmatpush1.xpose.msra.mxu0 0.0
    %3310 = vmatprep.subr.mxu0 0.0
    %3311 = vmatpush1.xpose.msra.mxu0 0.0
    %3312 = vmatprep.subr.mxu0 0.0
    %3313 = vmatpush1.xpose.msra.mxu0 %v3280
    %3314 = vmatprep.subr.mxu0 0.0
    %3315 = vmatpush2.xpose.msra.mxu0 0.0
    %3316 = vmatprep.subr.mxu0 0.0
    %3317 = vmatpush2.xpose.msra.mxu0 0.0
    %3318 = vmatprep.subr.mxu0 0.0
    %3319 = vmatpush2.xpose.msra.mxu0 0.0
    %3320 = vmatprep.subr.mxu0 0.0
    %3321 = vmatpush2.xpose.msra.mxu0 0.0
    %3322 = vmatprep.subr.mxu0 0.0
    %3323 = vmatpush2.xpose.msra.mxu0 0.0
    %3324 = vmatprep.subr.mxu0 0.0
    %3325 = vmatpush2.xpose.msra.mxu0 0.0
    %3326 = vmatprep.subr.mxu0 0.0
    %3327 = vmatpush2.xpose.msra.mxu0 0.0
    %3328 = vmatprep.subr.mxu0 0.0
    %3329 = vmatpush2.xpose.msra.mxu0 0.0
    %3330 = vmatprep.subr.mxu0 0.0
    %3331 = vmatpush2.xpose.msra.mxu0 0.0
    %3332 = vmatprep.subr.mxu0 0.0
    %3333 = vmatpush2.xpose.msra.mxu0 0.0
    %3334 = vmatprep.subr.mxu0 0.0
    %3335 = vmatpush2.xpose.msra.mxu0 0.0
    %3336 = vmatprep.subr.mxu0 0.0
    %3337 = vmatpush2.xpose.msra.mxu0 0.0
    %3338 = vmatprep.subr.mxu0 0.0
    %3339 = vmatpush2.xpose.msra.mxu0 0.0
    %3340 = vmatprep.subr.mxu0 0.0
    %3341 = vmatpush2.xpose.msra.mxu0 0.0
    %3342 = vmatprep.subr.mxu0 0.0
    %3343 = vmatpush2.xpose.msra.mxu0 0.0
    %3344 = vmatprep.subr.mxu0 0.0
    %3345 = vmatpush2.xpose.msra.mxu0 0.0
    %3346 = vmatprep.mubr.f32.mxu0 0.0
    %3347 = vmatmul.mubr.f32.gmra.mxu0 %v3278
    %v3348 = vpop.f32.mrf.mxu0
    %v3349 = vadd.f32 %v77, %v3348
    %v3350 = vpop.f32.mrf.mxu0
    %3351 = vdwg.mxu0
    %3352 = vrot.lane.b32.xlu0 %v2448, 112
    %v3353 = vpop.permute.xlu0 %3352
    %3354 = vrot.lane.b32.xlu0 %v2448, 80
    %v3355 = vpop.permute.xlu0 %3354
    %v3356 = vsel %vm180, %v3353, 0
    %v3358 = vsel %vm180, %v3355, 0
    %3360 = vmatprep.subr.mxu0 0.0
    %3361 = vmatpush1.xpose.msra.mxu0 0.0
    %3362 = vmatprep.subr.mxu0 0.0
    %3363 = vmatpush1.xpose.msra.mxu0 0.0
    %3364 = vmatprep.subr.mxu0 0.0
    %3365 = vmatpush1.xpose.msra.mxu0 0.0
    %3366 = vmatprep.subr.mxu0 0.0
    %3367 = vmatpush1.xpose.msra.mxu0 0.0
    %3368 = vmatprep.subr.mxu0 0.0
    %3369 = vmatpush1.xpose.msra.mxu0 0.0
    %3370 = vmatprep.subr.mxu0 0.0
    %3371 = vmatpush1.xpose.msra.mxu0 0.0
    %3372 = vmatprep.subr.mxu0 0.0
    %3373 = vmatpush1.xpose.msra.mxu0 0.0
    %3374 = vmatprep.subr.mxu0 0.0
    %3375 = vmatpush1.xpose.msra.mxu0 0.0
    %3376 = vmatprep.subr.mxu0 0.0
    %3377 = vmatpush1.xpose.msra.mxu0 0.0
    %3378 = vmatprep.subr.mxu0 0.0
    %3379 = vmatpush1.xpose.msra.mxu0 0.0
    %3380 = vmatprep.subr.mxu0 0.0
    %3381 = vmatpush1.xpose.msra.mxu0 0.0
    %3382 = vmatprep.subr.mxu0 0.0
    %3383 = vmatpush1.xpose.msra.mxu0 0.0
    %3384 = vmatprep.subr.mxu0 0.0
    %3385 = vmatpush1.xpose.msra.mxu0 0.0
    %3386 = vmatprep.subr.mxu0 0.0
    %3387 = vmatpush1.xpose.msra.mxu0 0.0
    %3388 = vmatprep.subr.mxu0 0.0
    %3389 = vmatpush1.xpose.msra.mxu0 0.0
    %3390 = vmatprep.subr.mxu0 0.0
    %3391 = vmatpush1.xpose.msra.mxu0 %v3358
    %3392 = vmatprep.subr.mxu0 0.0
    %3393 = vmatpush2.xpose.msra.mxu0 0.0
    %3394 = vmatprep.subr.mxu0 0.0
    %3395 = vmatpush2.xpose.msra.mxu0 0.0
    %3396 = vmatprep.subr.mxu0 0.0
    %3397 = vmatpush2.xpose.msra.mxu0 0.0
    %3398 = vmatprep.subr.mxu0 0.0
    %3399 = vmatpush2.xpose.msra.mxu0 0.0
    %3400 = vmatprep.subr.mxu0 0.0
    %3401 = vmatpush2.xpose.msra.mxu0 0.0
    %3402 = vmatprep.subr.mxu0 0.0
    %3403 = vmatpush2.xpose.msra.mxu0 0.0
    %3404 = vmatprep.subr.mxu0 0.0
    %3405 = vmatpush2.xpose.msra.mxu0 0.0
    %3406 = vmatprep.subr.mxu0 0.0
    %3407 = vmatpush2.xpose.msra.mxu0 0.0
    %3408 = vmatprep.subr.mxu0 0.0
    %3409 = vmatpush2.xpose.msra.mxu0 0.0
    %3410 = vmatprep.subr.mxu0 0.0
    %3411 = vmatpush2.xpose.msra.mxu0 0.0
    %3412 = vmatprep.subr.mxu0 0.0
    %3413 = vmatpush2.xpose.msra.mxu0 0.0
    %3414 = vmatprep.subr.mxu0 0.0
    %3415 = vmatpush2.xpose.msra.mxu0 0.0
    %3416 = vmatprep.subr.mxu0 0.0
    %3417 = vmatpush2.xpose.msra.mxu0 0.0
    %3418 = vmatprep.subr.mxu0 0.0
    %3419 = vmatpush2.xpose.msra.mxu0 0.0
    %3420 = vmatprep.subr.mxu0 0.0
    %3421 = vmatpush2.xpose.msra.mxu0 0.0
    %3422 = vmatprep.subr.mxu0 0.0
    %3423 = vmatpush2.xpose.msra.mxu0 0.0
    %3424 = vmatprep.mubr.f32.mxu0 0.0
    %3425 = vmatmul.mubr.f32.gmra.mxu0 %v3356
    %v3426 = vpop.f32.mrf.mxu0
    %v3427 = vadd.f32 %v81, %v3426
    %v3428 = vpop.f32.mrf.mxu0
    %3429 = vdwg.mxu0
    %v3430 = vsel %vm180, %v3349, -inf
    %3431 = vmax.xlane.f32.xlu0 %v3430
    %v3432 = vpop.xlane.xlu0 %3431
    %v3433 = vsel %vm180, %v3427, -inf
    %3434 = vmax.xlane.f32.xlu0 %v3433
    %v3435 = vpop.xlane.xlu0 %3434
    %v3436 = vsub.f32 %v3349, %v3432
    %v3437 = vsub.f32 %v3427, %v3435
    %v3438 = vmul.f32 %v3436, 1.442695
    %v3439 = vpow.pop %v3438
    %v3440 = vmul.f32 %v3437, 1.442695
    %v3441 = vpow.pop %v3440
    %v3442 = vsel %vm180, %v3439, 0.0
    %3443 = vadd.xlane.f32.xlu0 %v3442
    %v3444 = vpop.xlane.xlu0 %3443
    %v3445 = vsel %vm180, %v3441, 0.0
    %3446 = vadd.xlane.f32.xlu0 %v3445
    %v3447 = vpop.xlane.xlu0 %3446
    %v3448 = vrcp.pop %v3444
    %v3449 = vrcp.pop %v3447
    %v3450 = vmul.f32 %v3439, %v3448
    %v3451 = vmul.f32 %v3441, %v3449
    %3452 = vrot.lane.b32.xlu0 %v2443, 48
    %v3453 = vpop.permute.xlu0 %3452
    %v3456 = vsel %vm180, %v3450, 0
    %3458 = vmatprep.subr.mxu0 0.0
    %3459 = vmatpush1.msra.mxu0 0.0
    %3460 = vmatprep.subr.mxu0 0.0
    %3461 = vmatpush1.msra.mxu0 0.0
    %3462 = vmatprep.subr.mxu0 0.0
    %3463 = vmatpush1.msra.mxu0 0.0
    %3464 = vmatprep.subr.mxu0 0.0
    %3465 = vmatpush1.msra.mxu0 0.0
    %3466 = vmatprep.subr.mxu0 0.0
    %3467 = vmatpush1.msra.mxu0 0.0
    %3468 = vmatprep.subr.mxu0 0.0
    %3469 = vmatpush1.msra.mxu0 0.0
    %3470 = vmatprep.subr.mxu0 0.0
    %3471 = vmatpush1.msra.mxu0 0.0
    %3472 = vmatprep.subr.mxu0 0.0
    %3473 = vmatpush1.msra.mxu0 0.0
    %3474 = vmatprep.subr.mxu0 0.0
    %3475 = vmatpush1.msra.mxu0 0.0
    %3476 = vmatprep.subr.mxu0 0.0
    %3477 = vmatpush1.msra.mxu0 0.0
    %3478 = vmatprep.subr.mxu0 0.0
    %3479 = vmatpush1.msra.mxu0 0.0
    %3480 = vmatprep.subr.mxu0 0.0
    %3481 = vmatpush1.msra.mxu0 0.0
    %3482 = vmatprep.subr.mxu0 0.0
    %3483 = vmatpush1.msra.mxu0 0.0
    %3484 = vmatprep.subr.mxu0 0.0
    %3485 = vmatpush1.msra.mxu0 0.0
    %3486 = vmatprep.subr.mxu0 0.0
    %3487 = vmatpush1.msra.mxu0 0.0
    %3488 = vmatprep.subr.mxu0 0.0
    %3489 = vmatpush1.msra.mxu0 %v3453
    %3490 = vmatprep.subr.mxu0 0.0
    %3491 = vmatpush2.msra.mxu0 0.0
    %3492 = vmatprep.subr.mxu0 0.0
    %3493 = vmatpush2.msra.mxu0 0.0
    %3494 = vmatprep.subr.mxu0 0.0
    %3495 = vmatpush2.msra.mxu0 0.0
    %3496 = vmatprep.subr.mxu0 0.0
    %3497 = vmatpush2.msra.mxu0 0.0
    %3498 = vmatprep.subr.mxu0 0.0
    %3499 = vmatpush2.msra.mxu0 0.0
    %3500 = vmatprep.subr.mxu0 0.0
    %3501 = vmatpush2.msra.mxu0 0.0
    %3502 = vmatprep.subr.mxu0 0.0
    %3503 = vmatpush2.msra.mxu0 0.0
    %3504 = vmatprep.subr.mxu0 0.0
    %3505 = vmatpush2.msra.mxu0 0.0
    %3506 = vmatprep.subr.mxu0 0.0
    %3507 = vmatpush2.msra.mxu0 0.0
    %3508 = vmatprep.subr.mxu0 0.0
    %3509 = vmatpush2.msra.mxu0 0.0
    %3510 = vmatprep.subr.mxu0 0.0
    %3511 = vmatpush2.msra.mxu0 0.0
    %3512 = vmatprep.subr.mxu0 0.0
    %3513 = vmatpush2.msra.mxu0 0.0
    %3514 = vmatprep.subr.mxu0 0.0
    %3515 = vmatpush2.msra.mxu0 0.0
    %3516 = vmatprep.subr.mxu0 0.0
    %3517 = vmatpush2.msra.mxu0 0.0
    %3518 = vmatprep.subr.mxu0 0.0
    %3519 = vmatpush2.msra.mxu0 0.0
    %3520 = vmatprep.subr.mxu0 0.0
    %3521 = vmatpush2.msra.mxu0 0.0
    %3522 = vmatprep.mubr.f32.mxu0 0.0
    %3523 = vmatmul.mubr.f32.gmra.mxu0 %v3456
    %v3524 = vpop.f32.mrf.mxu0
    %v3525 = vadd.f32 0.0, %v3524
    %v3526 = vpop.f32.mrf.mxu0
    %3527 = vdwg.mxu0
    %3528 = vrot.lane.b32.xlu0 %v2448, 48
    %v3529 = vpop.permute.xlu0 %3528
    %v3532 = vsel %vm180, %v3451, 0
    %3534 = vmatprep.subr.mxu0 0.0
    %3535 = vmatpush1.msra.mxu0 0.0
    %3536 = vmatprep.subr.mxu0 0.0
    %3537 = vmatpush1.msra.mxu0 0.0
    %3538 = vmatprep.subr.mxu0 0.0
    %3539 = vmatpush1.msra.mxu0 0.0
    %3540 = vmatprep.subr.mxu0 0.0
    %3541 = vmatpush1.msra.mxu0 0.0
    %3542 = vmatprep.subr.mxu0 0.0
    %3543 = vmatpush1.msra.mxu0 0.0
    %3544 = vmatprep.subr.mxu0 0.0
    %3545 = vmatpush1.msra.mxu0 0.0
    %3546 = vmatprep.subr.mxu0 0.0
    %3547 = vmatpush1.msra.mxu0 0.0
    %3548 = vmatprep.subr.mxu0 0.0
    %3549 = vmatpush1.msra.mxu0 0.0
    %3550 = vmatprep.subr.mxu0 0.0
    %3551 = vmatpush1.msra.mxu0 0.0
    %3552 = vmatprep.subr.mxu0 0.0
    %3553 = vmatpush1.msra.mxu0 0.0
    %3554 = vmatprep.subr.mxu0 0.0
    %3555 = vmatpush1.msra.mxu0 0.0
    %3556 = vmatprep.subr.mxu0 0.0
    %3557 = vmatpush1.msra.mxu0 0.0
    %3558 = vmatprep.subr.mxu0 0.0
    %3559 = vmatpush1.msra.mxu0 0.0
    %3560 = vmatprep.subr.mxu0 0.0
    %3561 = vmatpush1.msra.mxu0 0.0
    %3562 = vmatprep.subr.mxu0 0.0
    %3563 = vmatpush1.msra.mxu0 0.0
    %3564 = vmatprep.subr.mxu0 0.0
    %3565 = vmatpush1.msra.mxu0 %v3529
    %3566 = vmatprep.subr.mxu0 0.0
    %3567 = vmatpush2.msra.mxu0 0.0
    %3568 = vmatprep.subr.mxu0 0.0
    %3569 = vmatpush2.msra.mxu0 0.0
    %3570 = vmatprep.subr.mxu0 0.0
    %3571 = vmatpush2.msra.mxu0 0.0
    %3572 = vmatprep.subr.mxu0 0.0
    %3573 = vmatpush2.msra.mxu0 0.0
    %3574 = vmatprep.subr.mxu0 0.0
    %3575 = vmatpush2.msra.mxu0 0.0
    %3576 = vmatprep.subr.mxu0 0.0
    %3577 = vmatpush2.msra.mxu0 0.0
    %3578 = vmatprep.subr.mxu0 0.0
    %3579 = vmatpush2.msra.mxu0 0.0
    %3580 = vmatprep.subr.mxu0 0.0
    %3581 = vmatpush2.msra.mxu0 0.0
    %3582 = vmatprep.subr.mxu0 0.0
    %3583 = vmatpush2.msra.mxu0 0.0
    %3584 = vmatprep.subr.mxu0 0.0
    %3585 = vmatpush2.msra.mxu0 0.0
    %3586 = vmatprep.subr.mxu0 0.0
    %3587 = vmatpush2.msra.mxu0 0.0
    %3588 = vmatprep.subr.mxu0 0.0
    %3589 = vmatpush2.msra.mxu0 0.0
    %3590 = vmatprep.subr.mxu0 0.0
    %3591 = vmatpush2.msra.mxu0 0.0
    %3592 = vmatprep.subr.mxu0 0.0
    %3593 = vmatpush2.msra.mxu0 0.0
    %3594 = vmatprep.subr.mxu0 0.0
    %3595 = vmatpush2.msra.mxu0 0.0
    %3596 = vmatprep.subr.mxu0 0.0
    %3597 = vmatpush2.msra.mxu0 0.0
    %3598 = vmatprep.mubr.f32.mxu0 0.0
    %3599 = vmatmul.mubr.f32.gmra.mxu0 %v3532
    %v3600 = vpop.f32.mrf.mxu0
    %v3601 = vadd.f32 0.0, %v3600
    %v3602 = vpop.f32.mrf.mxu0
    %3603 = vdwg.mxu0
    %v3604 = vld [vmem:[%s2779 + $0x10] sm:$0xff]
    %v3606 = vsel %vm180, %v3525, 0
    %v3609 = vsel %vm180, %v3601, 0
    %3611 = vmatprep.subr.mxu0 0.0
    %3612 = vmatpush1.msra.mxu0 0.0
    %3613 = vmatprep.subr.mxu0 0.0
    %3614 = vmatpush1.msra.mxu0 0.0
    %3615 = vmatprep.subr.mxu0 0.0
    %3616 = vmatpush1.msra.mxu0 0.0
    %3617 = vmatprep.subr.mxu0 0.0
    %3618 = vmatpush1.msra.mxu0 0.0
    %3619 = vmatprep.subr.mxu0 0.0
    %3620 = vmatpush1.msra.mxu0 0.0
    %3621 = vmatprep.subr.mxu0 0.0
    %3622 = vmatpush1.msra.mxu0 0.0
    %3623 = vmatprep.subr.mxu0 0.0
    %3624 = vmatpush1.msra.mxu0 0.0
    %3625 = vmatprep.subr.mxu0 0.0
    %3626 = vmatpush1.msra.mxu0 0.0
    %3627 = vmatprep.subr.mxu0 0.0
    %3628 = vmatpush1.msra.mxu0 0.0
    %3629 = vmatprep.subr.mxu0 0.0
    %3630 = vmatpush1.msra.mxu0 0.0
    %3631 = vmatprep.subr.mxu0 0.0
    %3632 = vmatpush1.msra.mxu0 0.0
    %3633 = vmatprep.subr.mxu0 0.0
    %3634 = vmatpush1.msra.mxu0 0.0
    %3635 = vmatprep.subr.mxu0 0.0
    %3636 = vmatpush1.msra.mxu0 0.0
    %3637 = vmatprep.subr.mxu0 0.0
    %3638 = vmatpush1.msra.mxu0 0.0
    %3639 = vmatprep.subr.mxu0 0.0
    %3640 = vmatpush1.msra.mxu0 0.0
    %3641 = vmatprep.subr.mxu0 0.0
    %3642 = vmatpush1.msra.mxu0 %v3604
    %3643 = vmatprep.subr.mxu0 0.0
    %3644 = vmatpush2.msra.mxu0 0.0
    %3645 = vmatprep.subr.mxu0 0.0
    %3646 = vmatpush2.msra.mxu0 0.0
    %3647 = vmatprep.subr.mxu0 0.0
    %3648 = vmatpush2.msra.mxu0 0.0
    %3649 = vmatprep.subr.mxu0 0.0
    %3650 = vmatpush2.msra.mxu0 0.0
    %3651 = vmatprep.subr.mxu0 0.0
    %3652 = vmatpush2.msra.mxu0 0.0
    %3653 = vmatprep.subr.mxu0 0.0
    %3654 = vmatpush2.msra.mxu0 0.0
    %3655 = vmatprep.subr.mxu0 0.0
    %3656 = vmatpush2.msra.mxu0 0.0
    %3657 = vmatprep.subr.mxu0 0.0
    %3658 = vmatpush2.msra.mxu0 0.0
    %3659 = vmatprep.subr.mxu0 0.0
    %3660 = vmatpush2.msra.mxu0 0.0
    %3661 = vmatprep.subr.mxu0 0.0
    %3662 = vmatpush2.msra.mxu0 0.0
    %3663 = vmatprep.subr.mxu0 0.0
    %3664 = vmatpush2.msra.mxu0 0.0
    %3665 = vmatprep.subr.mxu0 0.0
    %3666 = vmatpush2.msra.mxu0 0.0
    %3667 = vmatprep.subr.mxu0 0.0
    %3668 = vmatpush2.msra.mxu0 0.0
    %3669 = vmatprep.subr.mxu0 0.0
    %3670 = vmatpush2.msra.mxu0 0.0
    %3671 = vmatprep.subr.mxu0 0.0
    %3672 = vmatpush2.msra.mxu0 0.0
    %3673 = vmatprep.subr.mxu0 0.0
    %3674 = vmatpush2.msra.mxu0 0.0
    %3675 = vmatprep.mubr.f32.mxu0 0.0
    %3676 = vmatmul.mubr.f32.gmra.mxu0 %v3606
    %v3677 = vpop.f32.mrf.mxu0
    %v3678 = vadd.f32 0.0, %v3677
    %v3679 = vpop.f32.mrf.mxu0
    %3680 = vmatprep.mubr.f32.mxu0 0.0
    %3681 = vmatmul.mubr.f32.gmra.mxu0 %v3609
    %v3682 = vpop.f32.mrf.mxu0
    %v3683 = vadd.f32 0.0, %v3682
    %v3684 = vpop.f32.mrf.mxu0
    %3685 = vdwg.mxu0
    %v3686 = vadd.f32 %v3266, %v3678
    %v3687 = vadd.f32 %v3271, %v3683
    %3688 = vrot.lane.b32.xlu0 %v2443, 104
    %v3689 = vpop.permute.xlu0 %3688
    %3690 = vrot.lane.b32.xlu0 %v2443, 72
    %v3691 = vpop.permute.xlu0 %3690
    %v3692 = vsel %vm180, %v3689, 0
    %v3694 = vsel %vm180, %v3691, 0
    %3696 = vmatprep.subr.mxu0 0.0
    %3697 = vmatpush1.xpose.msra.mxu0 0.0
    %3698 = vmatprep.subr.mxu0 0.0
    %3699 = vmatpush1.xpose.msra.mxu0 0.0
    %3700 = vmatprep.subr.mxu0 0.0
    %3701 = vmatpush1.xpose.msra.mxu0 0.0
    %3702 = vmatprep.subr.mxu0 0.0
    %3703 = vmatpush1.xpose.msra.mxu0 0.0
    %3704 = vmatprep.subr.mxu0 0.0
    %3705 = vmatpush1.xpose.msra.mxu0 0.0
    %3706 = vmatprep.subr.mxu0 0.0
    %3707 = vmatpush1.xpose.msra.mxu0 0.0
    %3708 = vmatprep.subr.mxu0 0.0
    %3709 = vmatpush1.xpose.msra.mxu0 0.0
    %3710 = vmatprep.subr.mxu0 0.0
    %3711 = vmatpush1.xpose.msra.mxu0 0.0
    %3712 = vmatprep.subr.mxu0 0.0
    %3713 = vmatpush1.xpose.msra.mxu0 0.0
    %3714 = vmatprep.subr.mxu0 0.0
    %3715 = vmatpush1.xpose.msra.mxu0 0.0
    %3716 = vmatprep.subr.mxu0 0.0
    %3717 = vmatpush1.xpose.msra.mxu0 0.0
    %3718 = vmatprep.subr.mxu0 0.0
    %3719 = vmatpush1.xpose.msra.mxu0 0.0
    %3720 = vmatprep.subr.mxu0 0.0
    %3721 = vmatpush1.xpose.msra.mxu0 0.0
    %3722 = vmatprep.subr.mxu0 0.0
    %3723 = vmatpush1.xpose.msra.mxu0 0.0
    %3724 = vmatprep.subr.mxu0 0.0
    %3725 = vmatpush1.xpose.msra.mxu0 0.0
    %3726 = vmatprep.subr.mxu0 0.0
    %3727 = vmatpush1.xpose.msra.mxu0 %v3694
    %3728 = vmatprep.subr.mxu0 0.0
    %3729 = vmatpush2.xpose.msra.mxu0 0.0
    %3730 = vmatprep.subr.mxu0 0.0
    %3731 = vmatpush2.xpose.msra.mxu0 0.0
    %3732 = vmatprep.subr.mxu0 0.0
    %3733 = vmatpush2.xpose.msra.mxu0 0.0
    %3734 = vmatprep.subr.mxu0 0.0
    %3735 = vmatpush2.xpose.msra.mxu0 0.0
    %3736 = vmatprep.subr.mxu0 0.0
    %3737 = vmatpush2.xpose.msra.mxu0 0.0
    %3738 = vmatprep.subr.mxu0 0.0
    %3739 = vmatpush2.xpose.msra.mxu0 0.0
    %3740 = vmatprep.subr.mxu0 0.0
    %3741 = vmatpush2.xpose.msra.mxu0 0.0
    %3742 = vmatprep.subr.mxu0 0.0
    %3743 = vmatpush2.xpose.msra.mxu0 0.0
    %3744 = vmatprep.subr.mxu0 0.0
    %3745 = vmatpush2.xpose.msra.mxu0 0.0
    %3746 = vmatprep.subr.mxu0 0.0
    %3747 = vmatpush2.xpose.msra.mxu0 0.0
    %3748 = vmatprep.subr.mxu0 0.0
    %3749 = vmatpush2.xpose.msra.mxu0 0.0
    %3750 = vmatprep.subr.mxu0 0.0
    %3751 = vmatpush2.xpose.msra.mxu0 0.0
    %3752 = vmatprep.subr.mxu0 0.0
    %3753 = vmatpush2.xpose.msra.mxu0 0.0
    %3754 = vmatprep.subr.mxu0 0.0
    %3755 = vmatpush2.xpose.msra.mxu0 0.0
    %3756 = vmatprep.subr.mxu0 0.0
    %3757 = vmatpush2.xpose.msra.mxu0 0.0
    %3758 = vmatprep.subr.mxu0 0.0
    %3759 = vmatpush2.xpose.msra.mxu0 0.0
    %3760 = vmatprep.mubr.f32.mxu0 0.0
    %3761 = vmatmul.mubr.f32.gmra.mxu0 %v3692
    %v3762 = vpop.f32.mrf.mxu0
    %v3763 = vadd.f32 %v77, %v3762
    %v3764 = vpop.f32.mrf.mxu0
    %3765 = vdwg.mxu0
    %3766 = vrot.lane.b32.xlu0 %v2448, 104
    %v3767 = vpop.permute.xlu0 %3766
    %3768 = vrot.lane.b32.xlu0 %v2448, 72
    %v3769 = vpop.permute.xlu0 %3768
    %v3770 = vsel %vm180, %v3767, 0
    %v3772 = vsel %vm180, %v3769, 0
    %3774 = vmatprep.subr.mxu0 0.0
    %3775 = vmatpush1.xpose.msra.mxu0 0.0
    %3776 = vmatprep.subr.mxu0 0.0
    %3777 = vmatpush1.xpose.msra.mxu0 0.0
    %3778 = vmatprep.subr.mxu0 0.0
    %3779 = vmatpush1.xpose.msra.mxu0 0.0
    %3780 = vmatprep.subr.mxu0 0.0
    %3781 = vmatpush1.xpose.msra.mxu0 0.0
    %3782 = vmatprep.subr.mxu0 0.0
    %3783 = vmatpush1.xpose.msra.mxu0 0.0
    %3784 = vmatprep.subr.mxu0 0.0
    %3785 = vmatpush1.xpose.msra.mxu0 0.0
    %3786 = vmatprep.subr.mxu0 0.0
    %3787 = vmatpush1.xpose.msra.mxu0 0.0
    %3788 = vmatprep.subr.mxu0 0.0
    %3789 = vmatpush1.xpose.msra.mxu0 0.0
    %3790 = vmatprep.subr.mxu0 0.0
    %3791 = vmatpush1.xpose.msra.mxu0 0.0
    %3792 = vmatprep.subr.mxu0 0.0
    %3793 = vmatpush1.xpose.msra.mxu0 0.0
    %3794 = vmatprep.subr.mxu0 0.0
    %3795 = vmatpush1.xpose.msra.mxu0 0.0
    %3796 = vmatprep.subr.mxu0 0.0
    %3797 = vmatpush1.xpose.msra.mxu0 0.0
    %3798 = vmatprep.subr.mxu0 0.0
    %3799 = vmatpush1.xpose.msra.mxu0 0.0
    %3800 = vmatprep.subr.mxu0 0.0
    %3801 = vmatpush1.xpose.msra.mxu0 0.0
    %3802 = vmatprep.subr.mxu0 0.0
    %3803 = vmatpush1.xpose.msra.mxu0 0.0
    %3804 = vmatprep.subr.mxu0 0.0
    %3805 = vmatpush1.xpose.msra.mxu0 %v3772
    %3806 = vmatprep.subr.mxu0 0.0
    %3807 = vmatpush2.xpose.msra.mxu0 0.0
    %3808 = vmatprep.subr.mxu0 0.0
    %3809 = vmatpush2.xpose.msra.mxu0 0.0
    %3810 = vmatprep.subr.mxu0 0.0
    %3811 = vmatpush2.xpose.msra.mxu0 0.0
    %3812 = vmatprep.subr.mxu0 0.0
    %3813 = vmatpush2.xpose.msra.mxu0 0.0
    %3814 = vmatprep.subr.mxu0 0.0
    %3815 = vmatpush2.xpose.msra.mxu0 0.0
    %3816 = vmatprep.subr.mxu0 0.0
    %3817 = vmatpush2.xpose.msra.mxu0 0.0
    %3818 = vmatprep.subr.mxu0 0.0
    %3819 = vmatpush2.xpose.msra.mxu0 0.0
    %3820 = vmatprep.subr.mxu0 0.0
    %3821 = vmatpush2.xpose.msra.mxu0 0.0
    %3822 = vmatprep.subr.mxu0 0.0
    %3823 = vmatpush2.xpose.msra.mxu0 0.0
    %3824 = vmatprep.subr.mxu0 0.0
    %3825 = vmatpush2.xpose.msra.mxu0 0.0
    %3826 = vmatprep.subr.mxu0 0.0
    %3827 = vmatpush2.xpose.msra.mxu0 0.0
    %3828 = vmatprep.subr.mxu0 0.0
    %3829 = vmatpush2.xpose.msra.mxu0 0.0
    %3830 = vmatprep.subr.mxu0 0.0
    %3831 = vmatpush2.xpose.msra.mxu0 0.0
    %3832 = vmatprep.subr.mxu0 0.0
    %3833 = vmatpush2.xpose.msra.mxu0 0.0
    %3834 = vmatprep.subr.mxu0 0.0
    %3835 = vmatpush2.xpose.msra.mxu0 0.0
    %3836 = vmatprep.subr.mxu0 0.0
    %3837 = vmatpush2.xpose.msra.mxu0 0.0
    %3838 = vmatprep.mubr.f32.mxu0 0.0
    %3839 = vmatmul.mubr.f32.gmra.mxu0 %v3770
    %v3840 = vpop.f32.mrf.mxu0
    %v3841 = vadd.f32 %v81, %v3840
    %v3842 = vpop.f32.mrf.mxu0
    %3843 = vdwg.mxu0
    %v3844 = vsel %vm180, %v3763, -inf
    %3845 = vmax.xlane.f32.xlu0 %v3844
    %v3846 = vpop.xlane.xlu0 %3845
    %v3847 = vsel %vm180, %v3841, -inf
    %3848 = vmax.xlane.f32.xlu0 %v3847
    %v3849 = vpop.xlane.xlu0 %3848
    %v3850 = vsub.f32 %v3763, %v3846
    %v3851 = vsub.f32 %v3841, %v3849
    %v3852 = vmul.f32 %v3850, 1.442695
    %v3853 = vpow.pop %v3852
    %v3854 = vmul.f32 %v3851, 1.442695
    %v3855 = vpow.pop %v3854
    %v3856 = vsel %vm180, %v3853, 0.0
    %3857 = vadd.xlane.f32.xlu0 %v3856
    %v3858 = vpop.xlane.xlu0 %3857
    %v3859 = vsel %vm180, %v3855, 0.0
    %3860 = vadd.xlane.f32.xlu0 %v3859
    %v3861 = vpop.xlane.xlu0 %3860
    %v3862 = vrcp.pop %v3858
    %v3863 = vrcp.pop %v3861
    %v3864 = vmul.f32 %v3853, %v3862
    %v3865 = vmul.f32 %v3855, %v3863
    %3866 = vrot.lane.b32.xlu0 %v2443, 40
    %v3867 = vpop.permute.xlu0 %3866
    %v3870 = vsel %vm180, %v3864, 0
    %3872 = vmatprep.subr.mxu0 0.0
    %3873 = vmatpush1.msra.mxu0 0.0
    %3874 = vmatprep.subr.mxu0 0.0
    %3875 = vmatpush1.msra.mxu0 0.0
    %3876 = vmatprep.subr.mxu0 0.0
    %3877 = vmatpush1.msra.mxu0 0.0
    %3878 = vmatprep.subr.mxu0 0.0
    %3879 = vmatpush1.msra.mxu0 0.0
    %3880 = vmatprep.subr.mxu0 0.0
    %3881 = vmatpush1.msra.mxu0 0.0
    %3882 = vmatprep.subr.mxu0 0.0
    %3883 = vmatpush1.msra.mxu0 0.0
    %3884 = vmatprep.subr.mxu0 0.0
    %3885 = vmatpush1.msra.mxu0 0.0
    %3886 = vmatprep.subr.mxu0 0.0
    %3887 = vmatpush1.msra.mxu0 0.0
    %3888 = vmatprep.subr.mxu0 0.0
    %3889 = vmatpush1.msra.mxu0 0.0
    %3890 = vmatprep.subr.mxu0 0.0
    %3891 = vmatpush1.msra.mxu0 0.0
    %3892 = vmatprep.subr.mxu0 0.0
    %3893 = vmatpush1.msra.mxu0 0.0
    %3894 = vmatprep.subr.mxu0 0.0
    %3895 = vmatpush1.msra.mxu0 0.0
    %3896 = vmatprep.subr.mxu0 0.0
    %3897 = vmatpush1.msra.mxu0 0.0
    %3898 = vmatprep.subr.mxu0 0.0
    %3899 = vmatpush1.msra.mxu0 0.0
    %3900 = vmatprep.subr.mxu0 0.0
    %3901 = vmatpush1.msra.mxu0 0.0
    %3902 = vmatprep.subr.mxu0 0.0
    %3903 = vmatpush1.msra.mxu0 %v3867
    %3904 = vmatprep.subr.mxu0 0.0
    %3905 = vmatpush2.msra.mxu0 0.0
    %3906 = vmatprep.subr.mxu0 0.0
    %3907 = vmatpush2.msra.mxu0 0.0
    %3908 = vmatprep.subr.mxu0 0.0
    %3909 = vmatpush2.msra.mxu0 0.0
    %3910 = vmatprep.subr.mxu0 0.0
    %3911 = vmatpush2.msra.mxu0 0.0
    %3912 = vmatprep.subr.mxu0 0.0
    %3913 = vmatpush2.msra.mxu0 0.0
    %3914 = vmatprep.subr.mxu0 0.0
    %3915 = vmatpush2.msra.mxu0 0.0
    %3916 = vmatprep.subr.mxu0 0.0
    %3917 = vmatpush2.msra.mxu0 0.0
    %3918 = vmatprep.subr.mxu0 0.0
    %3919 = vmatpush2.msra.mxu0 0.0
    %3920 = vmatprep.subr.mxu0 0.0
    %3921 = vmatpush2.msra.mxu0 0.0
    %3922 = vmatprep.subr.mxu0 0.0
    %3923 = vmatpush2.msra.mxu0 0.0
    %3924 = vmatprep.subr.mxu0 0.0
    %3925 = vmatpush2.msra.mxu0 0.0
    %3926 = vmatprep.subr.mxu0 0.0
    %3927 = vmatpush2.msra.mxu0 0.0
    %3928 = vmatprep.subr.mxu0 0.0
    %3929 = vmatpush2.msra.mxu0 0.0
    %3930 = vmatprep.subr.mxu0 0.0
    %3931 = vmatpush2.msra.mxu0 0.0
    %3932 = vmatprep.subr.mxu0 0.0
    %3933 = vmatpush2.msra.mxu0 0.0
    %3934 = vmatprep.subr.mxu0 0.0
    %3935 = vmatpush2.msra.mxu0 0.0
    %3936 = vmatprep.mubr.f32.mxu0 0.0
    %3937 = vmatmul.mubr.f32.gmra.mxu0 %v3870
    %v3938 = vpop.f32.mrf.mxu0
    %v3939 = vadd.f32 0.0, %v3938
    %v3940 = vpop.f32.mrf.mxu0
    %3941 = vdwg.mxu0
    %3942 = vrot.lane.b32.xlu0 %v2448, 40
    %v3943 = vpop.permute.xlu0 %3942
    %v3946 = vsel %vm180, %v3865, 0
    %3948 = vmatprep.subr.mxu0 0.0
    %3949 = vmatpush1.msra.mxu0 0.0
    %3950 = vmatprep.subr.mxu0 0.0
    %3951 = vmatpush1.msra.mxu0 0.0
    %3952 = vmatprep.subr.mxu0 0.0
    %3953 = vmatpush1.msra.mxu0 0.0
    %3954 = vmatprep.subr.mxu0 0.0
    %3955 = vmatpush1.msra.mxu0 0.0
    %3956 = vmatprep.subr.mxu0 0.0
    %3957 = vmatpush1.msra.mxu0 0.0
    %3958 = vmatprep.subr.mxu0 0.0
    %3959 = vmatpush1.msra.mxu0 0.0
    %3960 = vmatprep.subr.mxu0 0.0
    %3961 = vmatpush1.msra.mxu0 0.0
    %3962 = vmatprep.subr.mxu0 0.0
    %3963 = vmatpush1.msra.mxu0 0.0
    %3964 = vmatprep.subr.mxu0 0.0
    %3965 = vmatpush1.msra.mxu0 0.0
    %3966 = vmatprep.subr.mxu0 0.0
    %3967 = vmatpush1.msra.mxu0 0.0
    %3968 = vmatprep.subr.mxu0 0.0
    %3969 = vmatpush1.msra.mxu0 0.0
    %3970 = vmatprep.subr.mxu0 0.0
    %3971 = vmatpush1.msra.mxu0 0.0
    %3972 = vmatprep.subr.mxu0 0.0
    %3973 = vmatpush1.msra.mxu0 0.0
    %3974 = vmatprep.subr.mxu0 0.0
    %3975 = vmatpush1.msra.mxu0 0.0
    %3976 = vmatprep.subr.mxu0 0.0
    %3977 = vmatpush1.msra.mxu0 0.0
    %3978 = vmatprep.subr.mxu0 0.0
    %3979 = vmatpush1.msra.mxu0 %v3943
    %3980 = vmatprep.subr.mxu0 0.0
    %3981 = vmatpush2.msra.mxu0 0.0
    %3982 = vmatprep.subr.mxu0 0.0
    %3983 = vmatpush2.msra.mxu0 0.0
    %3984 = vmatprep.subr.mxu0 0.0
    %3985 = vmatpush2.msra.mxu0 0.0
    %3986 = vmatprep.subr.mxu0 0.0
    %3987 = vmatpush2.msra.mxu0 0.0
    %3988 = vmatprep.subr.mxu0 0.0
    %3989 = vmatpush2.msra.mxu0 0.0
    %3990 = vmatprep.subr.mxu0 0.0
    %3991 = vmatpush2.msra.mxu0 0.0
    %3992 = vmatprep.subr.mxu0 0.0
    %3993 = vmatpush2.msra.mxu0 0.0
    %3994 = vmatprep.subr.mxu0 0.0
    %3995 = vmatpush2.msra.mxu0 0.0
    %3996 = vmatprep.subr.mxu0 0.0
    %3997 = vmatpush2.msra.mxu0 0.0
    %3998 = vmatprep.subr.mxu0 0.0
    %3999 = vmatpush2.msra.mxu0 0.0
    %4000 = vmatprep.subr.mxu0 0.0
    %4001 = vmatpush2.msra.mxu0 0.0
    %4002 = vmatprep.subr.mxu0 0.0
    %4003 = vmatpush2.msra.mxu0 0.0
    %4004 = vmatprep.subr.mxu0 0.0
    %4005 = vmatpush2.msra.mxu0 0.0
    %4006 = vmatprep.subr.mxu0 0.0
    %4007 = vmatpush2.msra.mxu0 0.0
    %4008 = vmatprep.subr.mxu0 0.0
    %4009 = vmatpush2.msra.mxu0 0.0
    %4010 = vmatprep.subr.mxu0 0.0
    %4011 = vmatpush2.msra.mxu0 0.0
    %4012 = vmatprep.mubr.f32.mxu0 0.0
    %4013 = vmatmul.mubr.f32.gmra.mxu0 %v3946
    %v4014 = vpop.f32.mrf.mxu0
    %v4015 = vadd.f32 0.0, %v4014
    %v4016 = vpop.f32.mrf.mxu0
    %4017 = vdwg.mxu0
    %v4018 = vld [vmem:[%s2779 + $0x18] sm:$0xff]
    %v4020 = vsel %vm180, %v3939, 0
    %v4023 = vsel %vm180, %v4015, 0
    %4025 = vmatprep.subr.mxu0 0.0
    %4026 = vmatpush1.msra.mxu0 0.0
    %4027 = vmatprep.subr.mxu0 0.0
    %4028 = vmatpush1.msra.mxu0 0.0
    %4029 = vmatprep.subr.mxu0 0.0
    %4030 = vmatpush1.msra.mxu0 0.0
    %4031 = vmatprep.subr.mxu0 0.0
    %4032 = vmatpush1.msra.mxu0 0.0
    %4033 = vmatprep.subr.mxu0 0.0
    %4034 = vmatpush1.msra.mxu0 0.0
    %4035 = vmatprep.subr.mxu0 0.0
    %4036 = vmatpush1.msra.mxu0 0.0
    %4037 = vmatprep.subr.mxu0 0.0
    %4038 = vmatpush1.msra.mxu0 0.0
    %4039 = vmatprep.subr.mxu0 0.0
    %4040 = vmatpush1.msra.mxu0 0.0
    %4041 = vmatprep.subr.mxu0 0.0
    %4042 = vmatpush1.msra.mxu0 0.0
    %4043 = vmatprep.subr.mxu0 0.0
    %4044 = vmatpush1.msra.mxu0 0.0
    %4045 = vmatprep.subr.mxu0 0.0
    %4046 = vmatpush1.msra.mxu0 0.0
    %4047 = vmatprep.subr.mxu0 0.0
    %4048 = vmatpush1.msra.mxu0 0.0
    %4049 = vmatprep.subr.mxu0 0.0
    %4050 = vmatpush1.msra.mxu0 0.0
    %4051 = vmatprep.subr.mxu0 0.0
    %4052 = vmatpush1.msra.mxu0 0.0
    %4053 = vmatprep.subr.mxu0 0.0
    %4054 = vmatpush1.msra.mxu0 0.0
    %4055 = vmatprep.subr.mxu0 0.0
    %4056 = vmatpush1.msra.mxu0 %v4018
    %4057 = vmatprep.subr.mxu0 0.0
    %4058 = vmatpush2.msra.mxu0 0.0
    %4059 = vmatprep.subr.mxu0 0.0
    %4060 = vmatpush2.msra.mxu0 0.0
    %4061 = vmatprep.subr.mxu0 0.0
    %4062 = vmatpush2.msra.mxu0 0.0
    %4063 = vmatprep.subr.mxu0 0.0
    %4064 = vmatpush2.msra.mxu0 0.0
    %4065 = vmatprep.subr.mxu0 0.0
    %4066 = vmatpush2.msra.mxu0 0.0
    %4067 = vmatprep.subr.mxu0 0.0
    %4068 = vmatpush2.msra.mxu0 0.0
    %4069 = vmatprep.subr.mxu0 0.0
    %4070 = vmatpush2.msra.mxu0 0.0
    %4071 = vmatprep.subr.mxu0 0.0
    %4072 = vmatpush2.msra.mxu0 0.0
    %4073 = vmatprep.subr.mxu0 0.0
    %4074 = vmatpush2.msra.mxu0 0.0
    %4075 = vmatprep.subr.mxu0 0.0
    %4076 = vmatpush2.msra.mxu0 0.0
    %4077 = vmatprep.subr.mxu0 0.0
    %4078 = vmatpush2.msra.mxu0 0.0
    %4079 = vmatprep.subr.mxu0 0.0
    %4080 = vmatpush2.msra.mxu0 0.0
    %4081 = vmatprep.subr.mxu0 0.0
    %4082 = vmatpush2.msra.mxu0 0.0
    %4083 = vmatprep.subr.mxu0 0.0
    %4084 = vmatpush2.msra.mxu0 0.0
    %4085 = vmatprep.subr.mxu0 0.0
    %4086 = vmatpush2.msra.mxu0 0.0
    %4087 = vmatprep.subr.mxu0 0.0
    %4088 = vmatpush2.msra.mxu0 0.0
    %4089 = vmatprep.mubr.f32.mxu0 0.0
    %4090 = vmatmul.mubr.f32.gmra.mxu0 %v4020
    %v4091 = vpop.f32.mrf.mxu0
    %v4092 = vadd.f32 0.0, %v4091
    %v4093 = vpop.f32.mrf.mxu0
    %4094 = vmatprep.mubr.f32.mxu0 0.0
    %4095 = vmatmul.mubr.f32.gmra.mxu0 %v4023
    %v4096 = vpop.f32.mrf.mxu0
    %v4097 = vadd.f32 0.0, %v4096
    %v4098 = vpop.f32.mrf.mxu0
    %4099 = vdwg.mxu0
    %v4100 = vadd.f32 %v3686, %v4092
    %v4101 = vadd.f32 %v3687, %v4097
    %s4102 = scalar_lea.vmem %s5, 1
    %v4103 = vld [vmem:[%s4102] sm:$0x1]
    %v4105 = vlaneseq
    %v4106 = vshrl.u32 %v4105, 7
    %v4107 = vsub.s32 0, %v4106
    %v4108 = vrot.slane %v4103, %v4107
    %v4110 = vadd.f32 %v4100, %v4108
    %v4111 = vadd.f32 %v4101, %v4108
    %v4112 = vadd.f32 %v2355, %v4110
    %v4113 = vadd.f32 %v2356, %v4111
    %s4114 = scalar_lea.vmem %s6, 1
    %v4115 = vld [vmem:[%s4114] sm:$0x1]
    %s4116 = scalar_lea.vmem %s7, 1
    %v4117 = vld [vmem:[%s4116] sm:$0x1]
    %v4118 = vsel %vm95, %v4112, 0.0
    %4119 = vadd.xlane.f32.xlu0 %v4118
    %v4120 = vpop.xlane.xlu0 %4119
    %v4121 = vsel %vm95, %v4113, 0.0
    %4122 = vadd.xlane.f32.xlu0 %v4121
    %v4123 = vpop.xlane.xlu0 %4122
    %v4124 = vmul.f32 %v4120, %v1847
    %v4125 = vmul.f32 %v4123, %v1847
    %v4126 = vsub.f32 %v4112, %v4124
    %v4127 = vsub.f32 %v4113, %v4125
    %v4128 = vmul.f32 %v4126, %v4126
    %v4129 = vmul.f32 %v4127, %v4127
    %v4130 = vsel %vm95, %v4128, 0.0
    %4131 = vadd.xlane.f32.xlu0 %v4130
    %v4132 = vpop.xlane.xlu0 %4131
    %v4133 = vsel %vm95, %v4129, 0.0
    %4134 = vadd.xlane.f32.xlu0 %v4133
    %v4135 = vpop.xlane.xlu0 %4134
    %v4136 = vmul.f32 %v4132, %v1847
    %v4137 = vmul.f32 %v4135, %v1847
    %v4138 = vadd.f32 %v4136, 1e-05
    %v4139 = vadd.f32 %v4137, 1e-05
    %v4140 = vrsqrt.pop %v4138
    %v4141 = vrsqrt.pop %v4139
    %v4142 = vmul.f32 %v4126, %v4140
    %v4143 = vmul.f32 %v4127, %v4141
    %v4145 = vlaneseq
    %v4146 = vshrl.u32 %v4145, 7
    %v4147 = vsub.s32 0, %v4146
    %v4148 = vrot.slane %v4115, %v4147
    %v4150 = vmul.f32 %v4142, %v4148
    %v4151 = vmul.f32 %v4143, %v4148
    %v4153 = vlaneseq
    %v4154 = vshrl.u32 %v4153, 7
    %v4155 = vsub.s32 0, %v4154
    %v4156 = vrot.slane %v4117, %v4155
    %v4158 = vadd.f32 %v4150, %v4156
    %v4159 = vadd.f32 %v4151, %v4156
    %s4160 = scalar_lea.vmem %s10, 128
    %v4161 = vld [vmem:[%s4160] sm:$0xff]
    %v4162 = vld [vmem:[%s4160 + $0x8] sm:$0xff]
    %v4163 = vld [vmem:[%s4160 + $0x10] sm:$0xff]
    %v4164 = vld [vmem:[%s4160 + $0x18] sm:$0xff]
    %v4165 = vld [vmem:[%s4160 + $0x20] sm:$0xff]
    %v4166 = vld [vmem:[%s4160 + $0x28] sm:$0xff]
    %v4167 = vld [vmem:[%s4160 + $0x30] sm:$0xff]
    %v4168 = vld [vmem:[%s4160 + $0x38] sm:$0xff]
    %v4169 = vld [vmem:[%s4160 + $0x40] sm:$0xff]
    %v4170 = vld [vmem:[%s4160 + $0x48] sm:$0xff]
    %v4171 = vld [vmem:[%s4160 + $0x50] sm:$0xff]
    %v4172 = vld [vmem:[%s4160 + $0x58] sm:$0xff]
    %v4173 = vld [vmem:[%s4160 + $0x60] sm:$0xff]
    %v4174 = vld [vmem:[%s4160 + $0x68] sm:$0xff]
    %v4175 = vld [vmem:[%s4160 + $0x70] sm:$0xff]
    %v4176 = vld [vmem:[%s4160 + $0x78] sm:$0xff]
    %s4177 = scalar_lea.vmem %s11, 4
    %v4178 = vld [vmem:[%s4177] sm:$0xf]
    %v4180 = vlaneseq
    %v4181 = vshrl.u32 %v4180, 7
    %v4182 = vsub.s32 0, %v4181
    %v4183 = vrot.slane %v4178, %v4182
    %v4184 = vlaneseq
    %v4185 = vshrl.u32 %v4184, 7
    %v4186 = vsub.s32 1, %v4185
    %v4187 = vrot.slane %v4178, %v4186
    %v4188 = vlaneseq
    %v4189 = vshrl.u32 %v4188, 7
    %v4190 = vsub.s32 2, %v4189
    %v4191 = vrot.slane %v4178, %v4190
    %v4192 = vlaneseq
    %v4193 = vshrl.u32 %v4192, 7
    %v4194 = vsub.s32 3, %v4193
    %v4195 = vrot.slane %v4178, %v4194
    %v4201 = vsel %vm95, %v4158, 0
    %v4204 = vsel %vm95, %v4159, 0
    %4206 = vmatprep.subr.mxu0 0.0
    %4207 = vmatpush1.msra.mxu0 0.0
    %4208 = vmatprep.subr.mxu0 0.0
    %4209 = vmatpush1.msra.mxu0 0.0
    %4210 = vmatprep.subr.mxu0 0.0
    %4211 = vmatpush1.msra.mxu0 0.0
    %4212 = vmatprep.subr.mxu0 0.0
    %4213 = vmatpush1.msra.mxu0 0.0
    %4214 = vmatprep.subr.mxu0 0.0
    %4215 = vmatpush1.msra.mxu0 0.0
    %4216 = vmatprep.subr.mxu0 0.0
    %4217 = vmatpush1.msra.mxu0 0.0
    %4218 = vmatprep.subr.mxu0 0.0
    %4219 = vmatpush1.msra.mxu0 0.0
    %4220 = vmatprep.subr.mxu0 0.0
    %4221 = vmatpush1.msra.mxu0 0.0
    %4222 = vmatprep.subr.mxu0 0.0
    %4223 = vmatpush1.msra.mxu0 0.0
    %4224 = vmatprep.subr.mxu0 0.0
    %4225 = vmatpush1.msra.mxu0 0.0
    %4226 = vmatprep.subr.mxu0 0.0
    %4227 = vmatpush1.msra.mxu0 0.0
    %4228 = vmatprep.subr.mxu0 0.0
    %4229 = vmatpush1.msra.mxu0 0.0
    %4230 = vmatprep.subr.mxu0 %v4174
    %4231 = vmatpush1.msra.mxu0 %v4173
    %4232 = vmatprep.subr.mxu0 %v4170
    %4233 = vmatpush1.msra.mxu0 %v4169
    %4234 = vmatprep.subr.mxu0 %v4166
    %4235 = vmatpush1.msra.mxu0 %v4165
    %4236 = vmatprep.subr.mxu0 %v4162
    %4237 = vmatpush1.msra.mxu0 %v4161
    %4238 = vmatprep.subr.mxu0 0.0
    %4239 = vmatpush2.msra.mxu0 0.0
    %4240 = vmatprep.subr.mxu0 0.0
    %4241 = vmatpush2.msra.mxu0 0.0
    %4242 = vmatprep.subr.mxu0 0.0
    %4243 = vmatpush2.msra.mxu0 0.0
    %4244 = vmatprep.subr.mxu0 0.0
    %4245 = vmatpush2.msra.mxu0 0.0
    %4246 = vmatprep.subr.mxu0 0.0
    %4247 = vmatpush2.msra.mxu0 0.0
    %4248 = vmatprep.subr.mxu0 0.0
    %4249 = vmatpush2.msra.mxu0 0.0
    %4250 = vmatprep.subr.mxu0 0.0
    %4251 = vmatpush2.msra.mxu0 0.0
    %4252 = vmatprep.subr.mxu0 0.0
    %4253 = vmatpush2.msra.mxu0 0.0
    %4254 = vmatprep.subr.mxu0 0.0
    %4255 = vmatpush2.msra.mxu0 0.0
    %4256 = vmatprep.subr.mxu0 0.0
    %4257 = vmatpush2.msra.mxu0 0.0
    %4258 = vmatprep.subr.mxu0 0.0
    %4259 = vmatpush2.msra.mxu0 0.0
    %4260 = vmatprep.subr.mxu0 0.0
    %4261 = vmatpush2.msra.mxu0 0.0
    %4262 = vmatprep.subr.mxu0 0.0
    %4263 = vmatpush2.msra.mxu0 0.0
    %4264 = vmatprep.subr.mxu0 0.0
    %4265 = vmatpush2.msra.mxu0 0.0
    %4266 = vmatprep.subr.mxu0 0.0
    %4267 = vmatpush2.msra.mxu0 0.0
    %4268 = vmatprep.subr.mxu0 0.0
    %4269 = vmatpush2.msra.mxu0 0.0
    %4270 = vmatprep.mubr.f32.mxu0 0.0
    %4271 = vmatmul.mubr.f32.gmra.mxu0 %v4201
    %v4272 = vpop.f32.mrf.mxu0
    %v4273 = vadd.f32 %v4183, %v4272
    %v4274 = vpop.f32.mrf.mxu0
    %v4275 = vadd.f32 %v4187, %v4274
    %4276 = vmatprep.mubr.f32.mxu0 0.0
    %4277 = vmatmul.mubr.f32.gmra.mxu0 %v4204
    %v4278 = vpop.f32.mrf.mxu0
    %v4279 = vadd.f32 %v4183, %v4278
    %v4280 = vpop.f32.mrf.mxu0
    %v4281 = vadd.f32 %v4187, %v4280
    %4282 = vdwg.mxu0
    %4283 = vmatprep.subr.mxu0 0.0
    %4284 = vmatpush1.msra.mxu0 0.0
    %4285 = vmatprep.subr.mxu0 0.0
    %4286 = vmatpush1.msra.mxu0 0.0
    %4287 = vmatprep.subr.mxu0 0.0
    %4288 = vmatpush1.msra.mxu0 0.0
    %4289 = vmatprep.subr.mxu0 0.0
    %4290 = vmatpush1.msra.mxu0 0.0
    %4291 = vmatprep.subr.mxu0 0.0
    %4292 = vmatpush1.msra.mxu0 0.0
    %4293 = vmatprep.subr.mxu0 0.0
    %4294 = vmatpush1.msra.mxu0 0.0
    %4295 = vmatprep.subr.mxu0 0.0
    %4296 = vmatpush1.msra.mxu0 0.0
    %4297 = vmatprep.subr.mxu0 0.0
    %4298 = vmatpush1.msra.mxu0 0.0
    %4299 = vmatprep.subr.mxu0 0.0
    %4300 = vmatpush1.msra.mxu0 0.0
    %4301 = vmatprep.subr.mxu0 0.0
    %4302 = vmatpush1.msra.mxu0 0.0
    %4303 = vmatprep.subr.mxu0 0.0
    %4304 = vmatpush1.msra.mxu0 0.0
    %4305 = vmatprep.subr.mxu0 0.0
    %4306 = vmatpush1.msra.mxu0 0.0
    %4307 = vmatprep.subr.mxu0 %v4176
    %4308 = vmatpush1.msra.mxu0 %v4175
    %4309 = vmatprep.subr.mxu0 %v4172
    %4310 = vmatpush1.msra.mxu0 %v4171
    %4311 = vmatprep.subr.mxu0 %v4168
    %4312 = vmatpush1.msra.mxu0 %v4167
    %4313 = vmatprep.subr.mxu0 %v4164
    %4314 = vmatpush1.msra.mxu0 %v4163
    %4315 = vmatprep.subr.mxu0 0.0
    %4316 = vmatpush2.msra.mxu0 0.0
    %4317 = vmatprep.subr.mxu0 0.0
    %4318 = vmatpush2.msra.mxu0 0.0
    %4319 = vmatprep.subr.mxu0 0.0
    %4320 = vmatpush2.msra.mxu0 0.0
    %4321 = vmatprep.subr.mxu0 0.0
    %4322 = vmatpush2.msra.mxu0 0.0
    %4323 = vmatprep.subr.mxu0 0.0
    %4324 = vmatpush2.msra.mxu0 0.0
    %4325 = vmatprep.subr.mxu0 0.0
    %4326 = vmatpush2.msra.mxu0 0.0
    %4327 = vmatprep.subr.mxu0 0.0
    %4328 = vmatpush2.msra.mxu0 0.0
    %4329 = vmatprep.subr.mxu0 0.0
    %4330 = vmatpush2.msra.mxu0 0.0
    %4331 = vmatprep.subr.mxu0 0.0
    %4332 = vmatpush2.msra.mxu0 0.0
    %4333 = vmatprep.subr.mxu0 0.0
    %4334 = vmatpush2.msra.mxu0 0.0
    %4335 = vmatprep.subr.mxu0 0.0
    %4336 = vmatpush2.msra.mxu0 0.0
    %4337 = vmatprep.subr.mxu0 0.0
    %4338 = vmatpush2.msra.mxu0 0.0
    %4339 = vmatprep.subr.mxu0 0.0
    %4340 = vmatpush2.msra.mxu0 0.0
    %4341 = vmatprep.subr.mxu0 0.0
    %4342 = vmatpush2.msra.mxu0 0.0
    %4343 = vmatprep.subr.mxu0 0.0
    %4344 = vmatpush2.msra.mxu0 0.0
    %4345 = vmatprep.subr.mxu0 0.0
    %4346 = vmatpush2.msra.mxu0 0.0
    %4347 = vmatprep.mubr.f32.mxu0 0.0
    %4348 = vmatmul.mubr.f32.gmra.mxu0 %v4201
    %v4349 = vpop.f32.mrf.mxu0
    %v4350 = vadd.f32 %v4191, %v4349
    %v4351 = vpop.f32.mrf.mxu0
    %v4352 = vadd.f32 %v4195, %v4351
    %4353 = vmatprep.mubr.f32.mxu0 0.0
    %4354 = vmatmul.mubr.f32.gmra.mxu0 %v4204
    %v4355 = vpop.f32.mrf.mxu0
    %v4356 = vadd.f32 %v4191, %v4355
    %v4357 = vpop.f32.mrf.mxu0
    %v4358 = vadd.f32 %v4195, %v4357
    %4359 = vdwg.mxu0
    %v4360 = vmax.f32 %v4273, 0.0
    %v4361 = vmax.f32 %v4275, 0.0
    %v4362 = vmax.f32 %v4350, 0.0
    %v4363 = vmax.f32 %v4352, 0.0
    %v4364 = vmax.f32 %v4279, 0.0
    %v4365 = vmax.f32 %v4281, 0.0
    %v4366 = vmax.f32 %v4356, 0.0
    %v4367 = vmax.f32 %v4358, 0.0
    %s4368 = scalar_lea.vmem %s12, 512
    %v4369 = vld [vmem:[%s4368] sm:$0xff]
    %v4370 = vld [vmem:[%s4368 + $0x8] sm:$0xff]
    %v4371 = vld [vmem:[%s4368 + $0x10] sm:$0xff]
    %v4372 = vld [vmem:[%s4368 + $0x18] sm:$0xff]
    %v4373 = vld [vmem:[%s4368 + $0x20] sm:$0xff]
    %v4374 = vld [vmem:[%s4368 + $0x28] sm:$0xff]
    %v4375 = vld [vmem:[%s4368 + $0x30] sm:$0xff]
    %v4376 = vld [vmem:[%s4368 + $0x38] sm:$0xff]
    %v4377 = vld [vmem:[%s4368 + $0x40] sm:$0xff]
    %v4378 = vld [vmem:[%s4368 + $0x48] sm:$0xff]
    %v4379 = vld [vmem:[%s4368 + $0x50] sm:$0xff]
    %v4380 = vld [vmem:[%s4368 + $0x58] sm:$0xff]
    %v4381 = vld [vmem:[%s4368 + $0x60] sm:$0xff]
    %v4382 = vld [vmem:[%s4368 + $0x68] sm:$0xff]
    %v4383 = vld [vmem:[%s4368 + $0x70] sm:$0xff]
    %v4384 = vld [vmem:[%s4368 + $0x78] sm:$0xff]
    %v4385 = vld [vmem:[%s4368 + $0x80] sm:$0xff]
    %v4386 = vld [vmem:[%s4368 + $0x88] sm:$0xff]
    %v4387 = vld [vmem:[%s4368 + $0x90] sm:$0xff]
    %v4388 = vld [vmem:[%s4368 + $0x98] sm:$0xff]
    %v4389 = vld [vmem:[%s4368 + $0xa0] sm:$0xff]
    %v4390 = vld [vmem:[%s4368 + $0xa8] sm:$0xff]
    %v4391 = vld [vmem:[%s4368 + $0xb0] sm:$0xff]
    %v4392 = vld [vmem:[%s4368 + $0xb8] sm:$0xff]
    %v4393 = vld [vmem:[%s4368 + $0xc0] sm:$0xff]
    %v4394 = vld [vmem:[%s4368 + $0xc8] sm:$0xff]
    %v4395 = vld [vmem:[%s4368 + $0xd0] sm:$0xff]
    %v4396 = vld [vmem:[%s4368 + $0xd8] sm:$0xff]
    %v4397 = vld [vmem:[%s4368 + $0xe0] sm:$0xff]
    %v4398 = vld [vmem:[%s4368 + $0xe8] sm:$0xff]
    %v4399 = vld [vmem:[%s4368 + $0xf0] sm:$0xff]
    %v4400 = vld [vmem:[%s4368 + $0xf8] sm:$0xff]
    %v4401 = vld [vmem:[%s4368 + $0x100] sm:$0xff]
    %v4402 = vld [vmem:[%s4368 + $0x108] sm:$0xff]
    %v4403 = vld [vmem:[%s4368 + $0x110] sm:$0xff]
    %v4404 = vld [vmem:[%s4368 + $0x118] sm:$0xff]
    %v4405 = vld [vmem:[%s4368 + $0x120] sm:$0xff]
    %v4406 = vld [vmem:[%s4368 + $0x128] sm:$0xff]
    %v4407 = vld [vmem:[%s4368 + $0x130] sm:$0xff]
    %v4408 = vld [vmem:[%s4368 + $0x138] sm:$0xff]
    %v4409 = vld [vmem:[%s4368 + $0x140] sm:$0xff]
    %v4410 = vld [vmem:[%s4368 + $0x148] sm:$0xff]
    %v4411 = vld [vmem:[%s4368 + $0x150] sm:$0xff]
    %v4412 = vld [vmem:[%s4368 + $0x158] sm:$0xff]
    %v4413 = vld [vmem:[%s4368 + $0x160] sm:$0xff]
    %v4414 = vld [vmem:[%s4368 + $0x168] sm:$0xff]
    %v4415 = vld [vmem:[%s4368 + $0x170] sm:$0xff]
    %v4416 = vld [vmem:[%s4368 + $0x178] sm:$0xff]
    %v4417 = vld [vmem:[%s4368 + $0x180] sm:$0xff]
    %v4418 = vld [vmem:[%s4368 + $0x188] sm:$0xff]
    %v4419 = vld [vmem:[%s4368 + $0x190] sm:$0xff]
    %v4420 = vld [vmem:[%s4368 + $0x198] sm:$0xff]
    %v4421 = vld [vmem:[%s4368 + $0x1a0] sm:$0xff]
    %v4422 = vld [vmem:[%s4368 + $0x1a8] sm:$0xff]
    %v4423 = vld [vmem:[%s4368 + $0x1b0] sm:$0xff]
    %v4424 = vld [vmem:[%s4368 + $0x1b8] sm:$0xff]
    %v4425 = vld [vmem:[%s4368 + $0x1c0] sm:$0xff]
    %v4426 = vld [vmem:[%s4368 + $0x1c8] sm:$0xff]
    %v4427 = vld [vmem:[%s4368 + $0x1d0] sm:$0xff]
    %v4428 = vld [vmem:[%s4368 + $0x1d8] sm:$0xff]
    %v4429 = vld [vmem:[%s4368 + $0x1e0] sm:$0xff]
    %v4430 = vld [vmem:[%s4368 + $0x1e8] sm:$0xff]
    %v4431 = vld [vmem:[%s4368 + $0x1f0] sm:$0xff]
    %v4432 = vld [vmem:[%s4368 + $0x1f8] sm:$0xff]
    %s4433 = scalar_lea.vmem %s13, 1
    %v4434 = vld [vmem:[%s4433] sm:$0x1]
    %v4436 = vlaneseq
    %v4437 = vshrl.u32 %v4436, 7
    %v4438 = vsub.s32 0, %v4437
    %v4439 = vrot.slane %v4434, %v4438
    %4441 = vmatprep.subr.mxu0 0.0
    %4442 = vmatpush1.msra.mxu0 %v4384
    %4443 = vmatprep.subr.mxu0 0.0
    %4444 = vmatpush1.msra.mxu0 %v4383
    %4445 = vmatprep.subr.mxu0 0.0
    %4446 = vmatpush1.msra.mxu0 %v4382
    %4447 = vmatprep.subr.mxu0 0.0
    %4448 = vmatpush1.msra.mxu0 %v4381
    %4449 = vmatprep.subr.mxu0 0.0
    %4450 = vmatpush1.msra.mxu0 %v4380
    %4451 = vmatprep.subr.mxu0 0.0
    %4452 = vmatpush1.msra.mxu0 %v4379
    %4453 = vmatprep.subr.mxu0 0.0
    %4454 = vmatpush1.msra.mxu0 %v4378
    %4455 = vmatprep.subr.mxu0 0.0
    %4456 = vmatpush1.msra.mxu0 %v4377
    %4457 = vmatprep.subr.mxu0 0.0
    %4458 = vmatpush1.msra.mxu0 %v4376
    %4459 = vmatprep.subr.mxu0 0.0
    %4460 = vmatpush1.msra.mxu0 %v4375
    %4461 = vmatprep.subr.mxu0 0.0
    %4462 = vmatpush1.msra.mxu0 %v4374
    %4463 = vmatprep.subr.mxu0 0.0
    %4464 = vmatpush1.msra.mxu0 %v4373
    %4465 = vmatprep.subr.mxu0 0.0
    %4466 = vmatpush1.msra.mxu0 %v4372
    %4467 = vmatprep.subr.mxu0 0.0
    %4468 = vmatpush1.msra.mxu0 %v4371
    %4469 = vmatprep.subr.mxu0 0.0
    %4470 = vmatpush1.msra.mxu0 %v4370
    %4471 = vmatprep.subr.mxu0 0.0
    %4472 = vmatpush1.msra.mxu0 %v4369
    %4473 = vmatprep.subr.mxu0 0.0
    %4474 = vmatpush2.msra.mxu0 %v4400
    %4475 = vmatprep.subr.mxu0 0.0
    %4476 = vmatpush2.msra.mxu0 %v4399
    %4477 = vmatprep.subr.mxu0 0.0
    %4478 = vmatpush2.msra.mxu0 %v4398
    %4479 = vmatprep.subr.mxu0 0.0
    %4480 = vmatpush2.msra.mxu0 %v4397
    %4481 = vmatprep.subr.mxu0 0.0
    %4482 = vmatpush2.msra.mxu0 %v4396
    %4483 = vmatprep.subr.mxu0 0.0
    %4484 = vmatpush2.msra.mxu0 %v4395
    %4485 = vmatprep.subr.mxu0 0.0
    %4486 = vmatpush2.msra.mxu0 %v4394
    %4487 = vmatprep.subr.mxu0 0.0
    %4488 = vmatpush2.msra.mxu0 %v4393
    %4489 = vmatprep.subr.mxu0 0.0
    %4490 = vmatpush2.msra.mxu0 %v4392
    %4491 = vmatprep.subr.mxu0 0.0
    %4492 = vmatpush2.msra.mxu0 %v4391
    %4493 = vmatprep.subr.mxu0 0.0
    %4494 = vmatpush2.msra.mxu0 %v4390
    %4495 = vmatprep.subr.mxu0 0.0
    %4496 = vmatpush2.msra.mxu0 %v4389
    %4497 = vmatprep.subr.mxu0 0.0
    %4498 = vmatpush2.msra.mxu0 %v4388
    %4499 = vmatprep.subr.mxu0 0.0
    %4500 = vmatpush2.msra.mxu0 %v4387
    %4501 = vmatprep.subr.mxu0 0.0
    %4502 = vmatpush2.msra.mxu0 %v4386
    %4503 = vmatprep.subr.mxu0 0.0
    %4504 = vmatpush2.msra.mxu0 %v4385
    %4505 = vmatprep.mubr.f32.mxu0 %v4361
    %4506 = vmatmul.mubr.f32.gmra.mxu0 %v4360
    %v4507 = vpop.f32.mrf.mxu0
    %v4508 = vadd.f32 %v4439, %v4507
    %v4509 = vpop.f32.mrf.mxu0
    %4510 = vmatprep.mubr.f32.mxu0 %v4365
    %4511 = vmatmul.mubr.f32.gmra.mxu0 %v4364
    %v4512 = vpop.f32.mrf.mxu0
    %v4513 = vadd.f32 %v4439, %v4512
    %v4514 = vpop.f32.mrf.mxu0
    %4515 = vdwg.mxu0
    %4516 = vmatprep.subr.mxu0 0.0
    %4517 = vmatpush1.msra.mxu0 %v4416
    %4518 = vmatprep.subr.mxu0 0.0
    %4519 = vmatpush1.msra.mxu0 %v4415
    %4520 = vmatprep.subr.mxu0 0.0
    %4521 = vmatpush1.msra.mxu0 %v4414
    %4522 = vmatprep.subr.mxu0 0.0
    %4523 = vmatpush1.msra.mxu0 %v4413
    %4524 = vmatprep.subr.mxu0 0.0
    %4525 = vmatpush1.msra.mxu0 %v4412
    %4526 = vmatprep.subr.mxu0 0.0
    %4527 = vmatpush1.msra.mxu0 %v4411
    %4528 = vmatprep.subr.mxu0 0.0
    %4529 = vmatpush1.msra.mxu0 %v4410
    %4530 = vmatprep.subr.mxu0 0.0
    %4531 = vmatpush1.msra.mxu0 %v4409
    %4532 = vmatprep.subr.mxu0 0.0
    %4533 = vmatpush1.msra.mxu0 %v4408
    %4534 = vmatprep.subr.mxu0 0.0
    %4535 = vmatpush1.msra.mxu0 %v4407
    %4536 = vmatprep.subr.mxu0 0.0
    %4537 = vmatpush1.msra.mxu0 %v4406
    %4538 = vmatprep.subr.mxu0 0.0
    %4539 = vmatpush1.msra.mxu0 %v4405
    %4540 = vmatprep.subr.mxu0 0.0
    %4541 = vmatpush1.msra.mxu0 %v4404
    %4542 = vmatprep.subr.mxu0 0.0
    %4543 = vmatpush1.msra.mxu0 %v4403
    %4544 = vmatprep.subr.mxu0 0.0
    %4545 = vmatpush1.msra.mxu0 %v4402
    %4546 = vmatprep.subr.mxu0 0.0
    %4547 = vmatpush1.msra.mxu0 %v4401
    %4548 = vmatprep.subr.mxu0 0.0
    %4549 = vmatpush2.msra.mxu0 %v4432
    %4550 = vmatprep.subr.mxu0 0.0
    %4551 = vmatpush2.msra.mxu0 %v4431
    %4552 = vmatprep.subr.mxu0 0.0
    %4553 = vmatpush2.msra.mxu0 %v4430
    %4554 = vmatprep.subr.mxu0 0.0
    %4555 = vmatpush2.msra.mxu0 %v4429
    %4556 = vmatprep.subr.mxu0 0.0
    %4557 = vmatpush2.msra.mxu0 %v4428
    %4558 = vmatprep.subr.mxu0 0.0
    %4559 = vmatpush2.msra.mxu0 %v4427
    %4560 = vmatprep.subr.mxu0 0.0
    %4561 = vmatpush2.msra.mxu0 %v4426
    %4562 = vmatprep.subr.mxu0 0.0
    %4563 = vmatpush2.msra.mxu0 %v4425
    %4564 = vmatprep.subr.mxu0 0.0
    %4565 = vmatpush2.msra.mxu0 %v4424
    %4566 = vmatprep.subr.mxu0 0.0
    %4567 = vmatpush2.msra.mxu0 %v4423
    %4568 = vmatprep.subr.mxu0 0.0
    %4569 = vmatpush2.msra.mxu0 %v4422
    %4570 = vmatprep.subr.mxu0 0.0
    %4571 = vmatpush2.msra.mxu0 %v4421
    %4572 = vmatprep.subr.mxu0 0.0
    %4573 = vmatpush2.msra.mxu0 %v4420
    %4574 = vmatprep.subr.mxu0 0.0
    %4575 = vmatpush2.msra.mxu0 %v4419
    %4576 = vmatprep.subr.mxu0 0.0
    %4577 = vmatpush2.msra.mxu0 %v4418
    %4578 = vmatprep.subr.mxu0 0.0
    %4579 = vmatpush2.msra.mxu0 %v4417
    %4580 = vmatprep.mubr.f32.mxu0 %v4363
    %4581 = vmatmul.mubr.f32.gmra.mxu0 %v4362
    %v4582 = vpop.f32.mrf.mxu0
    %v4583 = vadd.f32 %v4508, %v4582
    %v4584 = vpop.f32.mrf.mxu0
    %4585 = vmatprep.mubr.f32.mxu0 %v4367
    %4586 = vmatmul.mubr.f32.gmra.mxu0 %v4366
    %v4587 = vpop.f32.mrf.mxu0
    %v4588 = vadd.f32 %v4513, %v4587
    %v4589 = vpop.f32.mrf.mxu0
    %4590 = vdwg.mxu0
    %v4591 = vadd.f32 %v4158, %v4583
    %v4592 = vadd.f32 %v4159, %v4588
    %s4593 = scalar_lea.vmem %s8, 1
    %v4594 = vld [vmem:[%s4593] sm:$0x1]
    %s4595 = scalar_lea.vmem %s9, 1
    %v4596 = vld [vmem:[%s4595] sm:$0x1]
    %v4597 = vsel %vm95, %v4591, 0.0
    %4598 = vadd.xlane.f32.xlu0 %v4597
    %v4599 = vpop.xlane.xlu0 %4598
    %v4600 = vsel %vm95, %v4592, 0.0
    %4601 = vadd.xlane.f32.xlu0 %v4600
    %v4602 = vpop.xlane.xlu0 %4601
    %v4603 = vmul.f32 %v4599, %v1847
    %v4604 = vmul.f32 %v4602, %v1847
    %v4605 = vsub.f32 %v4591, %v4603
    %v4606 = vsub.f32 %v4592, %v4604
    %v4607 = vmul.f32 %v4605, %v4605
    %v4608 = vmul.f32 %v4606, %v4606
    %v4609 = vsel %vm95, %v4607, 0.0
    %4610 = vadd.xlane.f32.xlu0 %v4609
    %v4611 = vpop.xlane.xlu0 %4610
    %v4612 = vsel %vm95, %v4608, 0.0
    %4613 = vadd.xlane.f32.xlu0 %v4612
    %v4614 = vpop.xlane.xlu0 %4613
    %v4615 = vmul.f32 %v4611, %v1847
    %v4616 = vmul.f32 %v4614, %v1847
    %v4617 = vadd.f32 %v4615, 1e-05
    %v4618 = vadd.f32 %v4616, 1e-05
    %v4619 = vrsqrt.pop %v4617
    %v4620 = vrsqrt.pop %v4618
    %v4621 = vmul.f32 %v4605, %v4619
    %v4622 = vmul.f32 %v4606, %v4620
    %v4624 = vlaneseq
    %v4625 = vshrl.u32 %v4624, 7
    %v4626 = vsub.s32 0, %v4625
    %v4627 = vrot.slane %v4594, %v4626
    %v4629 = vmul.f32 %v4621, %v4627
    %v4630 = vmul.f32 %v4622, %v4627
    %v4632 = vlaneseq
    %v4633 = vshrl.u32 %v4632, 7
    %v4634 = vsub.s32 0, %v4633
    %v4635 = vrot.slane %v4596, %v4634
    %v4637 = vadd.f32 %v4629, %v4635
    %v4638 = vadd.f32 %v4630, %v4635
    %4639 = vst.msk [vmem:[#allocation2] sm:$0xff] %vm95, %v4637
    %4640 = vst.msk [vmem:[#allocation2 + $0x8] sm:$0xff] %vm95, %v4638
    // Predicated region
    $region58: #{tpu_custom_call.1} parent=1 // pred_check
      _
    $region59: #{tpu_custom_call.1} parent=1 // pred_check_branch
      %4642 = sbr.rel (0) target = $region61
    $region60: #{tpu_custom_call.1} parent=1 // pred_region
      %s4644 = ssub.s32 256, 256
      %4645 = vsyncadd [#allocation3], %s4644
      %s4646 = sshll.u32 [#allocation2], 4
      %s4647 = int_to_ptr.vmem [resolvable:$true] %s4646
      %4652 = dma.vmem_to_hbm [thread:$0]  %s4647, 256, %s14, [#allocation3], 128, 128, 8
    $region61: #{tpu_custom_call.1} parent=1 // pred_fallthru
      _
    // Predicated region
    $region62: #{tpu_custom_call.1} parent=1 // pred_check
      _
    $region63: #{tpu_custom_call.1} parent=1 // pred_check_branch
      %4654 = sbr.rel (0) target = $region65
    $region64: #{tpu_custom_call.1} parent=1 // pred_region
      %4655 = dma.done [#allocation3], 256
    $region65: #{tpu_custom_call.1} parent=1 // pred_fallthru
      _
    %4656 = vsyncpa [#allocation3], 1

</llo_original>
